<compile_context>
chip_gen: v6e
topology: v6e:2x2x1
jax: 0.10.0
libtpu: 0.0.40
codegen_flags: <defaults>
</compile_context>

<pallas_src>
import functools
import math

import jax
import jax.numpy as jnp
from jax.experimental import pallas as pl
from jax.experimental.pallas import tpu as pltpu

# ----------------------------- config (the `params` namespace) --------------
KGE_HIDDEN = 16
LLM_HIDDEN = 32
NUM_HEADS = 2
NUM_LAYERS = 2
EPS = 1e-5
USE_Q_VISIBLE = True      # params.use_q_visible branch of the mask build
USE_ALL_VISIBLE = False
NUM_QUERY_TOKENS = 6      # TYPE, ENT, REL, AND, OR, NOT
NEG_INF = -1e30           # finite -inf surrogate (keeps fully-masked rows NaN-free)

# indices into the packed per-layer banks
_WQ, _WK, _WV, _WO, _W1, _W2 = range(6)                       # matrix bank
_BQ, _BK, _BV, _BO, _G1, _BE1, _B1, _B2, _G2, _BE2 = range(10)  # vector bank


# ----------------------------- in-kernel helpers ------------------------------
def _erf_poly(z):
    """Abramowitz-Stegun 7.1.26 erf polynomial, |err| <= 1.5e-7.

    Uses only exp / mul / add / div / select so it lowers on any Mosaic
    version (no reliance on a native erf lowering)."""
    a1, a2, a3, a4, a5 = (0.254829592, -0.284496736, 1.421413741,
                          -1.453152027, 1.061405429)
    p = 0.3275911
    sgn = jnp.where(z < 0.0, -1.0, 1.0)
    az = jnp.abs(z)
    t = 1.0 / (1.0 + p * az)
    poly = ((((a5 * t + a4) * t + a3) * t + a2) * t + a1) * t
    return sgn * (1.0 - poly * jnp.exp(-az * az))


def _gelu_exact(x):
    return 0.5 * x * (1.0 + _erf_poly(x * (1.0 / math.sqrt(2.0))))


# ----------------------------- fused Pallas kernel ---------------------------
def _aligner_kernel(x_ref, km_ref, w_ref, v_ref, wh_ref, bh_ref, out_ref,
                    *, num_heads, num_layers, num_q, eps):
    """One batch sample: both encoder layers + merged output-head projection."""
    Lp, H = x_ref.shape
    hd = H // num_heads
    scale = 1.0 / math.sqrt(hd)

    # ---- per-sample additive attention bias (rank-1 construction, hoisted) --
    r = jax.lax.broadcasted_iota(jnp.int32, (Lp, 1), 0)      # local query pos
    c = jax.lax.broadcasted_iota(jnp.int32, (1, Lp), 1)      # local key pos
    key_vis = km_ref[...] > 0.5                              # (1, Lp) nl visibility
    if USE_Q_VISIBLE:
        q_visible = (c < num_q) & (r >= num_q)               # (Lp, Lp)
    elif USE_ALL_VISIBLE:
        q_visible = jnp.broadcast_to(c < num_q, (Lp, Lp))
    else:
        q_visible = jnp.zeros((Lp, Lp), dtype=bool)
    nl_visible = (c >= num_q) & key_vis                      # (1, Lp)
    visible = q_visible | nl_visible                         # (Lp, Lp)
    bias = jnp.where(visible, 0.0, NEG_INF).astype(jnp.float32)

    # per-head lane masks -> masked full-width matmuls (no lane slicing/stack)
    col = jax.lax.broadcasted_iota(jnp.int32, (1, H), 1)
    head_masks = [((col >= h * hd) & (col < (h + 1) * hd)).astype(jnp.float32)
                  for h in range(num_heads)]

    def layer_norm(y, g, b):
        mu = jnp.mean(y, axis=-1, keepdims=True)
        var = jnp.mean((y - mu) ** 2, axis=-1, keepdims=True)
        return (y - mu) * jax.lax.rsqrt(var + eps) * g + b

    x = x_ref[...].astype(jnp.float32)                       # (Lp, H)

    # ---- post-norm TransformerEncoder layers (static unroll) ----------------
    for l in range(num_layers):
        q = jnp.dot(x, w_ref[l, _WQ, :, :],
                    preferred_element_type=jnp.float32) + v_ref[l, _BQ:_BQ + 1, :]
        k = jnp.dot(x, w_ref[l, _WK, :, :],
                    preferred_element_type=jnp.float32) + v_ref[l, _BK:_BK + 1, :]
        v = jnp.dot(x, w_ref[l, _WV, :, :],
                    preferred_element_type=jnp.float32) + v_ref[l, _BV:_BV + 1, :]
        attn = jnp.zeros((Lp, H), jnp.float32)
        for hm in head_masks:
            # q_h @ k_h^T via full-width masked operands (zeros outside head h)
            s = jax.lax.dot_general(q * hm, k * hm, (((1,), (1,)), ((), ())),
                                    preferred_element_type=jnp.float32)
            s = s * scale + bias
            s = s - jnp.max(s, axis=-1, keepdims=True)
            p = jnp.exp(s)
            p = p * pl.reciprocal(jnp.sum(p, axis=-1, keepdims=True), approx=True)
            # p @ v_h lands only in head h's columns -> summing over heads is
            # exactly the concatenated per-head output layout.
            attn = attn + jnp.dot(p, v * hm, preferred_element_type=jnp.float32)
        attn = jnp.dot(attn, w_ref[l, _WO, :, :],
                       preferred_element_type=jnp.float32) + v_ref[l, _BO:_BO + 1, :]
        y = layer_norm(x + attn, v_ref[l, _G1:_G1 + 1, :], v_ref[l, _BE1:_BE1 + 1, :])
        h1 = _gelu_exact(
            jnp.dot(y, w_ref[l, _W1, :, :],
                    preferred_element_type=jnp.float32) + v_ref[l, _B1:_B1 + 1, :])
        ff = jnp.dot(h1, w_ref[l, _W2, :, :],
                     preferred_element_type=jnp.float32) + v_ref[l, _B2:_B2 + 1, :]
        x = layer_norm(y + ff, v_ref[l, _G2:_G2 + 1, :], v_ref[l, _BE2:_BE2 + 1, :])

    # ---- merged output heads over ALL rows (lane-dense output slab) ---------
    proj = jnp.dot(x, wh_ref[...], preferred_element_type=jnp.float32) + bh_ref[...]
    out_ref[...] = proj.astype(out_ref.dtype)


# ----------------------------- wrapper ---------------------------------------
def aligner_forward(nl_emb, attention_mask, params):
    """Pallas forward: nl_emb stands in for llm_model(...).last_hidden_state."""
    B, S, H = nl_emb.shape
    Q = NUM_QUERY_TOKENS
    K = params['w_type'].shape[1]
    L = Q + S
    Lp = -(-L // 8) * 8                        # pad to sublane multiple (14 -> 16)

    # input_layer(query_token.weight) - parameter-only matmul, kept as JAX glue
    qtok = params['query_token'] @ params['w_in'] + params['b_in']     # (Q, H)
    x = jnp.concatenate([jnp.broadcast_to(qtok[None], (B, Q, H)),
                         nl_emb.astype(jnp.float32)], axis=1)          # (B, L, H)
    x = jnp.pad(x, ((0, 0), (0, Lp - L), (0, 0)))                      # (B, Lp, H)

    # per-key visibility of the nl part (padded keys stay 0 -> masked)
    km = jnp.zeros((B, 1, Lp), jnp.float32)
    km = km.at[:, 0, Q:Q + S].set(attention_mask.astype(jnp.float32))

    # pack per-layer parameters into two dense banks (fewer, denser transfers)
    F = params['layers'][0]['w1'].shape[1]
    assert F == H, "module sets dim_feedforward == llm_hidden_size"
    Wb, Vb = [], []
    for lp in params['layers']:
        Wb.append(jnp.stack([lp['wqkv'][:, :H], lp['wqkv'][:, H:2 * H],
                             lp['wqkv'][:, 2 * H:], lp['wo'],
                             lp['w1'], lp['w2']], axis=0))
        Vb.append(jnp.stack([lp['bqkv'][0, :H], lp['bqkv'][0, H:2 * H],
                             lp['bqkv'][0, 2 * H:], lp['bo'][0],
                             lp['g1'][0], lp['be1'][0], lp['b1'][0],
                             lp['b2'][0], lp['g2'][0], lp['be2'][0]], axis=0))
    W = jnp.stack(Wb, axis=0)          # (num_layers, 6, H, H)
    V = jnp.stack(Vb, axis=0)          # (num_layers, 10, H)

    # merged output-head weight/bias: [type | ent | rel | op] along the out dim
    wh = jnp.concatenate([params['w_type'], params['w_ent'],
                          params['w_rel'], params['w_op']], axis=1)    # (H, 4K)
    bh = jnp.concatenate([params['b_type'], params['b_ent'],
                          params['b_rel'], params['b_op']], axis=1)    # (1, 4K)

    kernel = functools.partial(
        _aligner_kernel, num_heads=NUM_HEADS, num_layers=NUM_LAYERS,
        num_q=Q, eps=EPS)
    NL = NUM_LAYERS
    proj = pl.pallas_call(
        kernel,
        out_shape=jax.ShapeDtypeStruct((B, Lp, 4 * K), jnp.float32),
        grid=(B,),
        in_specs=[
            pl.BlockSpec((None, Lp, H), lambda b: (b, 0, 0)),       # x, per sample
            pl.BlockSpec((None, 1, Lp), lambda b: (b, 0, 0)),       # key mask
            pl.BlockSpec((NL, 6, H, H), lambda b: (0, 0, 0, 0)),    # weights (resident)
            pl.BlockSpec((NL, 10, H), lambda b: (0, 0, 0)),         # vectors (resident)
            pl.BlockSpec((H, 4 * K), lambda b: (0, 0)),             # merged heads W
            pl.BlockSpec((1, 4 * K), lambda b: (0, 0)),             # merged heads b
        ],
        out_specs=pl.BlockSpec((None, Lp, 4 * K), lambda b: (b, 0, 0)),
        compiler_params=pltpu.CompilerParams(
            dimension_semantics=("parallel",)),                     # 2 TCs on v7x
    )(x, km, W, V, wh, bh)

    # tiny (B, 6, 4K) -> (B, 6, K) selection kept as JAX glue:
    # row 0 -> TYPE block, 1 -> ENT, 2 -> REL, 3..5 -> OP.
    t = proj[:, 0:1, 0:K]
    e = proj[:, 1:2, K:2 * K]
    r = proj[:, 2:3, 2 * K:3 * K]
    op = proj[:, 3:6, 3 * K:4 * K]
    return jnp.concatenate([t, e, r, op], axis=1)        # rows: TYPE,ENT,REL,AND,OR,NOT


# ----------------------------- pure-JAX reference ----------------------------
def _build_attn_bias(attention_mask, B, S):
    Q = NUM_QUERY_TOKENS
    L = Q + S
    qmask = jnp.zeros((B, L, Q), dtype=bool)
    if USE_Q_VISIBLE:
        qmask = qmask.at[:, Q:, :].set(True)
    elif USE_ALL_VISIBLE:
        qmask = jnp.ones((B, L, Q), dtype=bool)
    nl_vis = jnp.broadcast_to(attention_mask.astype(bool)[:, None, :], (B, L, S))
    visible = jnp.concatenate([qmask, nl_vis], axis=-1)
    return jnp.where(visible, 0.0, NEG_INF).astype(jnp.float32)


def _ref_layer(h, bias, lp):
    B, L, H = h.shape
    hd = H // NUM_HEADS
    qkv = h @ lp['wqkv'] + lp['bqkv'][0]
    q, k, v = jnp.split(qkv, 3, axis=-1)
    qh = q.reshape(B, L, NUM_HEADS, hd).transpose(0, 2, 1, 3)
    kh = k.reshape(B, L, NUM_HEADS, hd).transpose(0, 2, 1, 3)
    vh = v.reshape(B, L, NUM_HEADS, hd).transpose(0, 2, 1, 3)
    s = jnp.einsum('bhqd,bhkd->bhqk', qh, kh) / math.sqrt(hd) + bias[:, None]
    p = jax.nn.softmax(s, axis=-1)
    o = jnp.einsum('bhqk,bhkd->bhqd', p, vh).transpose(0, 2, 1, 3).reshape(B, L, H)
    attn = o @ lp['wo'] + lp['bo'][0]

    def ln(y, g, b):
        mu = jnp.mean(y, -1, keepdims=True)
        var = jnp.mean((y - mu) ** 2, -1, keepdims=True)
        return (y - mu) * jax.lax.rsqrt(var + EPS) * g + b

    y = ln(h + attn, lp['g1'][0], lp['be1'][0])
    ff = jax.nn.gelu(y @ lp['w1'] + lp['b1'][0], approximate=False) @ lp['w2'] + lp['b2'][0]
    return ln(y + ff, lp['g2'][0], lp['be2'][0])


def reference_forward(nl_emb, attention_mask, params):
    B, S, H = nl_emb.shape
    Q = NUM_QUERY_TOKENS
    qtok = params['query_token'] @ params['w_in'] + params['b_in']
    h = jnp.concatenate([jnp.broadcast_to(qtok[None], (B, Q, H)),
                         nl_emb.astype(jnp.float32)], axis=1)
    bias = _build_attn_bias(attention_mask, B, S)
    for lp in params['layers']:
        h = _ref_layer(h, bias, lp)
    x6 = h[:, :Q, :]
    t = x6[:, 0:1] @ params['w_type'] + params['b_type'][0]
    e = x6[:, 1:2] @ params['w_ent'] + params['b_ent'][0]
    r = x6[:, 2:3] @ params['w_rel'] + params['b_rel'][0]
    op = x6[:, 3:6] @ params['w_op'] + params['b_op'][0]
    return jnp.concatenate([t, e, r, op], axis=1)


# ----------------------------- parameter init --------------------------------
def init_params(key):
    keys = iter(jax.random.split(key, 64))

    def nrm(shape, scale=0.02):
        return scale * jax.random.normal(next(keys), shape, jnp.float32)

    H, F, K = LLM_HIDDEN, LLM_HIDDEN, KGE_HIDDEN   # dim_feedforward == llm_hidden
    params = {
        'query_token': nrm((NUM_QUERY_TOKENS, K), 1.0),   # nn.Embedding(6, kge)
        'w_in': nrm((K, H)), 'b_in': nrm((H,)),           # input_layer
        'layers': [],
    }
    for _ in range(NUM_LAYERS):
        params['layers'].append(dict(
            wqkv=nrm((H, 3 * H)), bqkv=nrm((1, 3 * H)),
            wo=nrm((H, H)), bo=nrm((1, H)),
            g1=jnp.ones((1, H), jnp.float32), be1=jnp.zeros((1, H), jnp.float32),
            w1=nrm((H, F)), b1=nrm((1, F)),
            w2=nrm((F, H)), b2=nrm((1, H)),
            g2=jnp.ones((1, H), jnp.float32), be2=jnp.zeros((1, H), jnp.float32),
        ))
    params['w_type'] = nrm((H, K)); params['b_type'] = nrm((1, K))  # output_type_layer
    params['w_ent'] = nrm((H, K));  params['b_ent'] = nrm((1, K))   # ent_layer
    params['w_rel'] = nrm((H, K));  params['b_rel'] = nrm((1, K))   # rel_layer
    params['w_op'] = nrm((H, K));   params['b_op'] = nrm((1, K))    # op_layer
    return params


# ----------------------------- main -------------------------------------------
if __name__ == "__main__":
    key = jax.random.PRNGKey(0)
    kp, kx = jax.random.split(key, 2)
    params = init_params(kp)

    B, S = 2, 8
    nl_emb = jax.random.normal(kx, (B, S, LLM_HIDDEN), jnp.float32)   # frozen LLM output
    attention_mask = jnp.ones((B, S), jnp.int32).at[1, 6:].set(0)     # ragged padding

    fwd = jax.jit(aligner_forward)
    out = jax.block_until_ready(fwd(nl_emb, attention_mask, params))

    ref = reference_forward(nl_emb, attention_mask, params)
    assert out.shape == (B, NUM_QUERY_TOKENS, KGE_HIDDEN), out.shape
    # approx=True reciprocal in softmax + polynomial erf -> small slack
    assert jnp.allclose(out, ref, atol=2e-3, rtol=2e-3), \
        float(jnp.max(jnp.abs(out - ref)))
    print("KERNEL_OK")
</pallas_src>

<mosaic_0001>
module attributes {stable_mosaic.version = 11 : i64} {
  func.func @_aligner_kernel(%arg0: i32, %arg1: memref<1x16x32xf32, #tpu.memory_space<vmem>>, %arg2: memref<1x1x16xf32, #tpu.memory_space<vmem>>, %arg3: memref<2x6x32x32xf32, #tpu.memory_space<vmem>>, %arg4: memref<2x10x32xf32, #tpu.memory_space<vmem>>, %arg5: memref<32x64xf32, #tpu.memory_space<vmem>>, %arg6: memref<1x64xf32, #tpu.memory_space<vmem>>, %arg7: memref<1x16x64xf32, #tpu.memory_space<vmem>>) attributes {dimension_semantics = [#tpu.dimension_semantics<parallel>], iteration_bounds = array<i64: 2>, scalar_prefetch = 0 : i64, scratch_operands = 0 : i64, tpu.core_type = #tpu.core_type<tc>, window_params = [{transform_indices = @transform_0, window_bounds = array<i64: 1, 16, 32>}, {transform_indices = @transform_1, window_bounds = array<i64: 1, 1, 16>}, {pipeline_mode = #tpu.pipeline_mode<synchronous>, transform_indices = @transform_2, window_bounds = array<i64: 2, 6, 32, 32>}, {pipeline_mode = #tpu.pipeline_mode<synchronous>, transform_indices = @transform_3, window_bounds = array<i64: 2, 10, 32>}, {pipeline_mode = #tpu.pipeline_mode<synchronous>, transform_indices = @transform_4, window_bounds = array<i64: 32, 64>}, {pipeline_mode = #tpu.pipeline_mode<synchronous>, transform_indices = @transform_5, window_bounds = array<i64: 1, 64>}, {transform_indices = @transform_6, window_bounds = array<i64: 1, 16, 64>}]} {
    %0 = tpu.iota {dimensions = array<i32: 0>} : vector<16x1xi32>
    %1 = tpu.iota {dimensions = array<i32: 1>} : vector<1x16xi32>
    %c0 = arith.constant 0 : index
    %c0_0 = arith.constant 0 : index
    %c0_1 = arith.constant 0 : index
    %2 = vector.load %arg2[%c0, %c0_0, %c0_1] : memref<1x1x16xf32, #tpu.memory_space<vmem>>, vector<1x1x16xf32>
    %3 = vector.shape_cast %2 : vector<1x1x16xf32> to vector<1x16xf32>
    %cst = arith.constant 5.000000e-01 : f32
    %4 = vector.broadcast %cst : f32 to vector<1x16xf32>
    %5 = arith.cmpf ogt, %3, %4 : vector<1x16xf32>
    %c6_i32 = arith.constant 6 : i32
    %6 = vector.broadcast %c6_i32 : i32 to vector<1x16xi32>
    %7 = arith.cmpi slt, %1, %6 : vector<1x16xi32>
    %c6_i32_2 = arith.constant 6 : i32
    %8 = vector.broadcast %c6_i32_2 : i32 to vector<16x1xi32>
    %9 = arith.cmpi sge, %0, %8 : vector<16x1xi32>
    %10 = vector.broadcast %7 : vector<1x16xi1> to vector<16x16xi1>
    %11 = vector.broadcast %9 : vector<16x1xi1> to vector<16x16xi1>
    %12 = arith.andi %10, %11 : vector<16x16xi1>
    %c6_i32_3 = arith.constant 6 : i32
    %13 = vector.broadcast %c6_i32_3 : i32 to vector<1x16xi32>
    %14 = arith.cmpi sge, %1, %13 : vector<1x16xi32>
    %15 = arith.andi %14, %5 : vector<1x16xi1>
    %16 = vector.broadcast %15 : vector<1x16xi1> to vector<16x16xi1>
    %17 = arith.ori %12, %16 : vector<16x16xi1>
    %cst_4 = arith.constant 0.000000e+00 : f32
    %cst_5 = arith.constant -1.000000e+30 : f32
    %18 = vector.broadcast %cst_4 : f32 to vector<16x16xf32>
    %19 = vector.broadcast %cst_5 : f32 to vector<16x16xf32>
    %20 = arith.select %17, %18, %19 : vector<16x16xi1>, vector<16x16xf32>
    %21 = tpu.iota {dimensions = array<i32: 1>} : vector<1x32xi32>
    %c0_i32 = arith.constant 0 : i32
    %22 = vector.broadcast %c0_i32 : i32 to vector<1x32xi32>
    %23 = arith.cmpi sge, %21, %22 : vector<1x32xi32>
    %c16_i32 = arith.constant 16 : i32
    %24 = vector.broadcast %c16_i32 : i32 to vector<1x32xi32>
    %25 = arith.cmpi slt, %21, %24 : vector<1x32xi32>
    %26 = arith.andi %23, %25 : vector<1x32xi1>
    %27 = arith.extui %26 : vector<1x32xi1> to vector<1x32xi32>
    %28 = arith.sitofp %27 : vector<1x32xi32> to vector<1x32xf32>
    %c16_i32_6 = arith.constant 16 : i32
    %29 = vector.broadcast %c16_i32_6 : i32 to vector<1x32xi32>
    %30 = arith.cmpi sge, %21, %29 : vector<1x32xi32>
    %c32_i32 = arith.constant 32 : i32
    %31 = vector.broadcast %c32_i32 : i32 to vector<1x32xi32>
    %32 = arith.cmpi slt, %21, %31 : vector<1x32xi32>
    %33 = arith.andi %30, %32 : vector<1x32xi1>
    %34 = arith.extui %33 : vector<1x32xi1> to vector<1x32xi32>
    %35 = arith.sitofp %34 : vector<1x32xi32> to vector<1x32xf32>
    %c0_7 = arith.constant 0 : index
    %c0_8 = arith.constant 0 : index
    %c0_9 = arith.constant 0 : index
    %36 = vector.load %arg1[%c0_7, %c0_8, %c0_9] : memref<1x16x32xf32, #tpu.memory_space<vmem>>, vector<1x16x32xf32>
    %37 = vector.shape_cast %36 : vector<1x16x32xf32> to vector<16x32xf32>
    %c0_10 = arith.constant 0 : index
    %c0_11 = arith.constant 0 : index
    %c0_12 = arith.constant 0 : index
    %c0_13 = arith.constant 0 : index
    %38 = vector.load %arg3[%c0_10, %c0_11, %c0_12, %c0_13] : memref<2x6x32x32xf32, #tpu.memory_space<vmem>>, vector<1x1x32x32xf32>
    %39 = vector.shape_cast %38 : vector<1x1x32x32xf32> to vector<32x32xf32>
    %cst_14 = arith.constant dense<0.000000e+00> : vector<16x32xf32>
    %40 = tpu.matmul %37, %39, %cst_14 {dimension_numbers = #tpu.dot_dimension_numbers<[1], [0], [0], [1], [0, 0, 1, 1], [], []>} : vector<16x32xf32>, vector<32x32xf32>, vector<16x32xf32> -> vector<16x32xf32>
    %c0_15 = arith.constant 0 : index
    %c0_16 = arith.constant 0 : index
    %c0_17 = arith.constant 0 : index
    %41 = vector.load %arg4[%c0_15, %c0_16, %c0_17] : memref<2x10x32xf32, #tpu.memory_space<vmem>>, vector<1x1x32xf32>
    %42 = vector.shape_cast %41 : vector<1x1x32xf32> to vector<1x32xf32>
    %43 = vector.broadcast %42 : vector<1x32xf32> to vector<16x32xf32>
    %44 = arith.addf %40, %43 : vector<16x32xf32>
    %c0_18 = arith.constant 0 : index
    %c1 = arith.constant 1 : index
    %c0_19 = arith.constant 0 : index
    %c0_20 = arith.constant 0 : index
    %45 = vector.load %arg3[%c0_18, %c1, %c0_19, %c0_20] : memref<2x6x32x32xf32, #tpu.memory_space<vmem>>, vector<1x1x32x32xf32>
    %46 = vector.shape_cast %45 : vector<1x1x32x32xf32> to vector<32x32xf32>
    %cst_21 = arith.constant dense<0.000000e+00> : vector<16x32xf32>
    %47 = tpu.matmul %37, %46, %cst_21 {dimension_numbers = #tpu.dot_dimension_numbers<[1], [0], [0], [1], [0, 0, 1, 1], [], []>} : vector<16x32xf32>, vector<32x32xf32>, vector<16x32xf32> -> vector<16x32xf32>
    %c0_22 = arith.constant 0 : index
    %c1_23 = arith.constant 1 : index
    %c0_24 = arith.constant 0 : index
    %48 = vector.load %arg4[%c0_22, %c1_23, %c0_24] : memref<2x10x32xf32, #tpu.memory_space<vmem>>, vector<1x1x32xf32>
    %49 = vector.shape_cast %48 : vector<1x1x32xf32> to vector<1x32xf32>
    %50 = vector.broadcast %49 : vector<1x32xf32> to vector<16x32xf32>
    %51 = arith.addf %47, %50 : vector<16x32xf32>
    %c0_25 = arith.constant 0 : index
    %c2 = arith.constant 2 : index
    %c0_26 = arith.constant 0 : index
    %c0_27 = arith.constant 0 : index
    %52 = vector.load %arg3[%c0_25, %c2, %c0_26, %c0_27] : memref<2x6x32x32xf32, #tpu.memory_space<vmem>>, vector<1x1x32x32xf32>
    %53 = vector.shape_cast %52 : vector<1x1x32x32xf32> to vector<32x32xf32>
    %cst_28 = arith.constant dense<0.000000e+00> : vector<16x32xf32>
    %54 = tpu.matmul %37, %53, %cst_28 {dimension_numbers = #tpu.dot_dimension_numbers<[1], [0], [0], [1], [0, 0, 1, 1], [], []>} : vector<16x32xf32>, vector<32x32xf32>, vector<16x32xf32> -> vector<16x32xf32>
    %c0_29 = arith.constant 0 : index
    %c2_30 = arith.constant 2 : index
    %c0_31 = arith.constant 0 : index
    %55 = vector.load %arg4[%c0_29, %c2_30, %c0_31] : memref<2x10x32xf32, #tpu.memory_space<vmem>>, vector<1x1x32xf32>
    %56 = vector.shape_cast %55 : vector<1x1x32xf32> to vector<1x32xf32>
    %57 = vector.broadcast %56 : vector<1x32xf32> to vector<16x32xf32>
    %58 = arith.addf %54, %57 : vector<16x32xf32>
    %cst_32 = arith.constant 0.000000e+00 : f32
    %59 = vector.broadcast %cst_32 : f32 to vector<16x32xf32>
    %60 = vector.broadcast %28 : vector<1x32xf32> to vector<16x32xf32>
    %61 = arith.mulf %44, %60 : vector<16x32xf32>
    %62 = vector.broadcast %28 : vector<1x32xf32> to vector<16x32xf32>
    %63 = arith.mulf %51, %62 : vector<16x32xf32>
    %cst_33 = arith.constant dense<0.000000e+00> : vector<16x16xf32>
    %64 = tpu.matmul %61, %63, %cst_33 {dimension_numbers = #tpu.dot_dimension_numbers<[1], [1], [0], [0], [0, 0, 1, 0], [], []>} : vector<16x32xf32>, vector<16x32xf32>, vector<16x16xf32> -> vector<16x16xf32>
    %cst_34 = arith.constant 2.500000e-01 : f32
    %65 = vector.broadcast %cst_34 : f32 to vector<16x16xf32>
    %66 = arith.mulf %64, %65 : vector<16x16xf32>
    %67 = arith.addf %66, %20 : vector<16x16xf32>
    %cst_35 = arith.constant dense<0xFF800000> : vector<16xf32>
    %68 = vector.multi_reduction <maximumf>, %67, %cst_35 [1] : vector<16x16xf32> to vector<16xf32>
    %69 = vector.shape_cast %68 : vector<16xf32> to vector<16x1xf32>
    %70 = vector.broadcast %69 : vector<16x1xf32> to vector<16x16xf32>
    %71 = arith.subf %67, %70 : vector<16x16xf32>
    %72 = math.exp %71 : vector<16x16xf32>
    %cst_36 = arith.constant dense<0.000000e+00> : vector<16xf32>
    %73 = vector.multi_reduction <add>, %72, %cst_36 [1] : vector<16x16xf32> to vector<16xf32>
    %74 = vector.shape_cast %73 : vector<16xf32> to vector<16x1xf32>
    %75 = tpu.reciprocal %74 {approx = true} : vector<16x1xf32> -> vector<16x1xf32>
    %76 = vector.broadcast %75 : vector<16x1xf32> to vector<16x16xf32>
    %77 = arith.mulf %72, %76 : vector<16x16xf32>
    %78 = vector.broadcast %28 : vector<1x32xf32> to vector<16x32xf32>
    %79 = arith.mulf %58, %78 : vector<16x32xf32>
    %cst_37 = arith.constant dense<0.000000e+00> : vector<16x32xf32>
    %80 = tpu.matmul %77, %79, %cst_37 {dimension_numbers = #tpu.dot_dimension_numbers<[1], [0], [0], [1], [0, 0, 1, 1], [], []>} : vector<16x16xf32>, vector<16x32xf32>, vector<16x32xf32> -> vector<16x32xf32>
    %81 = arith.addf %59, %80 : vector<16x32xf32>
    %82 = vector.broadcast %35 : vector<1x32xf32> to vector<16x32xf32>
    %83 = arith.mulf %44, %82 : vector<16x32xf32>
    %84 = vector.broadcast %35 : vector<1x32xf32> to vector<16x32xf32>
    %85 = arith.mulf %51, %84 : vector<16x32xf32>
    %cst_38 = arith.constant dense<0.000000e+00> : vector<16x16xf32>
    %86 = tpu.matmul %83, %85, %cst_38 {dimension_numbers = #tpu.dot_dimension_numbers<[1], [1], [0], [0], [0, 0, 1, 0], [], []>} : vector<16x32xf32>, vector<16x32xf32>, vector<16x16xf32> -> vector<16x16xf32>
    %cst_39 = arith.constant 2.500000e-01 : f32
    %87 = vector.broadcast %cst_39 : f32 to vector<16x16xf32>
    %88 = arith.mulf %86, %87 : vector<16x16xf32>
    %89 = arith.addf %88, %20 : vector<16x16xf32>
    %cst_40 = arith.constant dense<0xFF800000> : vector<16xf32>
    %90 = vector.multi_reduction <maximumf>, %89, %cst_40 [1] : vector<16x16xf32> to vector<16xf32>
    %91 = vector.shape_cast %90 : vector<16xf32> to vector<16x1xf32>
    %92 = vector.broadcast %91 : vector<16x1xf32> to vector<16x16xf32>
    %93 = arith.subf %89, %92 : vector<16x16xf32>
    %94 = math.exp %93 : vector<16x16xf32>
    %cst_41 = arith.constant dense<0.000000e+00> : vector<16xf32>
    %95 = vector.multi_reduction <add>, %94, %cst_41 [1] : vector<16x16xf32> to vector<16xf32>
    %96 = vector.shape_cast %95 : vector<16xf32> to vector<16x1xf32>
    %97 = tpu.reciprocal %96 {approx = true} : vector<16x1xf32> -> vector<16x1xf32>
    %98 = vector.broadcast %97 : vector<16x1xf32> to vector<16x16xf32>
    %99 = arith.mulf %94, %98 : vector<16x16xf32>
    %100 = vector.broadcast %35 : vector<1x32xf32> to vector<16x32xf32>
    %101 = arith.mulf %58, %100 : vector<16x32xf32>
    %cst_42 = arith.constant dense<0.000000e+00> : vector<16x32xf32>
    %102 = tpu.matmul %99, %101, %cst_42 {dimension_numbers = #tpu.dot_dimension_numbers<[1], [0], [0], [1], [0, 0, 1, 1], [], []>} : vector<16x16xf32>, vector<16x32xf32>, vector<16x32xf32> -> vector<16x32xf32>
    %103 = arith.addf %81, %102 : vector<16x32xf32>
    %c0_43 = arith.constant 0 : index
    %c3 = arith.constant 3 : index
    %c0_44 = arith.constant 0 : index
    %c0_45 = arith.constant 0 : index
    %104 = vector.load %arg3[%c0_43, %c3, %c0_44, %c0_45] : memref<2x6x32x32xf32, #tpu.memory_space<vmem>>, vector<1x1x32x32xf32>
    %105 = vector.shape_cast %104 : vector<1x1x32x32xf32> to vector<32x32xf32>
    %cst_46 = arith.constant dense<0.000000e+00> : vector<16x32xf32>
    %106 = tpu.matmul %103, %105, %cst_46 {dimension_numbers = #tpu.dot_dimension_numbers<[1], [0], [0], [1], [0, 0, 1, 1], [], []>} : vector<16x32xf32>, vector<32x32xf32>, vector<16x32xf32> -> vector<16x32xf32>
    %c0_47 = arith.constant 0 : index
    %c3_48 = arith.constant 3 : index
    %c0_49 = arith.constant 0 : index
    %107 = vector.load %arg4[%c0_47, %c3_48, %c0_49] : memref<2x10x32xf32, #tpu.memory_space<vmem>>, vector<1x1x32xf32>
    %108 = vector.shape_cast %107 : vector<1x1x32xf32> to vector<1x32xf32>
    %109 = vector.broadcast %108 : vector<1x32xf32> to vector<16x32xf32>
    %110 = arith.addf %106, %109 : vector<16x32xf32>
    %111 = arith.addf %37, %110 : vector<16x32xf32>
    %c0_50 = arith.constant 0 : index
    %c4 = arith.constant 4 : index
    %c0_51 = arith.constant 0 : index
    %112 = vector.load %arg4[%c0_50, %c4, %c0_51] : memref<2x10x32xf32, #tpu.memory_space<vmem>>, vector<1x1x32xf32>
    %113 = vector.shape_cast %112 : vector<1x1x32xf32> to vector<1x32xf32>
    %c0_52 = arith.constant 0 : index
    %c5 = arith.constant 5 : index
    %c0_53 = arith.constant 0 : index
    %114 = vector.load %arg4[%c0_52, %c5, %c0_53] : memref<2x10x32xf32, #tpu.memory_space<vmem>>, vector<1x1x32xf32>
    %115 = vector.shape_cast %114 : vector<1x1x32xf32> to vector<1x32xf32>
    %cst_54 = arith.constant dense<0.000000e+00> : vector<16xf32>
    %116 = vector.multi_reduction <add>, %111, %cst_54 [1] : vector<16x32xf32> to vector<16xf32>
    %117 = vector.shape_cast %116 : vector<16xf32> to vector<16x1xf32>
    %cst_55 = arith.constant 3.200000e+01 : f32
    %118 = vector.broadcast %cst_55 : f32 to vector<16x1xf32>
    %119 = arith.divf %117, %118 : vector<16x1xf32>
    %120 = vector.broadcast %119 : vector<16x1xf32> to vector<16x32xf32>
    %121 = arith.subf %111, %120 : vector<16x32xf32>
    %122 = arith.mulf %121, %121 : vector<16x32xf32>
    %cst_56 = arith.constant dense<0.000000e+00> : vector<16xf32>
    %123 = vector.multi_reduction <add>, %122, %cst_56 [1] : vector<16x32xf32> to vector<16xf32>
    %124 = vector.shape_cast %123 : vector<16xf32> to vector<16x1xf32>
    %cst_57 = arith.constant 3.200000e+01 : f32
    %125 = vector.broadcast %cst_57 : f32 to vector<16x1xf32>
    %126 = arith.divf %124, %125 : vector<16x1xf32>
    %127 = vector.broadcast %119 : vector<16x1xf32> to vector<16x32xf32>
    %128 = arith.subf %111, %127 : vector<16x32xf32>
    %cst_58 = arith.constant 9.99999974E-6 : f32
    %129 = vector.broadcast %cst_58 : f32 to vector<16x1xf32>
    %130 = arith.addf %126, %129 : vector<16x1xf32>
    %131 = math.rsqrt %130 : vector<16x1xf32>
    %132 = vector.broadcast %131 : vector<16x1xf32> to vector<16x32xf32>
    %133 = arith.mulf %128, %132 : vector<16x32xf32>
    %134 = vector.broadcast %113 : vector<1x32xf32> to vector<16x32xf32>
    %135 = arith.mulf %133, %134 : vector<16x32xf32>
    %136 = vector.broadcast %115 : vector<1x32xf32> to vector<16x32xf32>
    %137 = arith.addf %135, %136 : vector<16x32xf32>
    %c0_59 = arith.constant 0 : index
    %c4_60 = arith.constant 4 : index
    %c0_61 = arith.constant 0 : index
    %c0_62 = arith.constant 0 : index
    %138 = vector.load %arg3[%c0_59, %c4_60, %c0_61, %c0_62] : memref<2x6x32x32xf32, #tpu.memory_space<vmem>>, vector<1x1x32x32xf32>
    %139 = vector.shape_cast %138 : vector<1x1x32x32xf32> to vector<32x32xf32>
    %cst_63 = arith.constant dense<0.000000e+00> : vector<16x32xf32>
    %140 = tpu.matmul %137, %139, %cst_63 {dimension_numbers = #tpu.dot_dimension_numbers<[1], [0], [0], [1], [0, 0, 1, 1], [], []>} : vector<16x32xf32>, vector<32x32xf32>, vector<16x32xf32> -> vector<16x32xf32>
    %c0_64 = arith.constant 0 : index
    %c6 = arith.constant 6 : index
    %c0_65 = arith.constant 0 : index
    %141 = vector.load %arg4[%c0_64, %c6, %c0_65] : memref<2x10x32xf32, #tpu.memory_space<vmem>>, vector<1x1x32xf32>
    %142 = vector.shape_cast %141 : vector<1x1x32xf32> to vector<1x32xf32>
    %143 = vector.broadcast %142 : vector<1x32xf32> to vector<16x32xf32>
    %144 = arith.addf %140, %143 : vector<16x32xf32>
    %cst_66 = arith.constant 5.000000e-01 : f32
    %145 = vector.broadcast %cst_66 : f32 to vector<16x32xf32>
    %146 = arith.mulf %145, %144 : vector<16x32xf32>
    %cst_67 = arith.constant 0.707106769 : f32
    %147 = vector.broadcast %cst_67 : f32 to vector<16x32xf32>
    %148 = arith.mulf %144, %147 : vector<16x32xf32>
    %cst_68 = arith.constant 0.000000e+00 : f32
    %149 = vector.broadcast %cst_68 : f32 to vector<16x32xf32>
    %150 = arith.cmpf olt, %148, %149 : vector<16x32xf32>
    %cst_69 = arith.constant -1.000000e+00 : f32
    %cst_70 = arith.constant 1.000000e+00 : f32
    %151 = vector.broadcast %cst_69 : f32 to vector<16x32xf32>
    %152 = vector.broadcast %cst_70 : f32 to vector<16x32xf32>
    %153 = arith.select %150, %151, %152 : vector<16x32xi1>, vector<16x32xf32>
    %154 = math.absf %148 : vector<16x32xf32>
    %cst_71 = arith.constant 0.327591091 : f32
    %155 = vector.broadcast %cst_71 : f32 to vector<16x32xf32>
    %156 = arith.mulf %155, %154 : vector<16x32xf32>
    %cst_72 = arith.constant 1.000000e+00 : f32
    %157 = vector.broadcast %cst_72 : f32 to vector<16x32xf32>
    %158 = arith.addf %157, %156 : vector<16x32xf32>
    %cst_73 = arith.constant 1.000000e+00 : f32
    %159 = vector.broadcast %cst_73 : f32 to vector<16x32xf32>
    %160 = arith.divf %159, %158 : vector<16x32xf32>
    %cst_74 = arith.constant 1.06140542 : f32
    %161 = vector.broadcast %cst_74 : f32 to vector<16x32xf32>
    %162 = arith.mulf %161, %160 : vector<16x32xf32>
    %cst_75 = arith.constant -1.45315206 : f32
    %163 = vector.broadcast %cst_75 : f32 to vector<16x32xf32>
    %164 = arith.addf %162, %163 : vector<16x32xf32>
    %165 = arith.mulf %164, %160 : vector<16x32xf32>
    %cst_76 = arith.constant 1.42141378 : f32
    %166 = vector.broadcast %cst_76 : f32 to vector<16x32xf32>
    %167 = arith.addf %165, %166 : vector<16x32xf32>
    %168 = arith.mulf %167, %160 : vector<16x32xf32>
    %cst_77 = arith.constant -0.284496725 : f32
    %169 = vector.broadcast %cst_77 : f32 to vector<16x32xf32>
    %170 = arith.addf %168, %169 : vector<16x32xf32>
    %171 = arith.mulf %170, %160 : vector<16x32xf32>
    %cst_78 = arith.constant 0.254829586 : f32
    %172 = vector.broadcast %cst_78 : f32 to vector<16x32xf32>
    %173 = arith.addf %171, %172 : vector<16x32xf32>
    %174 = arith.mulf %173, %160 : vector<16x32xf32>
    %cst_79 = arith.constant 0.000000e+00 : f32
    %175 = vector.broadcast %cst_79 : f32 to vector<16x32xf32>
    %176 = arith.subf %175, %154 : vector<16x32xf32>
    %177 = arith.mulf %176, %154 : vector<16x32xf32>
    %178 = math.exp %177 : vector<16x32xf32>
    %179 = arith.mulf %174, %178 : vector<16x32xf32>
    %cst_80 = arith.constant 1.000000e+00 : f32
    %180 = vector.broadcast %cst_80 : f32 to vector<16x32xf32>
    %181 = arith.subf %180, %179 : vector<16x32xf32>
    %182 = arith.mulf %153, %181 : vector<16x32xf32>
    %cst_81 = arith.constant 1.000000e+00 : f32
    %183 = vector.broadcast %cst_81 : f32 to vector<16x32xf32>
    %184 = arith.addf %183, %182 : vector<16x32xf32>
    %185 = arith.mulf %146, %184 : vector<16x32xf32>
    %c0_82 = arith.constant 0 : index
    %c5_83 = arith.constant 5 : index
    %c0_84 = arith.constant 0 : index
    %c0_85 = arith.constant 0 : index
    %186 = vector.load %arg3[%c0_82, %c5_83, %c0_84, %c0_85] : memref<2x6x32x32xf32, #tpu.memory_space<vmem>>, vector<1x1x32x32xf32>
    %187 = vector.shape_cast %186 : vector<1x1x32x32xf32> to vector<32x32xf32>
    %cst_86 = arith.constant dense<0.000000e+00> : vector<16x32xf32>
    %188 = tpu.matmul %185, %187, %cst_86 {dimension_numbers = #tpu.dot_dimension_numbers<[1], [0], [0], [1], [0, 0, 1, 1], [], []>} : vector<16x32xf32>, vector<32x32xf32>, vector<16x32xf32> -> vector<16x32xf32>
    %c0_87 = arith.constant 0 : index
    %c7 = arith.constant 7 : index
    %c0_88 = arith.constant 0 : index
    %189 = vector.load %arg4[%c0_87, %c7, %c0_88] : memref<2x10x32xf32, #tpu.memory_space<vmem>>, vector<1x1x32xf32>
    %190 = vector.shape_cast %189 : vector<1x1x32xf32> to vector<1x32xf32>
    %191 = vector.broadcast %190 : vector<1x32xf32> to vector<16x32xf32>
    %192 = arith.addf %188, %191 : vector<16x32xf32>
    %193 = arith.addf %137, %192 : vector<16x32xf32>
    %c0_89 = arith.constant 0 : index
    %c8 = arith.constant 8 : index
    %c0_90 = arith.constant 0 : index
    %194 = vector.load %arg4[%c0_89, %c8, %c0_90] : memref<2x10x32xf32, #tpu.memory_space<vmem>>, vector<1x1x32xf32>
    %195 = vector.shape_cast %194 : vector<1x1x32xf32> to vector<1x32xf32>
    %c0_91 = arith.constant 0 : index
    %c9 = arith.constant 9 : index
    %c0_92 = arith.constant 0 : index
    %196 = vector.load %arg4[%c0_91, %c9, %c0_92] : memref<2x10x32xf32, #tpu.memory_space<vmem>>, vector<1x1x32xf32>
    %197 = vector.shape_cast %196 : vector<1x1x32xf32> to vector<1x32xf32>
    %cst_93 = arith.constant dense<0.000000e+00> : vector<16xf32>
    %198 = vector.multi_reduction <add>, %193, %cst_93 [1] : vector<16x32xf32> to vector<16xf32>
    %199 = vector.shape_cast %198 : vector<16xf32> to vector<16x1xf32>
    %cst_94 = arith.constant 3.200000e+01 : f32
    %200 = vector.broadcast %cst_94 : f32 to vector<16x1xf32>
    %201 = arith.divf %199, %200 : vector<16x1xf32>
    %202 = vector.broadcast %201 : vector<16x1xf32> to vector<16x32xf32>
    %203 = arith.subf %193, %202 : vector<16x32xf32>
    %204 = arith.mulf %203, %203 : vector<16x32xf32>
    %cst_95 = arith.constant dense<0.000000e+00> : vector<16xf32>
    %205 = vector.multi_reduction <add>, %204, %cst_95 [1] : vector<16x32xf32> to vector<16xf32>
    %206 = vector.shape_cast %205 : vector<16xf32> to vector<16x1xf32>
    %cst_96 = arith.constant 3.200000e+01 : f32
    %207 = vector.broadcast %cst_96 : f32 to vector<16x1xf32>
    %208 = arith.divf %206, %207 : vector<16x1xf32>
    %209 = vector.broadcast %201 : vector<16x1xf32> to vector<16x32xf32>
    %210 = arith.subf %193, %209 : vector<16x32xf32>
    %cst_97 = arith.constant 9.99999974E-6 : f32
    %211 = vector.broadcast %cst_97 : f32 to vector<16x1xf32>
    %212 = arith.addf %208, %211 : vector<16x1xf32>
    %213 = math.rsqrt %212 : vector<16x1xf32>
    %214 = vector.broadcast %213 : vector<16x1xf32> to vector<16x32xf32>
    %215 = arith.mulf %210, %214 : vector<16x32xf32>
    %216 = vector.broadcast %195 : vector<1x32xf32> to vector<16x32xf32>
    %217 = arith.mulf %215, %216 : vector<16x32xf32>
    %218 = vector.broadcast %197 : vector<1x32xf32> to vector<16x32xf32>
    %219 = arith.addf %217, %218 : vector<16x32xf32>
    %c1_98 = arith.constant 1 : index
    %c0_99 = arith.constant 0 : index
    %c0_100 = arith.constant 0 : index
    %c0_101 = arith.constant 0 : index
    %220 = vector.load %arg3[%c1_98, %c0_99, %c0_100, %c0_101] : memref<2x6x32x32xf32, #tpu.memory_space<vmem>>, vector<1x1x32x32xf32>
    %221 = vector.shape_cast %220 : vector<1x1x32x32xf32> to vector<32x32xf32>
    %cst_102 = arith.constant dense<0.000000e+00> : vector<16x32xf32>
    %222 = tpu.matmul %219, %221, %cst_102 {dimension_numbers = #tpu.dot_dimension_numbers<[1], [0], [0], [1], [0, 0, 1, 1], [], []>} : vector<16x32xf32>, vector<32x32xf32>, vector<16x32xf32> -> vector<16x32xf32>
    %c1_103 = arith.constant 1 : index
    %c0_104 = arith.constant 0 : index
    %c0_105 = arith.constant 0 : index
    %223 = vector.load %arg4[%c1_103, %c0_104, %c0_105] : memref<2x10x32xf32, #tpu.memory_space<vmem>>, vector<1x1x32xf32>
    %224 = vector.shape_cast %223 : vector<1x1x32xf32> to vector<1x32xf32>
    %225 = vector.broadcast %224 : vector<1x32xf32> to vector<16x32xf32>
    %226 = arith.addf %222, %225 : vector<16x32xf32>
    %c1_106 = arith.constant 1 : index
    %c1_107 = arith.constant 1 : index
    %c0_108 = arith.constant 0 : index
    %c0_109 = arith.constant 0 : index
    %227 = vector.load %arg3[%c1_106, %c1_107, %c0_108, %c0_109] : memref<2x6x32x32xf32, #tpu.memory_space<vmem>>, vector<1x1x32x32xf32>
    %228 = vector.shape_cast %227 : vector<1x1x32x32xf32> to vector<32x32xf32>
    %cst_110 = arith.constant dense<0.000000e+00> : vector<16x32xf32>
    %229 = tpu.matmul %219, %228, %cst_110 {dimension_numbers = #tpu.dot_dimension_numbers<[1], [0], [0], [1], [0, 0, 1, 1], [], []>} : vector<16x32xf32>, vector<32x32xf32>, vector<16x32xf32> -> vector<16x32xf32>
    %c1_111 = arith.constant 1 : index
    %c1_112 = arith.constant 1 : index
    %c0_113 = arith.constant 0 : index
    %230 = vector.load %arg4[%c1_111, %c1_112, %c0_113] : memref<2x10x32xf32, #tpu.memory_space<vmem>>, vector<1x1x32xf32>
    %231 = vector.shape_cast %230 : vector<1x1x32xf32> to vector<1x32xf32>
    %232 = vector.broadcast %231 : vector<1x32xf32> to vector<16x32xf32>
    %233 = arith.addf %229, %232 : vector<16x32xf32>
    %c1_114 = arith.constant 1 : index
    %c2_115 = arith.constant 2 : index
    %c0_116 = arith.constant 0 : index
    %c0_117 = arith.constant 0 : index
    %234 = vector.load %arg3[%c1_114, %c2_115, %c0_116, %c0_117] : memref<2x6x32x32xf32, #tpu.memory_space<vmem>>, vector<1x1x32x32xf32>
    %235 = vector.shape_cast %234 : vector<1x1x32x32xf32> to vector<32x32xf32>
    %cst_118 = arith.constant dense<0.000000e+00> : vector<16x32xf32>
    %236 = tpu.matmul %219, %235, %cst_118 {dimension_numbers = #tpu.dot_dimension_numbers<[1], [0], [0], [1], [0, 0, 1, 1], [], []>} : vector<16x32xf32>, vector<32x32xf32>, vector<16x32xf32> -> vector<16x32xf32>
    %c1_119 = arith.constant 1 : index
    %c2_120 = arith.constant 2 : index
    %c0_121 = arith.constant 0 : index
    %237 = vector.load %arg4[%c1_119, %c2_120, %c0_121] : memref<2x10x32xf32, #tpu.memory_space<vmem>>, vector<1x1x32xf32>
    %238 = vector.shape_cast %237 : vector<1x1x32xf32> to vector<1x32xf32>
    %239 = vector.broadcast %238 : vector<1x32xf32> to vector<16x32xf32>
    %240 = arith.addf %236, %239 : vector<16x32xf32>
    %cst_122 = arith.constant 0.000000e+00 : f32
    %241 = vector.broadcast %cst_122 : f32 to vector<16x32xf32>
    %242 = vector.broadcast %28 : vector<1x32xf32> to vector<16x32xf32>
    %243 = arith.mulf %226, %242 : vector<16x32xf32>
    %244 = vector.broadcast %28 : vector<1x32xf32> to vector<16x32xf32>
    %245 = arith.mulf %233, %244 : vector<16x32xf32>
    %cst_123 = arith.constant dense<0.000000e+00> : vector<16x16xf32>
    %246 = tpu.matmul %243, %245, %cst_123 {dimension_numbers = #tpu.dot_dimension_numbers<[1], [1], [0], [0], [0, 0, 1, 0], [], []>} : vector<16x32xf32>, vector<16x32xf32>, vector<16x16xf32> -> vector<16x16xf32>
    %cst_124 = arith.constant 2.500000e-01 : f32
    %247 = vector.broadcast %cst_124 : f32 to vector<16x16xf32>
    %248 = arith.mulf %246, %247 : vector<16x16xf32>
    %249 = arith.addf %248, %20 : vector<16x16xf32>
    %cst_125 = arith.constant dense<0xFF800000> : vector<16xf32>
    %250 = vector.multi_reduction <maximumf>, %249, %cst_125 [1] : vector<16x16xf32> to vector<16xf32>
    %251 = vector.shape_cast %250 : vector<16xf32> to vector<16x1xf32>
    %252 = vector.broadcast %251 : vector<16x1xf32> to vector<16x16xf32>
    %253 = arith.subf %249, %252 : vector<16x16xf32>
    %254 = math.exp %253 : vector<16x16xf32>
    %cst_126 = arith.constant dense<0.000000e+00> : vector<16xf32>
    %255 = vector.multi_reduction <add>, %254, %cst_126 [1] : vector<16x16xf32> to vector<16xf32>
    %256 = vector.shape_cast %255 : vector<16xf32> to vector<16x1xf32>
    %257 = tpu.reciprocal %256 {approx = true} : vector<16x1xf32> -> vector<16x1xf32>
    %258 = vector.broadcast %257 : vector<16x1xf32> to vector<16x16xf32>
    %259 = arith.mulf %254, %258 : vector<16x16xf32>
    %260 = vector.broadcast %28 : vector<1x32xf32> to vector<16x32xf32>
    %261 = arith.mulf %240, %260 : vector<16x32xf32>
    %cst_127 = arith.constant dense<0.000000e+00> : vector<16x32xf32>
    %262 = tpu.matmul %259, %261, %cst_127 {dimension_numbers = #tpu.dot_dimension_numbers<[1], [0], [0], [1], [0, 0, 1, 1], [], []>} : vector<16x16xf32>, vector<16x32xf32>, vector<16x32xf32> -> vector<16x32xf32>
    %263 = arith.addf %241, %262 : vector<16x32xf32>
    %264 = vector.broadcast %35 : vector<1x32xf32> to vector<16x32xf32>
    %265 = arith.mulf %226, %264 : vector<16x32xf32>
    %266 = vector.broadcast %35 : vector<1x32xf32> to vector<16x32xf32>
    %267 = arith.mulf %233, %266 : vector<16x32xf32>
    %cst_128 = arith.constant dense<0.000000e+00> : vector<16x16xf32>
    %268 = tpu.matmul %265, %267, %cst_128 {dimension_numbers = #tpu.dot_dimension_numbers<[1], [1], [0], [0], [0, 0, 1, 0], [], []>} : vector<16x32xf32>, vector<16x32xf32>, vector<16x16xf32> -> vector<16x16xf32>
    %cst_129 = arith.constant 2.500000e-01 : f32
    %269 = vector.broadcast %cst_129 : f32 to vector<16x16xf32>
    %270 = arith.mulf %268, %269 : vector<16x16xf32>
    %271 = arith.addf %270, %20 : vector<16x16xf32>
    %cst_130 = arith.constant dense<0xFF800000> : vector<16xf32>
    %272 = vector.multi_reduction <maximumf>, %271, %cst_130 [1] : vector<16x16xf32> to vector<16xf32>
    %273 = vector.shape_cast %272 : vector<16xf32> to vector<16x1xf32>
    %274 = vector.broadcast %273 : vector<16x1xf32> to vector<16x16xf32>
    %275 = arith.subf %271, %274 : vector<16x16xf32>
    %276 = math.exp %275 : vector<16x16xf32>
    %cst_131 = arith.constant dense<0.000000e+00> : vector<16xf32>
    %277 = vector.multi_reduction <add>, %276, %cst_131 [1] : vector<16x16xf32> to vector<16xf32>
    %278 = vector.shape_cast %277 : vector<16xf32> to vector<16x1xf32>
    %279 = tpu.reciprocal %278 {approx = true} : vector<16x1xf32> -> vector<16x1xf32>
    %280 = vector.broadcast %279 : vector<16x1xf32> to vector<16x16xf32>
    %281 = arith.mulf %276, %280 : vector<16x16xf32>
    %282 = vector.broadcast %35 : vector<1x32xf32> to vector<16x32xf32>
    %283 = arith.mulf %240, %282 : vector<16x32xf32>
    %cst_132 = arith.constant dense<0.000000e+00> : vector<16x32xf32>
    %284 = tpu.matmul %281, %283, %cst_132 {dimension_numbers = #tpu.dot_dimension_numbers<[1], [0], [0], [1], [0, 0, 1, 1], [], []>} : vector<16x16xf32>, vector<16x32xf32>, vector<16x32xf32> -> vector<16x32xf32>
    %285 = arith.addf %263, %284 : vector<16x32xf32>
    %c1_133 = arith.constant 1 : index
    %c3_134 = arith.constant 3 : index
    %c0_135 = arith.constant 0 : index
    %c0_136 = arith.constant 0 : index
    %286 = vector.load %arg3[%c1_133, %c3_134, %c0_135, %c0_136] : memref<2x6x32x32xf32, #tpu.memory_space<vmem>>, vector<1x1x32x32xf32>
    %287 = vector.shape_cast %286 : vector<1x1x32x32xf32> to vector<32x32xf32>
    %cst_137 = arith.constant dense<0.000000e+00> : vector<16x32xf32>
    %288 = tpu.matmul %285, %287, %cst_137 {dimension_numbers = #tpu.dot_dimension_numbers<[1], [0], [0], [1], [0, 0, 1, 1], [], []>} : vector<16x32xf32>, vector<32x32xf32>, vector<16x32xf32> -> vector<16x32xf32>
    %c1_138 = arith.constant 1 : index
    %c3_139 = arith.constant 3 : index
    %c0_140 = arith.constant 0 : index
    %289 = vector.load %arg4[%c1_138, %c3_139, %c0_140] : memref<2x10x32xf32, #tpu.memory_space<vmem>>, vector<1x1x32xf32>
    %290 = vector.shape_cast %289 : vector<1x1x32xf32> to vector<1x32xf32>
    %291 = vector.broadcast %290 : vector<1x32xf32> to vector<16x32xf32>
    %292 = arith.addf %288, %291 : vector<16x32xf32>
    %293 = arith.addf %219, %292 : vector<16x32xf32>
    %c1_141 = arith.constant 1 : index
    %c4_142 = arith.constant 4 : index
    %c0_143 = arith.constant 0 : index
    %294 = vector.load %arg4[%c1_141, %c4_142, %c0_143] : memref<2x10x32xf32, #tpu.memory_space<vmem>>, vector<1x1x32xf32>
    %295 = vector.shape_cast %294 : vector<1x1x32xf32> to vector<1x32xf32>
    %c1_144 = arith.constant 1 : index
    %c5_145 = arith.constant 5 : index
    %c0_146 = arith.constant 0 : index
    %296 = vector.load %arg4[%c1_144, %c5_145, %c0_146] : memref<2x10x32xf32, #tpu.memory_space<vmem>>, vector<1x1x32xf32>
    %297 = vector.shape_cast %296 : vector<1x1x32xf32> to vector<1x32xf32>
    %cst_147 = arith.constant dense<0.000000e+00> : vector<16xf32>
    %298 = vector.multi_reduction <add>, %293, %cst_147 [1] : vector<16x32xf32> to vector<16xf32>
    %299 = vector.shape_cast %298 : vector<16xf32> to vector<16x1xf32>
    %cst_148 = arith.constant 3.200000e+01 : f32
    %300 = vector.broadcast %cst_148 : f32 to vector<16x1xf32>
    %301 = arith.divf %299, %300 : vector<16x1xf32>
    %302 = vector.broadcast %301 : vector<16x1xf32> to vector<16x32xf32>
    %303 = arith.subf %293, %302 : vector<16x32xf32>
    %304 = arith.mulf %303, %303 : vector<16x32xf32>
    %cst_149 = arith.constant dense<0.000000e+00> : vector<16xf32>
    %305 = vector.multi_reduction <add>, %304, %cst_149 [1] : vector<16x32xf32> to vector<16xf32>
    %306 = vector.shape_cast %305 : vector<16xf32> to vector<16x1xf32>
    %cst_150 = arith.constant 3.200000e+01 : f32
    %307 = vector.broadcast %cst_150 : f32 to vector<16x1xf32>
    %308 = arith.divf %306, %307 : vector<16x1xf32>
    %309 = vector.broadcast %301 : vector<16x1xf32> to vector<16x32xf32>
    %310 = arith.subf %293, %309 : vector<16x32xf32>
    %cst_151 = arith.constant 9.99999974E-6 : f32
    %311 = vector.broadcast %cst_151 : f32 to vector<16x1xf32>
    %312 = arith.addf %308, %311 : vector<16x1xf32>
    %313 = math.rsqrt %312 : vector<16x1xf32>
    %314 = vector.broadcast %313 : vector<16x1xf32> to vector<16x32xf32>
    %315 = arith.mulf %310, %314 : vector<16x32xf32>
    %316 = vector.broadcast %295 : vector<1x32xf32> to vector<16x32xf32>
    %317 = arith.mulf %315, %316 : vector<16x32xf32>
    %318 = vector.broadcast %297 : vector<1x32xf32> to vector<16x32xf32>
    %319 = arith.addf %317, %318 : vector<16x32xf32>
    %c1_152 = arith.constant 1 : index
    %c4_153 = arith.constant 4 : index
    %c0_154 = arith.constant 0 : index
    %c0_155 = arith.constant 0 : index
    %320 = vector.load %arg3[%c1_152, %c4_153, %c0_154, %c0_155] : memref<2x6x32x32xf32, #tpu.memory_space<vmem>>, vector<1x1x32x32xf32>
    %321 = vector.shape_cast %320 : vector<1x1x32x32xf32> to vector<32x32xf32>
    %cst_156 = arith.constant dense<0.000000e+00> : vector<16x32xf32>
    %322 = tpu.matmul %319, %321, %cst_156 {dimension_numbers = #tpu.dot_dimension_numbers<[1], [0], [0], [1], [0, 0, 1, 1], [], []>} : vector<16x32xf32>, vector<32x32xf32>, vector<16x32xf32> -> vector<16x32xf32>
    %c1_157 = arith.constant 1 : index
    %c6_158 = arith.constant 6 : index
    %c0_159 = arith.constant 0 : index
    %323 = vector.load %arg4[%c1_157, %c6_158, %c0_159] : memref<2x10x32xf32, #tpu.memory_space<vmem>>, vector<1x1x32xf32>
    %324 = vector.shape_cast %323 : vector<1x1x32xf32> to vector<1x32xf32>
    %325 = vector.broadcast %324 : vector<1x32xf32> to vector<16x32xf32>
    %326 = arith.addf %322, %325 : vector<16x32xf32>
    %cst_160 = arith.constant 5.000000e-01 : f32
    %327 = vector.broadcast %cst_160 : f32 to vector<16x32xf32>
    %328 = arith.mulf %327, %326 : vector<16x32xf32>
    %cst_161 = arith.constant 0.707106769 : f32
    %329 = vector.broadcast %cst_161 : f32 to vector<16x32xf32>
    %330 = arith.mulf %326, %329 : vector<16x32xf32>
    %cst_162 = arith.constant 0.000000e+00 : f32
    %331 = vector.broadcast %cst_162 : f32 to vector<16x32xf32>
    %332 = arith.cmpf olt, %330, %331 : vector<16x32xf32>
    %cst_163 = arith.constant -1.000000e+00 : f32
    %cst_164 = arith.constant 1.000000e+00 : f32
    %333 = vector.broadcast %cst_163 : f32 to vector<16x32xf32>
    %334 = vector.broadcast %cst_164 : f32 to vector<16x32xf32>
    %335 = arith.select %332, %333, %334 : vector<16x32xi1>, vector<16x32xf32>
    %336 = math.absf %330 : vector<16x32xf32>
    %cst_165 = arith.constant 0.327591091 : f32
    %337 = vector.broadcast %cst_165 : f32 to vector<16x32xf32>
    %338 = arith.mulf %337, %336 : vector<16x32xf32>
    %cst_166 = arith.constant 1.000000e+00 : f32
    %339 = vector.broadcast %cst_166 : f32 to vector<16x32xf32>
    %340 = arith.addf %339, %338 : vector<16x32xf32>
    %cst_167 = arith.constant 1.000000e+00 : f32
    %341 = vector.broadcast %cst_167 : f32 to vector<16x32xf32>
    %342 = arith.divf %341, %340 : vector<16x32xf32>
    %cst_168 = arith.constant 1.06140542 : f32
    %343 = vector.broadcast %cst_168 : f32 to vector<16x32xf32>
    %344 = arith.mulf %343, %342 : vector<16x32xf32>
    %cst_169 = arith.constant -1.45315206 : f32
    %345 = vector.broadcast %cst_169 : f32 to vector<16x32xf32>
    %346 = arith.addf %344, %345 : vector<16x32xf32>
    %347 = arith.mulf %346, %342 : vector<16x32xf32>
    %cst_170 = arith.constant 1.42141378 : f32
    %348 = vector.broadcast %cst_170 : f32 to vector<16x32xf32>
    %349 = arith.addf %347, %348 : vector<16x32xf32>
    %350 = arith.mulf %349, %342 : vector<16x32xf32>
    %cst_171 = arith.constant -0.284496725 : f32
    %351 = vector.broadcast %cst_171 : f32 to vector<16x32xf32>
    %352 = arith.addf %350, %351 : vector<16x32xf32>
    %353 = arith.mulf %352, %342 : vector<16x32xf32>
    %cst_172 = arith.constant 0.254829586 : f32
    %354 = vector.broadcast %cst_172 : f32 to vector<16x32xf32>
    %355 = arith.addf %353, %354 : vector<16x32xf32>
    %356 = arith.mulf %355, %342 : vector<16x32xf32>
    %cst_173 = arith.constant 0.000000e+00 : f32
    %357 = vector.broadcast %cst_173 : f32 to vector<16x32xf32>
    %358 = arith.subf %357, %336 : vector<16x32xf32>
    %359 = arith.mulf %358, %336 : vector<16x32xf32>
    %360 = math.exp %359 : vector<16x32xf32>
    %361 = arith.mulf %356, %360 : vector<16x32xf32>
    %cst_174 = arith.constant 1.000000e+00 : f32
    %362 = vector.broadcast %cst_174 : f32 to vector<16x32xf32>
    %363 = arith.subf %362, %361 : vector<16x32xf32>
    %364 = arith.mulf %335, %363 : vector<16x32xf32>
    %cst_175 = arith.constant 1.000000e+00 : f32
    %365 = vector.broadcast %cst_175 : f32 to vector<16x32xf32>
    %366 = arith.addf %365, %364 : vector<16x32xf32>
    %367 = arith.mulf %328, %366 : vector<16x32xf32>
    %c1_176 = arith.constant 1 : index
    %c5_177 = arith.constant 5 : index
    %c0_178 = arith.constant 0 : index
    %c0_179 = arith.constant 0 : index
    %368 = vector.load %arg3[%c1_176, %c5_177, %c0_178, %c0_179] : memref<2x6x32x32xf32, #tpu.memory_space<vmem>>, vector<1x1x32x32xf32>
    %369 = vector.shape_cast %368 : vector<1x1x32x32xf32> to vector<32x32xf32>
    %cst_180 = arith.constant dense<0.000000e+00> : vector<16x32xf32>
    %370 = tpu.matmul %367, %369, %cst_180 {dimension_numbers = #tpu.dot_dimension_numbers<[1], [0], [0], [1], [0, 0, 1, 1], [], []>} : vector<16x32xf32>, vector<32x32xf32>, vector<16x32xf32> -> vector<16x32xf32>
    %c1_181 = arith.constant 1 : index
    %c7_182 = arith.constant 7 : index
    %c0_183 = arith.constant 0 : index
    %371 = vector.load %arg4[%c1_181, %c7_182, %c0_183] : memref<2x10x32xf32, #tpu.memory_space<vmem>>, vector<1x1x32xf32>
    %372 = vector.shape_cast %371 : vector<1x1x32xf32> to vector<1x32xf32>
    %373 = vector.broadcast %372 : vector<1x32xf32> to vector<16x32xf32>
    %374 = arith.addf %370, %373 : vector<16x32xf32>
    %375 = arith.addf %319, %374 : vector<16x32xf32>
    %c1_184 = arith.constant 1 : index
    %c8_185 = arith.constant 8 : index
    %c0_186 = arith.constant 0 : index
    %376 = vector.load %arg4[%c1_184, %c8_185, %c0_186] : memref<2x10x32xf32, #tpu.memory_space<vmem>>, vector<1x1x32xf32>
    %377 = vector.shape_cast %376 : vector<1x1x32xf32> to vector<1x32xf32>
    %c1_187 = arith.constant 1 : index
    %c9_188 = arith.constant 9 : index
    %c0_189 = arith.constant 0 : index
    %378 = vector.load %arg4[%c1_187, %c9_188, %c0_189] : memref<2x10x32xf32, #tpu.memory_space<vmem>>, vector<1x1x32xf32>
    %379 = vector.shape_cast %378 : vector<1x1x32xf32> to vector<1x32xf32>
    %cst_190 = arith.constant dense<0.000000e+00> : vector<16xf32>
    %380 = vector.multi_reduction <add>, %375, %cst_190 [1] : vector<16x32xf32> to vector<16xf32>
    %381 = vector.shape_cast %380 : vector<16xf32> to vector<16x1xf32>
    %cst_191 = arith.constant 3.200000e+01 : f32
    %382 = vector.broadcast %cst_191 : f32 to vector<16x1xf32>
    %383 = arith.divf %381, %382 : vector<16x1xf32>
    %384 = vector.broadcast %383 : vector<16x1xf32> to vector<16x32xf32>
    %385 = arith.subf %375, %384 : vector<16x32xf32>
    %386 = arith.mulf %385, %385 : vector<16x32xf32>
    %cst_192 = arith.constant dense<0.000000e+00> : vector<16xf32>
    %387 = vector.multi_reduction <add>, %386, %cst_192 [1] : vector<16x32xf32> to vector<16xf32>
    %388 = vector.shape_cast %387 : vector<16xf32> to vector<16x1xf32>
    %cst_193 = arith.constant 3.200000e+01 : f32
    %389 = vector.broadcast %cst_193 : f32 to vector<16x1xf32>
    %390 = arith.divf %388, %389 : vector<16x1xf32>
    %391 = vector.broadcast %383 : vector<16x1xf32> to vector<16x32xf32>
    %392 = arith.subf %375, %391 : vector<16x32xf32>
    %cst_194 = arith.constant 9.99999974E-6 : f32
    %393 = vector.broadcast %cst_194 : f32 to vector<16x1xf32>
    %394 = arith.addf %390, %393 : vector<16x1xf32>
    %395 = math.rsqrt %394 : vector<16x1xf32>
    %396 = vector.broadcast %395 : vector<16x1xf32> to vector<16x32xf32>
    %397 = arith.mulf %392, %396 : vector<16x32xf32>
    %398 = vector.broadcast %377 : vector<1x32xf32> to vector<16x32xf32>
    %399 = arith.mulf %397, %398 : vector<16x32xf32>
    %400 = vector.broadcast %379 : vector<1x32xf32> to vector<16x32xf32>
    %401 = arith.addf %399, %400 : vector<16x32xf32>
    %c0_195 = arith.constant 0 : index
    %c0_196 = arith.constant 0 : index
    %402 = vector.load %arg5[%c0_195, %c0_196] : memref<32x64xf32, #tpu.memory_space<vmem>>, vector<32x64xf32>
    %cst_197 = arith.constant dense<0.000000e+00> : vector<16x64xf32>
    %403 = tpu.matmul %401, %402, %cst_197 {dimension_numbers = #tpu.dot_dimension_numbers<[1], [0], [0], [1], [0, 0, 1, 1], [], []>} : vector<16x32xf32>, vector<32x64xf32>, vector<16x64xf32> -> vector<16x64xf32>
    %c0_198 = arith.constant 0 : index
    %c0_199 = arith.constant 0 : index
    %404 = vector.load %arg6[%c0_198, %c0_199] : memref<1x64xf32, #tpu.memory_space<vmem>>, vector<1x64xf32>
    %405 = vector.broadcast %404 : vector<1x64xf32> to vector<16x64xf32>
    %406 = arith.addf %403, %405 : vector<16x64xf32>
    %c0_200 = arith.constant 0 : index
    %c0_201 = arith.constant 0 : index
    %c0_202 = arith.constant 0 : index
    %407 = vector.load %arg7[%c0_200, %c0_201, %c0_202] : memref<1x16x64xf32, #tpu.memory_space<vmem>>, vector<1x16x64xf32>
    %408 = vector.shape_cast %407 : vector<1x16x64xf32> to vector<16x64xf32>
    %409 = vector.shape_cast %406 : vector<16x64xf32> to vector<1x16x64xf32>
    tpu.vector_store %arg7[%c0_200, %c0_201, %c0_202], %409 {strides = array<i32>} : memref<1x16x64xf32, #tpu.memory_space<vmem>>, vector<1x16x64xf32>,
    return
  }
  func.func @transform_0(%arg0: i32) -> (i32, i32, i32) {
    %c0_i32 = arith.constant 0 : i32
    %c0_i32_0 = arith.constant 0 : i32
    %c0_i32_1 = arith.constant 0 : i32
    return %arg0, %c0_i32, %c0_i32_0 : i32, i32, i32
  }
  func.func @transform_1(%arg0: i32) -> (i32, i32, i32) {
    %c0_i32 = arith.constant 0 : i32
    %c0_i32_0 = arith.constant 0 : i32
    %c0_i32_1 = arith.constant 0 : i32
    return %arg0, %c0_i32, %c0_i32_0 : i32, i32, i32
  }
  func.func @transform_2(%arg0: i32) -> (i32, i32, i32, i32) {
    %c0_i32 = arith.constant 0 : i32
    %c0_i32_0 = arith.constant 0 : i32
    %c0_i32_1 = arith.constant 0 : i32
    %c0_i32_2 = arith.constant 0 : i32
    %c0_i32_3 = arith.constant 0 : i32
    return %c0_i32, %c0_i32_0, %c0_i32_1, %c0_i32_2 : i32, i32, i32, i32
  }
  func.func @transform_3(%arg0: i32) -> (i32, i32, i32) {
    %c0_i32 = arith.constant 0 : i32
    %c0_i32_0 = arith.constant 0 : i32
    %c0_i32_1 = arith.constant 0 : i32
    %c0_i32_2 = arith.constant 0 : i32
    return %c0_i32, %c0_i32_0, %c0_i32_1 : i32, i32, i32
  }
  func.func @transform_4(%arg0: i32) -> (i32, i32) {
    %c0_i32 = arith.constant 0 : i32
    %c0_i32_0 = arith.constant 0 : i32
    %c0_i32_1 = arith.constant 0 : i32
    return %c0_i32, %c0_i32_0 : i32, i32
  }
  func.func @transform_5(%arg0: i32) -> (i32, i32) {
    %c0_i32 = arith.constant 0 : i32
    %c0_i32_0 = arith.constant 0 : i32
    %c0_i32_1 = arith.constant 0 : i32
    return %c0_i32, %c0_i32_0 : i32, i32
  }
  func.func @transform_6(%arg0: i32) -> (i32, i32, i32) {
    %c0_i32 = arith.constant 0 : i32
    %c0_i32_0 = arith.constant 0 : i32
    %c0_i32_1 = arith.constant 0 : i32
    return %arg0, %c0_i32, %c0_i32_0 : i32, i32, i32
  }
}

</mosaic_0001>

<llo_original>
// kernel: aligner_forward.1
$region0: #{aligner_forward.1}
  #allocation0 [shape = 'u32[]', space=smem, size = 0x4, offset = 0x4, fixed_abs, tag = 'smem constant byte address 0x4 - core index']
  #allocation1 [shape = 'u32[144,128]{1,0:T(1,128)}', space=vmem, size = 0x12000, scoped, tag = 'internal scratch']
  %s0 = inlined_call_operand.vmem [shape: f32[2,16,32], index: 0, kind: input, shape index: {}]
  %s1 = inlined_call_operand.vmem [shape: f32[2,1,16], index: 1, kind: input, shape index: {}]
  %s2 = inlined_call_operand.vmem [shape: f32[2,6,32,32], index: 2, kind: input, shape index: {}]
  %s3 = inlined_call_operand.vmem [shape: f32[2,10,32], index: 3, kind: input, shape index: {}]
  %s4 = inlined_call_operand.vmem [shape: f32[32,64], index: 4, kind: input, shape index: {}]
  %s5 = inlined_call_operand.vmem [shape: f32[1,64], index: 5, kind: input, shape index: {}]
  %s6 = inlined_call_operand.vmem [shape: f32[2,16,64], index: 6, kind: output, shape index: {}]
  %s7 = sld [smem:[#allocation0]]
  $region57: #{aligner_forward.1} parent=0
    _
  %s9 = ssub.s32 1, %s7
  %s10 = scalar_select 0, %s9, %s7
  loop: start=0, step=1, limit=4
  $region2: #{aligner_forward.1} parent=0 // loop_pre_header
    _
  $region3: #{aligner_forward.1} parent=0 // loop_header
    %s12 = sphi 0, %s16
    %p13 = scmp.ge.s32.totalorder %s12, 4
    %s22 = sphi 0, %s24
    %s25 = sphi 0, %s22
    %s26 = sphi 0, %s25
    %s42 = sphi 0, %s26
    %s48 = sphi 0, %s50
    %s51 = sphi 0, %s48
    %s52 = sphi 0, %s51
    %s68 = sphi 0, %s52
    %s72 = sphi 0, %s72
    %s74 = sphi 0, %s72
    %s75 = sphi 0, %s74
    %s89 = sphi 0, %s75
    %s93 = sphi 0, %s93
    %s95 = sphi 0, %s93
    %s96 = sphi 0, %s95
    %s110 = sphi 0, %s96
    %s114 = sphi 0, %s114
    %s116 = sphi 0, %s114
    %s117 = sphi 0, %s116
    %s131 = sphi 0, %s117
    %s135 = sphi 0, %s135
    %s137 = sphi 0, %s135
    %s138 = sphi 0, %s137
    %s152 = sphi 0, %s138
    %s158 = sphi 0, %s160
    %s161 = sphi 0, %s158
    %s162 = sphi 0, %s161
    %s178 = sphi 0, %s162
  $region4: #{aligner_forward.1} parent=0 // loop_header_branch
    %15 = sbr.rel (%p13) target = $region8
  $region5: #{aligner_forward.1} parent=0 // loop_body
    %s17 = ssub.s32 %s12, 1
    %s18 = ssub.s32 %s12, 2
    %s19 = sadd.s32 %s12, 1
    %s20 = ssub.s32 %s12, %s19
    %p21 = scmp.eq.s32.totalorder %s20, 0
    %s23 = sadd.s32 %s22, 1
    %s24 = scalar_select %p21, %s22, %s23
    %p27 = pneg %p21
    %p28 = scmp.eq.s32.totalorder %s12, 1
    %p29 = por %p27, %p28
    %p30 = scmp.ne.s32.totalorder %s22, %s25
    %p31 = scmp.eq.s32.totalorder %s12, 0
    %p32 = por %p30, %p31
    %p33 = scmp.ne.s32.totalorder %s22, %s25
    %p34 = scmp.eq.s32.totalorder %s17, 1
    %p35 = por %p33, %p34
    %p36 = scmp.ne.s32.totalorder %s25, %s26
    %p37 = scmp.eq.s32.totalorder %s17, 0
    %p38 = por %p36, %p37
    %p39 = scmp.ne.s32.totalorder %s25, %s26
    %p40 = scmp.eq.s32.totalorder %s18, 1
    %p41 = por %p39, %p40
    %p43 = scmp.ne.s32.totalorder %s26, %s42
    %p44 = scmp.eq.s32.totalorder %s18, 0
    %p45 = por %p43, %p44
    %s46 = ssub.s32 %s12, %s19
    %p47 = scmp.eq.s32.totalorder %s46, 0
    %s49 = sadd.s32 %s48, 1
    %s50 = scalar_select %p47, %s48, %s49
    %p53 = pneg %p47
    %p54 = scmp.eq.s32.totalorder %s12, 1
    %p55 = por %p53, %p54
    %p56 = scmp.ne.s32.totalorder %s48, %s51
    %p57 = scmp.eq.s32.totalorder %s12, 0
    %p58 = por %p56, %p57
    %p59 = scmp.ne.s32.totalorder %s48, %s51
    %p60 = scmp.eq.s32.totalorder %s17, 1
    %p61 = por %p59, %p60
    %p62 = scmp.ne.s32.totalorder %s51, %s52
    %p63 = scmp.eq.s32.totalorder %s17, 0
    %p64 = por %p62, %p63
    %p65 = scmp.ne.s32.totalorder %s51, %s52
    %p66 = scmp.eq.s32.totalorder %s18, 1
    %p67 = por %p65, %p66
    %p69 = scmp.ne.s32.totalorder %s52, %s68
    %p70 = scmp.eq.s32.totalorder %s18, 0
    %p71 = por %p69, %p70
    %s73 = sadd.s32 %s72, 1
    %p76 = scmp.eq.s32.totalorder %s12, 1
    %p77 = scmp.ne.s32.totalorder %s72, %s74
    %p78 = scmp.eq.s32.totalorder %s12, 0
    %p79 = por %p77, %p78
    %p80 = scmp.ne.s32.totalorder %s72, %s74
    %p81 = scmp.eq.s32.totalorder %s17, 1
    %p82 = por %p80, %p81
    %p83 = scmp.ne.s32.totalorder %s74, %s75
    %p84 = scmp.eq.s32.totalorder %s17, 0
    %p85 = por %p83, %p84
    %p86 = scmp.ne.s32.totalorder %s74, %s75
    %p87 = scmp.eq.s32.totalorder %s18, 1
    %p88 = por %p86, %p87
    %p90 = scmp.ne.s32.totalorder %s75, %s89
    %p91 = scmp.eq.s32.totalorder %s18, 0
    %p92 = por %p90, %p91
    %s94 = sadd.s32 %s93, 1
    %p97 = scmp.eq.s32.totalorder %s12, 1
    %p98 = scmp.ne.s32.totalorder %s93, %s95
    %p99 = scmp.eq.s32.totalorder %s12, 0
    %p100 = por %p98, %p99
    %p101 = scmp.ne.s32.totalorder %s93, %s95
    %p102 = scmp.eq.s32.totalorder %s17, 1
    %p103 = por %p101, %p102
    %p104 = scmp.ne.s32.totalorder %s95, %s96
    %p105 = scmp.eq.s32.totalorder %s17, 0
    %p106 = por %p104, %p105
    %p107 = scmp.ne.s32.totalorder %s95, %s96
    %p108 = scmp.eq.s32.totalorder %s18, 1
    %p109 = por %p107, %p108
    %p111 = scmp.ne.s32.totalorder %s96, %s110
    %p112 = scmp.eq.s32.totalorder %s18, 0
    %p113 = por %p111, %p112
    %s115 = sadd.s32 %s114, 1
    %p118 = scmp.eq.s32.totalorder %s12, 1
    %p119 = scmp.ne.s32.totalorder %s114, %s116
    %p120 = scmp.eq.s32.totalorder %s12, 0
    %p121 = por %p119, %p120
    %p122 = scmp.ne.s32.totalorder %s114, %s116
    %p123 = scmp.eq.s32.totalorder %s17, 1
    %p124 = por %p122, %p123
    %p125 = scmp.ne.s32.totalorder %s116, %s117
    %p126 = scmp.eq.s32.totalorder %s17, 0
    %p127 = por %p125, %p126
    %p128 = scmp.ne.s32.totalorder %s116, %s117
    %p129 = scmp.eq.s32.totalorder %s18, 1
    %p130 = por %p128, %p129
    %p132 = scmp.ne.s32.totalorder %s117, %s131
    %p133 = scmp.eq.s32.totalorder %s18, 0
    %p134 = por %p132, %p133
    %s136 = sadd.s32 %s135, 1
    %p139 = scmp.eq.s32.totalorder %s12, 1
    %p140 = scmp.ne.s32.totalorder %s135, %s137
    %p141 = scmp.eq.s32.totalorder %s12, 0
    %p142 = por %p140, %p141
    %p143 = scmp.ne.s32.totalorder %s135, %s137
    %p144 = scmp.eq.s32.totalorder %s17, 1
    %p145 = por %p143, %p144
    %p146 = scmp.ne.s32.totalorder %s137, %s138
    %p147 = scmp.eq.s32.totalorder %s17, 0
    %p148 = por %p146, %p147
    %p149 = scmp.ne.s32.totalorder %s137, %s138
    %p150 = scmp.eq.s32.totalorder %s18, 1
    %p151 = por %p149, %p150
    %p153 = scmp.ne.s32.totalorder %s138, %s152
    %p154 = scmp.eq.s32.totalorder %s18, 0
    %p155 = por %p153, %p154
    %s156 = ssub.s32 %s12, %s19
    %p157 = scmp.eq.s32.totalorder %s156, 0
    %s159 = sadd.s32 %s158, 1
    %s160 = scalar_select %p157, %s158, %s159
    %p163 = pneg %p157
    %p164 = scmp.eq.s32.totalorder %s12, 1
    %p165 = por %p163, %p164
    %p166 = scmp.ne.s32.totalorder %s158, %s161
    %p167 = scmp.eq.s32.totalorder %s12, 0
    %p168 = por %p166, %p167
    %p169 = scmp.ne.s32.totalorder %s158, %s161
    %p170 = scmp.eq.s32.totalorder %s17, 1
    %p171 = por %p169, %p170
    %p172 = scmp.ne.s32.totalorder %s161, %s162
    %p173 = scmp.eq.s32.totalorder %s17, 0
    %p174 = por %p172, %p173
    %p175 = scmp.ne.s32.totalorder %s161, %s162
    %p176 = scmp.eq.s32.totalorder %s18, 1
    %p177 = por %p175, %p176
    %p179 = scmp.ne.s32.totalorder %s162, %s178
    %p180 = scmp.eq.s32.totalorder %s18, 0
    %p181 = por %p179, %p180
    %p182 = scmp.le.s32.totalorder 1, %s12
    %p183 = scmp.lt.s32.totalorder %s12, 3
    %p184 = pnand %p182, %p183
    %p185 = pneg %p184
    // Predicated region
    $region9: #{aligner_forward.1} parent=5 // pred_check
      _
    $region10: #{aligner_forward.1} parent=5 // pred_check_branch
      %187 = sbr.rel (%p184) target = $region12
    $region11: #{aligner_forward.1} parent=5 // pred_region
      %s188 = ssub.s32 %s12, 1
      // Predicated region
      $region13: #{aligner_forward.1} parent=11 // pred_check
        %p189 = pneg %p85
      $region14: #{aligner_forward.1} parent=11 // pred_check_branch
        %191 = sbr.rel (%p189) target = $region16
      $region15: #{aligner_forward.1} parent=11 // pred_region
        _
      $region16: #{aligner_forward.1} parent=11 // pred_fallthru
        _
      // Predicated region
      $region17: #{aligner_forward.1} parent=11 // pred_check
        %p192 = pneg %p106
      $region18: #{aligner_forward.1} parent=11 // pred_check_branch
        %194 = sbr.rel (%p192) target = $region20
      $region19: #{aligner_forward.1} parent=11 // pred_region
        _
      $region20: #{aligner_forward.1} parent=11 // pred_fallthru
        _
      // Predicated region
      $region21: #{aligner_forward.1} parent=11 // pred_check
        %p195 = pneg %p127
      $region22: #{aligner_forward.1} parent=11 // pred_check_branch
        %197 = sbr.rel (%p195) target = $region24
      $region23: #{aligner_forward.1} parent=11 // pred_region
        _
      $region24: #{aligner_forward.1} parent=11 // pred_fallthru
        _
      // Predicated region
      $region25: #{aligner_forward.1} parent=11 // pred_check
        %p198 = pneg %p148
      $region26: #{aligner_forward.1} parent=11 // pred_check_branch
        %200 = sbr.rel (%p198) target = $region28
      $region27: #{aligner_forward.1} parent=11 // pred_region
        _
      $region28: #{aligner_forward.1} parent=11 // pred_fallthru
        _
    $region12: #{aligner_forward.1} parent=5 // pred_fallthru
      _
    %p201 = scmp.lt.s32.totalorder %s12, 2
    // Predicated region
    $region29: #{aligner_forward.1} parent=5 // pred_check
      %p202 = pneg %p201
    $region30: #{aligner_forward.1} parent=5 // pred_check_branch
      %204 = sbr.rel (%p202) target = $region32
    $region31: #{aligner_forward.1} parent=5 // pred_region
      // Predicated region
      $region33: #{aligner_forward.1} parent=31 // pred_check
        %p205 = pneg %p32
      $region34: #{aligner_forward.1} parent=31 // pred_check_branch
        %207 = sbr.rel (%p205) target = $region36
      $region35: #{aligner_forward.1} parent=31 // pred_region
        %p208 = scmp.lt.s32.totalorder %s12, 1
        %s209 = scalar_select %p208, %s12, 1
        %s210 = smul.addr %s209, 2
        %s211 = smul.addr %s210, 8
        %s212 = scalar_lea.vmem %s0, %s211
      $region36: #{aligner_forward.1} parent=31 // pred_fallthru
        _
      // Predicated region
      $region37: #{aligner_forward.1} parent=31 // pred_check
        %p213 = pneg %p58
      $region38: #{aligner_forward.1} parent=31 // pred_check_branch
        %215 = sbr.rel (%p213) target = $region40
      $region39: #{aligner_forward.1} parent=31 // pred_region
        %p216 = scmp.lt.s32.totalorder %s12, 1
        %s217 = scalar_select %p216, %s12, 1
        %s218 = scalar_lea.vmem %s1, %s217
      $region40: #{aligner_forward.1} parent=31 // pred_fallthru
        _
    $region32: #{aligner_forward.1} parent=5 // pred_fallthru
      _
    %p219 = scmp.le.s32.totalorder 1, %s12
    %p220 = scmp.lt.s32.totalorder %s12, 3
    %p221 = pnand %p219, %p220
    %p222 = pneg %p221
    // Predicated region
    $region41: #{aligner_forward.1} parent=5 // pred_check
      _
    $region42: #{aligner_forward.1} parent=5 // pred_check_branch
      %224 = sbr.rel (%p221) target = $region44
    $region43: #{aligner_forward.1} parent=5 // pred_region
      %s225 = ssub.s32 %s12, 1
      %p226 = scmp.lt.s32.totalorder %s17, 1
      %s227 = scalar_select %p226, %s17, 1
      %s228 = smul.addr %s227, 2
      %s229 = smul.addr %s228, 8
      %s230 = scalar_lea.vmem %s0, %s229
      %p231 = pneg %p38
      %p232 = pneg %p35
      %p233 = scmp.lt.s32.totalorder %s17, 1
      %s234 = scalar_select %p233, %s17, 1
      %s235 = scalar_lea.vmem %s1, %s234
      %p236 = pneg %p64
      %p237 = pneg %p61
      %p238 = pneg %p85
      %p239 = pneg %p82
      %p240 = pneg %p106
      %p241 = pneg %p103
      %p242 = pneg %p127
      %p243 = pneg %p124
      %p244 = pneg %p148
      %p245 = pneg %p145
      %p246 = pneg %p174
      %p247 = pneg %p171
      %p248 = scmp.lt.s32.totalorder %s17, 1
      %s249 = scalar_select %p248, %s17, 1
      %s250 = smul.addr %s249, 2
      %s251 = smul.addr %s250, 8
      %s252 = scalar_lea.vmem %s6, %s251
      %p253 = scmp.lt.s32.totalorder %s17, 1
      %s254 = scalar_select %p253, %s17, 1
      %s255 = smul.addr %s254, 2
      %s256 = smul.addr %s255, 8
      %s257 = scalar_lea.vmem %s0, %s256
      %p258 = scmp.lt.s32.totalorder %s17, 1
      %s259 = scalar_select %p258, %s17, 1
      %s260 = scalar_lea.vmem %s1, %s259
      %p261 = scmp.lt.s32.totalorder %s17, 1
      %s262 = scalar_select %p261, %s17, 1
      %s263 = smul.addr %s262, 2
      %s264 = smul.addr %s263, 8
      %s265 = scalar_lea.vmem %s6, %s264
      %v266 = vlaneseq
      %v267 = vshrl.u32 %v266, 7
      %v268 = vadd.s32 %v267, 8
      %v269 = vlaneseq
      %v270 = vand.u32 %v269, 127
      %v271 = vld [vmem:[%s260] sm:$0x1]
      %vm272 = vcmp.gt.f32.partialorder %v271, 0.5
      %vm273 = vcmp.lt.s32.totalorder %v270, 6
      %vm274 = vcmp.ge.s32.totalorder %v267, 6
      %vm275 = vcmp.ge.s32.totalorder %v268, 6
      %v276 = vsel %vm273, 1, 0
      %vm277 = vcmp.eq.s32.totalorder %v276, 1
      %v278 = vsel %vm274, 1, 0
      %v279 = vsel %vm275, 1, 0
      %vm280 = vcmp.eq.s32.totalorder %v278, 1
      %vm281 = vcmp.eq.s32.totalorder %v279, 1
      %vm282 = vmand %vm277, %vm280
      %vm283 = vmand %vm277, %vm281
      %vm284 = vcmp.ge.s32.totalorder %v270, 6
      %vm285 = vmand %vm284, %vm272
      %v286 = vsel %vm285, 1, 0
      %v287 = vlaneseq
      %v288 = vshrl.u32 %v287, 7
      %v289 = vsub.s32 0, %v288
      %v290 = vrot.slane %v286, %v289
      %vm291 = vcmp.eq.s32.totalorder %v290, 1
      %vm292 = vmor %vm282, %vm291
      %vm293 = vmor %vm283, %vm291
      %v294 = vsel %vm292, 0.0, -1e+30
      %v295 = vsel %vm293, 0.0, -1e+30
      %vm296 = vcmp.ge.s32.totalorder %v270, 0
      %vm297 = vcmp.lt.s32.totalorder %v270, 16
      %vm298 = vmand %vm296, %vm297
      %v299 = vsel %vm298, 1, 0
      %v300 = vcvt.s32.f32 %v299
      %vm301 = vcmp.ge.s32.totalorder %v270, 16
      %vm302 = vcmp.lt.s32.totalorder %v270, 32
      %vm303 = vmand %vm301, %vm302
      %v304 = vsel %vm303, 1, 0
      %v305 = vcvt.s32.f32 %v304
      %v306 = vld [vmem:[%s257] sm:$0xff]
      %v307 = vld [vmem:[%s257 + $0x8] sm:$0xff]
      %v308 = vld [vmem:[%s2] sm:$0xff]
      %v309 = vld [vmem:[%s2 + $0x8] sm:$0xff]
      %v310 = vld [vmem:[%s2 + $0x10] sm:$0xff]
      %v311 = vld [vmem:[%s2 + $0x18] sm:$0xff]
      %v312 = vld [vmem:[%s3] sm:$0x1]
      %v313 = vlaneseq
      %v314 = vshrl.u32 %v313, 7
      %v315 = vsub.s32 0, %v314
      %v316 = vrot.slane %v312, %v315
      %vm317 = vcmask 261120
      %v319 = vsel %vm317, %v306, 0
      %v322 = vsel %vm317, %v307, 0
      %324 = vmatprep.subr.mxu0 0.0
      %325 = vmatpush1.msra.mxu0 0.0
      %326 = vmatprep.subr.mxu0 0.0
      %327 = vmatpush1.msra.mxu0 0.0
      %328 = vmatprep.subr.mxu0 0.0
      %329 = vmatpush1.msra.mxu0 0.0
      %330 = vmatprep.subr.mxu0 0.0
      %331 = vmatpush1.msra.mxu0 0.0
      %332 = vmatprep.subr.mxu0 0.0
      %333 = vmatpush1.msra.mxu0 0.0
      %334 = vmatprep.subr.mxu0 0.0
      %335 = vmatpush1.msra.mxu0 0.0
      %336 = vmatprep.subr.mxu0 0.0
      %337 = vmatpush1.msra.mxu0 0.0
      %338 = vmatprep.subr.mxu0 0.0
      %339 = vmatpush1.msra.mxu0 0.0
      %340 = vmatprep.subr.mxu0 0.0
      %341 = vmatpush1.msra.mxu0 0.0
      %342 = vmatprep.subr.mxu0 0.0
      %343 = vmatpush1.msra.mxu0 0.0
      %344 = vmatprep.subr.mxu0 0.0
      %345 = vmatpush1.msra.mxu0 0.0
      %346 = vmatprep.subr.mxu0 0.0
      %347 = vmatpush1.msra.mxu0 0.0
      %348 = vmatprep.subr.mxu0 0.0
      %349 = vmatpush1.msra.mxu0 %v311
      %350 = vmatprep.subr.mxu0 0.0
      %351 = vmatpush1.msra.mxu0 %v310
      %352 = vmatprep.subr.mxu0 0.0
      %353 = vmatpush1.msra.mxu0 %v309
      %354 = vmatprep.subr.mxu0 0.0
      %355 = vmatpush1.msra.mxu0 %v308
      %356 = vmatprep.subr.mxu0 0.0
      %357 = vmatpush2.msra.mxu0 0.0
      %358 = vmatprep.subr.mxu0 0.0
      %359 = vmatpush2.msra.mxu0 0.0
      %360 = vmatprep.subr.mxu0 0.0
      %361 = vmatpush2.msra.mxu0 0.0
      %362 = vmatprep.subr.mxu0 0.0
      %363 = vmatpush2.msra.mxu0 0.0
      %364 = vmatprep.subr.mxu0 0.0
      %365 = vmatpush2.msra.mxu0 0.0
      %366 = vmatprep.subr.mxu0 0.0
      %367 = vmatpush2.msra.mxu0 0.0
      %368 = vmatprep.subr.mxu0 0.0
      %369 = vmatpush2.msra.mxu0 0.0
      %370 = vmatprep.subr.mxu0 0.0
      %371 = vmatpush2.msra.mxu0 0.0
      %372 = vmatprep.subr.mxu0 0.0
      %373 = vmatpush2.msra.mxu0 0.0
      %374 = vmatprep.subr.mxu0 0.0
      %375 = vmatpush2.msra.mxu0 0.0
      %376 = vmatprep.subr.mxu0 0.0
      %377 = vmatpush2.msra.mxu0 0.0
      %378 = vmatprep.subr.mxu0 0.0
      %379 = vmatpush2.msra.mxu0 0.0
      %380 = vmatprep.subr.mxu0 0.0
      %381 = vmatpush2.msra.mxu0 0.0
      %382 = vmatprep.subr.mxu0 0.0
      %383 = vmatpush2.msra.mxu0 0.0
      %384 = vmatprep.subr.mxu0 0.0
      %385 = vmatpush2.msra.mxu0 0.0
      %386 = vmatprep.subr.mxu0 0.0
      %387 = vmatpush2.msra.mxu0 0.0
      %388 = vmatprep.mubr.f32.mxu0 0.0
      %389 = vmatmul.mubr.f32.gmra.mxu0 %v319
      %v390 = vpop.f32.mrf.mxu0
      %v391 = vadd.f32 %v316, %v390
      %v392 = vpop.f32.mrf.mxu0
      %393 = vmatprep.mubr.f32.mxu0 0.0
      %394 = vmatmul.mubr.f32.gmra.mxu0 %v322
      %v395 = vpop.f32.mrf.mxu0
      %v396 = vadd.f32 %v316, %v395
      %v397 = vpop.f32.mrf.mxu0
      %398 = vdwg.mxu0
      %s399 = scalar_lea.vmem %s2, 32
      %v400 = vld [vmem:[%s399] sm:$0xff]
      %v401 = vld [vmem:[%s399 + $0x8] sm:$0xff]
      %v402 = vld [vmem:[%s399 + $0x10] sm:$0xff]
      %v403 = vld [vmem:[%s399 + $0x18] sm:$0xff]
      %v404 = vld [vmem:[%s3 + $0x1] sm:$0x1]
      %v405 = vlaneseq
      %v406 = vshrl.u32 %v405, 7
      %v407 = vsub.s32 0, %v406
      %v408 = vrot.slane %v404, %v407
      %409 = vmatprep.subr.mxu0 0.0
      %410 = vmatpush1.msra.mxu0 0.0
      %411 = vmatprep.subr.mxu0 0.0
      %412 = vmatpush1.msra.mxu0 0.0
      %413 = vmatprep.subr.mxu0 0.0
      %414 = vmatpush1.msra.mxu0 0.0
      %415 = vmatprep.subr.mxu0 0.0
      %416 = vmatpush1.msra.mxu0 0.0
      %417 = vmatprep.subr.mxu0 0.0
      %418 = vmatpush1.msra.mxu0 0.0
      %419 = vmatprep.subr.mxu0 0.0
      %420 = vmatpush1.msra.mxu0 0.0
      %421 = vmatprep.subr.mxu0 0.0
      %422 = vmatpush1.msra.mxu0 0.0
      %423 = vmatprep.subr.mxu0 0.0
      %424 = vmatpush1.msra.mxu0 0.0
      %425 = vmatprep.subr.mxu0 0.0
      %426 = vmatpush1.msra.mxu0 0.0
      %427 = vmatprep.subr.mxu0 0.0
      %428 = vmatpush1.msra.mxu0 0.0
      %429 = vmatprep.subr.mxu0 0.0
      %430 = vmatpush1.msra.mxu0 0.0
      %431 = vmatprep.subr.mxu0 0.0
      %432 = vmatpush1.msra.mxu0 0.0
      %433 = vmatprep.subr.mxu0 0.0
      %434 = vmatpush1.msra.mxu0 %v403
      %435 = vmatprep.subr.mxu0 0.0
      %436 = vmatpush1.msra.mxu0 %v402
      %437 = vmatprep.subr.mxu0 0.0
      %438 = vmatpush1.msra.mxu0 %v401
      %439 = vmatprep.subr.mxu0 0.0
      %440 = vmatpush1.msra.mxu0 %v400
      %441 = vmatprep.subr.mxu0 0.0
      %442 = vmatpush2.msra.mxu0 0.0
      %443 = vmatprep.subr.mxu0 0.0
      %444 = vmatpush2.msra.mxu0 0.0
      %445 = vmatprep.subr.mxu0 0.0
      %446 = vmatpush2.msra.mxu0 0.0
      %447 = vmatprep.subr.mxu0 0.0
      %448 = vmatpush2.msra.mxu0 0.0
      %449 = vmatprep.subr.mxu0 0.0
      %450 = vmatpush2.msra.mxu0 0.0
      %451 = vmatprep.subr.mxu0 0.0
      %452 = vmatpush2.msra.mxu0 0.0
      %453 = vmatprep.subr.mxu0 0.0
      %454 = vmatpush2.msra.mxu0 0.0
      %455 = vmatprep.subr.mxu0 0.0
      %456 = vmatpush2.msra.mxu0 0.0
      %457 = vmatprep.subr.mxu0 0.0
      %458 = vmatpush2.msra.mxu0 0.0
      %459 = vmatprep.subr.mxu0 0.0
      %460 = vmatpush2.msra.mxu0 0.0
      %461 = vmatprep.subr.mxu0 0.0
      %462 = vmatpush2.msra.mxu0 0.0
      %463 = vmatprep.subr.mxu0 0.0
      %464 = vmatpush2.msra.mxu0 0.0
      %465 = vmatprep.subr.mxu0 0.0
      %466 = vmatpush2.msra.mxu0 0.0
      %467 = vmatprep.subr.mxu0 0.0
      %468 = vmatpush2.msra.mxu0 0.0
      %469 = vmatprep.subr.mxu0 0.0
      %470 = vmatpush2.msra.mxu0 0.0
      %471 = vmatprep.subr.mxu0 0.0
      %472 = vmatpush2.msra.mxu0 0.0
      %473 = vmatprep.mubr.f32.mxu0 0.0
      %474 = vmatmul.mubr.f32.gmra.mxu0 %v319
      %v475 = vpop.f32.mrf.mxu0
      %v476 = vadd.f32 %v408, %v475
      %v477 = vpop.f32.mrf.mxu0
      %478 = vmatprep.mubr.f32.mxu0 0.0
      %479 = vmatmul.mubr.f32.gmra.mxu0 %v322
      %v480 = vpop.f32.mrf.mxu0
      %v481 = vadd.f32 %v408, %v480
      %v482 = vpop.f32.mrf.mxu0
      %483 = vdwg.mxu0
      %s484 = scalar_lea.vmem %s2, 64
      %v485 = vld [vmem:[%s484] sm:$0xff]
      %v486 = vld [vmem:[%s484 + $0x8] sm:$0xff]
      %v487 = vld [vmem:[%s484 + $0x10] sm:$0xff]
      %v488 = vld [vmem:[%s484 + $0x18] sm:$0xff]
      %v489 = vld [vmem:[%s3 + $0x2] sm:$0x1]
      %v490 = vlaneseq
      %v491 = vshrl.u32 %v490, 7
      %v492 = vsub.s32 0, %v491
      %v493 = vrot.slane %v489, %v492
      %494 = vmatprep.subr.mxu0 0.0
      %495 = vmatpush1.msra.mxu0 0.0
      %496 = vmatprep.subr.mxu0 0.0
      %497 = vmatpush1.msra.mxu0 0.0
      %498 = vmatprep.subr.mxu0 0.0
      %499 = vmatpush1.msra.mxu0 0.0
      %500 = vmatprep.subr.mxu0 0.0
      %501 = vmatpush1.msra.mxu0 0.0
      %502 = vmatprep.subr.mxu0 0.0
      %503 = vmatpush1.msra.mxu0 0.0
      %504 = vmatprep.subr.mxu0 0.0
      %505 = vmatpush1.msra.mxu0 0.0
      %506 = vmatprep.subr.mxu0 0.0
      %507 = vmatpush1.msra.mxu0 0.0
      %508 = vmatprep.subr.mxu0 0.0
      %509 = vmatpush1.msra.mxu0 0.0
      %510 = vmatprep.subr.mxu0 0.0
      %511 = vmatpush1.msra.mxu0 0.0
      %512 = vmatprep.subr.mxu0 0.0
      %513 = vmatpush1.msra.mxu0 0.0
      %514 = vmatprep.subr.mxu0 0.0
      %515 = vmatpush1.msra.mxu0 0.0
      %516 = vmatprep.subr.mxu0 0.0
      %517 = vmatpush1.msra.mxu0 0.0
      %518 = vmatprep.subr.mxu0 0.0
      %519 = vmatpush1.msra.mxu0 %v488
      %520 = vmatprep.subr.mxu0 0.0
      %521 = vmatpush1.msra.mxu0 %v487
      %522 = vmatprep.subr.mxu0 0.0
      %523 = vmatpush1.msra.mxu0 %v486
      %524 = vmatprep.subr.mxu0 0.0
      %525 = vmatpush1.msra.mxu0 %v485
      %526 = vmatprep.subr.mxu0 0.0
      %527 = vmatpush2.msra.mxu0 0.0
      %528 = vmatprep.subr.mxu0 0.0
      %529 = vmatpush2.msra.mxu0 0.0
      %530 = vmatprep.subr.mxu0 0.0
      %531 = vmatpush2.msra.mxu0 0.0
      %532 = vmatprep.subr.mxu0 0.0
      %533 = vmatpush2.msra.mxu0 0.0
      %534 = vmatprep.subr.mxu0 0.0
      %535 = vmatpush2.msra.mxu0 0.0
      %536 = vmatprep.subr.mxu0 0.0
      %537 = vmatpush2.msra.mxu0 0.0
      %538 = vmatprep.subr.mxu0 0.0
      %539 = vmatpush2.msra.mxu0 0.0
      %540 = vmatprep.subr.mxu0 0.0
      %541 = vmatpush2.msra.mxu0 0.0
      %542 = vmatprep.subr.mxu0 0.0
      %543 = vmatpush2.msra.mxu0 0.0
      %544 = vmatprep.subr.mxu0 0.0
      %545 = vmatpush2.msra.mxu0 0.0
      %546 = vmatprep.subr.mxu0 0.0
      %547 = vmatpush2.msra.mxu0 0.0
      %548 = vmatprep.subr.mxu0 0.0
      %549 = vmatpush2.msra.mxu0 0.0
      %550 = vmatprep.subr.mxu0 0.0
      %551 = vmatpush2.msra.mxu0 0.0
      %552 = vmatprep.subr.mxu0 0.0
      %553 = vmatpush2.msra.mxu0 0.0
      %554 = vmatprep.subr.mxu0 0.0
      %555 = vmatpush2.msra.mxu0 0.0
      %556 = vmatprep.subr.mxu0 0.0
      %557 = vmatpush2.msra.mxu0 0.0
      %558 = vmatprep.mubr.f32.mxu0 0.0
      %559 = vmatmul.mubr.f32.gmra.mxu0 %v319
      %v560 = vpop.f32.mrf.mxu0
      %v561 = vadd.f32 %v493, %v560
      %v562 = vpop.f32.mrf.mxu0
      %563 = vmatprep.mubr.f32.mxu0 0.0
      %564 = vmatmul.mubr.f32.gmra.mxu0 %v322
      %v565 = vpop.f32.mrf.mxu0
      %v566 = vadd.f32 %v493, %v565
      %v567 = vpop.f32.mrf.mxu0
      %568 = vdwg.mxu0
      %v569 = vmul.f32 %v391, %v300
      %v570 = vmul.f32 %v396, %v300
      %v571 = vmul.f32 %v476, %v300
      %v572 = vmul.f32 %v481, %v300
      %v574 = vsel %vm317, %v569, 0
      %v577 = vsel %vm317, %v570, 0
      %v580 = vsel %vm317, %v571, 0
      %v583 = vsel %vm317, %v572, 0
      %585 = vmatprep.subr.mxu0 0.0
      %586 = vmatpush1.xpose.msra.mxu0 0.0
      %587 = vmatprep.subr.mxu0 0.0
      %588 = vmatpush1.xpose.msra.mxu0 0.0
      %589 = vmatprep.subr.mxu0 0.0
      %590 = vmatpush1.xpose.msra.mxu0 0.0
      %591 = vmatprep.subr.mxu0 0.0
      %592 = vmatpush1.xpose.msra.mxu0 0.0
      %593 = vmatprep.subr.mxu0 0.0
      %594 = vmatpush1.xpose.msra.mxu0 0.0
      %595 = vmatprep.subr.mxu0 0.0
      %596 = vmatpush1.xpose.msra.mxu0 0.0
      %597 = vmatprep.subr.mxu0 0.0
      %598 = vmatpush1.xpose.msra.mxu0 0.0
      %599 = vmatprep.subr.mxu0 0.0
      %600 = vmatpush1.xpose.msra.mxu0 0.0
      %601 = vmatprep.subr.mxu0 0.0
      %602 = vmatpush1.xpose.msra.mxu0 0.0
      %603 = vmatprep.subr.mxu0 0.0
      %604 = vmatpush1.xpose.msra.mxu0 0.0
      %605 = vmatprep.subr.mxu0 0.0
      %606 = vmatpush1.xpose.msra.mxu0 0.0
      %607 = vmatprep.subr.mxu0 0.0
      %608 = vmatpush1.xpose.msra.mxu0 0.0
      %609 = vmatprep.subr.mxu0 0.0
      %610 = vmatpush1.xpose.msra.mxu0 0.0
      %611 = vmatprep.subr.mxu0 0.0
      %612 = vmatpush1.xpose.msra.mxu0 0.0
      %613 = vmatprep.subr.mxu0 0.0
      %614 = vmatpush1.xpose.msra.mxu0 %v583
      %615 = vmatprep.subr.mxu0 0.0
      %616 = vmatpush1.xpose.msra.mxu0 %v580
      %617 = vmatprep.subr.mxu0 0.0
      %618 = vmatpush2.xpose.msra.mxu0 0.0
      %619 = vmatprep.subr.mxu0 0.0
      %620 = vmatpush2.xpose.msra.mxu0 0.0
      %621 = vmatprep.subr.mxu0 0.0
      %622 = vmatpush2.xpose.msra.mxu0 0.0
      %623 = vmatprep.subr.mxu0 0.0
      %624 = vmatpush2.xpose.msra.mxu0 0.0
      %625 = vmatprep.subr.mxu0 0.0
      %626 = vmatpush2.xpose.msra.mxu0 0.0
      %627 = vmatprep.subr.mxu0 0.0
      %628 = vmatpush2.xpose.msra.mxu0 0.0
      %629 = vmatprep.subr.mxu0 0.0
      %630 = vmatpush2.xpose.msra.mxu0 0.0
      %631 = vmatprep.subr.mxu0 0.0
      %632 = vmatpush2.xpose.msra.mxu0 0.0
      %633 = vmatprep.subr.mxu0 0.0
      %634 = vmatpush2.xpose.msra.mxu0 0.0
      %635 = vmatprep.subr.mxu0 0.0
      %636 = vmatpush2.xpose.msra.mxu0 0.0
      %637 = vmatprep.subr.mxu0 0.0
      %638 = vmatpush2.xpose.msra.mxu0 0.0
      %639 = vmatprep.subr.mxu0 0.0
      %640 = vmatpush2.xpose.msra.mxu0 0.0
      %641 = vmatprep.subr.mxu0 0.0
      %642 = vmatpush2.xpose.msra.mxu0 0.0
      %643 = vmatprep.subr.mxu0 0.0
      %644 = vmatpush2.xpose.msra.mxu0 0.0
      %645 = vmatprep.subr.mxu0 0.0
      %646 = vmatpush2.xpose.msra.mxu0 0.0
      %647 = vmatprep.subr.mxu0 0.0
      %648 = vmatpush2.xpose.msra.mxu0 0.0
      %649 = vmatprep.mubr.f32.mxu0 0.0
      %650 = vmatmul.mubr.f32.gmra.mxu0 %v574
      %v651 = vpop.f32.mrf.mxu0
      %v652 = vadd.f32 0.0, %v651
      %v653 = vpop.f32.mrf.mxu0
      %654 = vmatprep.mubr.f32.mxu0 0.0
      %655 = vmatmul.mubr.f32.gmra.mxu0 %v577
      %v656 = vpop.f32.mrf.mxu0
      %v657 = vadd.f32 0.0, %v656
      %v658 = vpop.f32.mrf.mxu0
      %659 = vdwg.mxu0
      %v660 = vmul.f32 %v652, 0.25
      %v661 = vmul.f32 %v657, 0.25
      %v662 = vadd.f32 %v660, %v294
      %v663 = vadd.f32 %v661, %v295
      %vm664 = vcmask 130048
      %v665 = vsel %vm664, %v662, -inf
      %666 = vmax.xlane.f32.xlu0 %v665
      %v667 = vpop.xlane.xlu0 %666
      %v668 = vsel %vm664, %v663, -inf
      %669 = vmax.xlane.f32.xlu0 %v668
      %v670 = vpop.xlane.xlu0 %669
      %v671 = vsub.f32 %v662, %v667
      %v672 = vsub.f32 %v663, %v670
      %v673 = vmul.f32 %v671, 1.442695
      %v674 = vpow.pop %v673
      %v675 = vmul.f32 %v672, 1.442695
      %v676 = vpow.pop %v675
      %v677 = vsel %vm664, %v674, 0.0
      %678 = vadd.xlane.f32.xlu0 %v677
      %v679 = vpop.xlane.xlu0 %678
      %v680 = vsel %vm664, %v676, 0.0
      %681 = vadd.xlane.f32.xlu0 %v680
      %v682 = vpop.xlane.xlu0 %681
      %v683 = vrcp.pop %v679
      %v684 = vrcp.pop %v682
      %v685 = vmul.f32 %v674, %v683
      %v686 = vmul.f32 %v676, %v684
      %v687 = vmul.f32 %v561, %v300
      %v688 = vmul.f32 %v566, %v300
      %v689 = vmul.f32 %v391, %v305
      %v690 = vmul.f32 %v396, %v305
      %v691 = vmul.f32 %v476, %v305
      %v692 = vmul.f32 %v481, %v305
      %v694 = vsel %vm317, %v689, 0
      %v697 = vsel %vm317, %v690, 0
      %v700 = vsel %vm317, %v691, 0
      %v703 = vsel %vm317, %v692, 0
      %705 = vmatprep.subr.mxu0 0.0
      %706 = vmatpush1.xpose.msra.mxu0 0.0
      %707 = vmatprep.subr.mxu0 0.0
      %708 = vmatpush1.xpose.msra.mxu0 0.0
      %709 = vmatprep.subr.mxu0 0.0
      %710 = vmatpush1.xpose.msra.mxu0 0.0
      %711 = vmatprep.subr.mxu0 0.0
      %712 = vmatpush1.xpose.msra.mxu0 0.0
      %713 = vmatprep.subr.mxu0 0.0
      %714 = vmatpush1.xpose.msra.mxu0 0.0
      %715 = vmatprep.subr.mxu0 0.0
      %716 = vmatpush1.xpose.msra.mxu0 0.0
      %717 = vmatprep.subr.mxu0 0.0
      %718 = vmatpush1.xpose.msra.mxu0 0.0
      %719 = vmatprep.subr.mxu0 0.0
      %720 = vmatpush1.xpose.msra.mxu0 0.0
      %721 = vmatprep.subr.mxu0 0.0
      %722 = vmatpush1.xpose.msra.mxu0 0.0
      %723 = vmatprep.subr.mxu0 0.0
      %724 = vmatpush1.xpose.msra.mxu0 0.0
      %725 = vmatprep.subr.mxu0 0.0
      %726 = vmatpush1.xpose.msra.mxu0 0.0
      %727 = vmatprep.subr.mxu0 0.0
      %728 = vmatpush1.xpose.msra.mxu0 0.0
      %729 = vmatprep.subr.mxu0 0.0
      %730 = vmatpush1.xpose.msra.mxu0 0.0
      %731 = vmatprep.subr.mxu0 0.0
      %732 = vmatpush1.xpose.msra.mxu0 0.0
      %733 = vmatprep.subr.mxu0 0.0
      %734 = vmatpush1.xpose.msra.mxu0 %v703
      %735 = vmatprep.subr.mxu0 0.0
      %736 = vmatpush1.xpose.msra.mxu0 %v700
      %737 = vmatprep.subr.mxu0 0.0
      %738 = vmatpush2.xpose.msra.mxu0 0.0
      %739 = vmatprep.subr.mxu0 0.0
      %740 = vmatpush2.xpose.msra.mxu0 0.0
      %741 = vmatprep.subr.mxu0 0.0
      %742 = vmatpush2.xpose.msra.mxu0 0.0
      %743 = vmatprep.subr.mxu0 0.0
      %744 = vmatpush2.xpose.msra.mxu0 0.0
      %745 = vmatprep.subr.mxu0 0.0
      %746 = vmatpush2.xpose.msra.mxu0 0.0
      %747 = vmatprep.subr.mxu0 0.0
      %748 = vmatpush2.xpose.msra.mxu0 0.0
      %749 = vmatprep.subr.mxu0 0.0
      %750 = vmatpush2.xpose.msra.mxu0 0.0
      %751 = vmatprep.subr.mxu0 0.0
      %752 = vmatpush2.xpose.msra.mxu0 0.0
      %753 = vmatprep.subr.mxu0 0.0
      %754 = vmatpush2.xpose.msra.mxu0 0.0
      %755 = vmatprep.subr.mxu0 0.0
      %756 = vmatpush2.xpose.msra.mxu0 0.0
      %757 = vmatprep.subr.mxu0 0.0
      %758 = vmatpush2.xpose.msra.mxu0 0.0
      %759 = vmatprep.subr.mxu0 0.0
      %760 = vmatpush2.xpose.msra.mxu0 0.0
      %761 = vmatprep.subr.mxu0 0.0
      %762 = vmatpush2.xpose.msra.mxu0 0.0
      %763 = vmatprep.subr.mxu0 0.0
      %764 = vmatpush2.xpose.msra.mxu0 0.0
      %765 = vmatprep.subr.mxu0 0.0
      %766 = vmatpush2.xpose.msra.mxu0 0.0
      %767 = vmatprep.subr.mxu0 0.0
      %768 = vmatpush2.xpose.msra.mxu0 0.0
      %769 = vmatprep.mubr.f32.mxu0 0.0
      %770 = vmatmul.mubr.f32.gmra.mxu0 %v694
      %v771 = vpop.f32.mrf.mxu0
      %v772 = vadd.f32 0.0, %v771
      %v773 = vpop.f32.mrf.mxu0
      %774 = vmatprep.mubr.f32.mxu0 0.0
      %775 = vmatmul.mubr.f32.gmra.mxu0 %v697
      %v776 = vpop.f32.mrf.mxu0
      %v777 = vadd.f32 0.0, %v776
      %v778 = vpop.f32.mrf.mxu0
      %779 = vdwg.mxu0
      %v780 = vmul.f32 %v772, 0.25
      %v781 = vmul.f32 %v777, 0.25
      %v782 = vadd.f32 %v780, %v294
      %v783 = vadd.f32 %v781, %v295
      %v784 = vsel %vm664, %v782, -inf
      %785 = vmax.xlane.f32.xlu0 %v784
      %v786 = vpop.xlane.xlu0 %785
      %v787 = vsel %vm664, %v783, -inf
      %788 = vmax.xlane.f32.xlu0 %v787
      %v789 = vpop.xlane.xlu0 %788
      %v790 = vsub.f32 %v782, %v786
      %v791 = vsub.f32 %v783, %v789
      %v792 = vmul.f32 %v790, 1.442695
      %v793 = vpow.pop %v792
      %v794 = vmul.f32 %v791, 1.442695
      %v795 = vpow.pop %v794
      %v796 = vsel %vm664, %v793, 0.0
      %797 = vadd.xlane.f32.xlu0 %v796
      %v798 = vpop.xlane.xlu0 %797
      %v799 = vsel %vm664, %v795, 0.0
      %800 = vadd.xlane.f32.xlu0 %v799
      %v801 = vpop.xlane.xlu0 %800
      %v802 = vrcp.pop %v798
      %v803 = vrcp.pop %v801
      %v804 = vmul.f32 %v793, %v802
      %v805 = vmul.f32 %v795, %v803
      %v806 = vmul.f32 %v561, %v305
      %v807 = vmul.f32 %v566, %v305
      %v809 = vsel %vm664, %v804, 0
      %v812 = vsel %vm664, %v805, 0
      %814 = vmatprep.subr.mxu0 0.0
      %815 = vmatpush1.msra.mxu0 0.0
      %816 = vmatprep.subr.mxu0 0.0
      %817 = vmatpush1.msra.mxu0 0.0
      %818 = vmatprep.subr.mxu0 0.0
      %819 = vmatpush1.msra.mxu0 0.0
      %820 = vmatprep.subr.mxu0 0.0
      %821 = vmatpush1.msra.mxu0 0.0
      %822 = vmatprep.subr.mxu0 0.0
      %823 = vmatpush1.msra.mxu0 0.0
      %824 = vmatprep.subr.mxu0 0.0
      %825 = vmatpush1.msra.mxu0 0.0
      %826 = vmatprep.subr.mxu0 0.0
      %827 = vmatpush1.msra.mxu0 0.0
      %828 = vmatprep.subr.mxu0 0.0
      %829 = vmatpush1.msra.mxu0 0.0
      %830 = vmatprep.subr.mxu0 0.0
      %831 = vmatpush1.msra.mxu0 0.0
      %832 = vmatprep.subr.mxu0 0.0
      %833 = vmatpush1.msra.mxu0 0.0
      %834 = vmatprep.subr.mxu0 0.0
      %835 = vmatpush1.msra.mxu0 0.0
      %836 = vmatprep.subr.mxu0 0.0
      %837 = vmatpush1.msra.mxu0 0.0
      %838 = vmatprep.subr.mxu0 0.0
      %839 = vmatpush1.msra.mxu0 0.0
      %840 = vmatprep.subr.mxu0 0.0
      %841 = vmatpush1.msra.mxu0 0.0
      %842 = vmatprep.subr.mxu0 0.0
      %843 = vmatpush1.msra.mxu0 %v807
      %844 = vmatprep.subr.mxu0 0.0
      %845 = vmatpush1.msra.mxu0 %v806
      %846 = vmatprep.subr.mxu0 0.0
      %847 = vmatpush2.msra.mxu0 0.0
      %848 = vmatprep.subr.mxu0 0.0
      %849 = vmatpush2.msra.mxu0 0.0
      %850 = vmatprep.subr.mxu0 0.0
      %851 = vmatpush2.msra.mxu0 0.0
      %852 = vmatprep.subr.mxu0 0.0
      %853 = vmatpush2.msra.mxu0 0.0
      %854 = vmatprep.subr.mxu0 0.0
      %855 = vmatpush2.msra.mxu0 0.0
      %856 = vmatprep.subr.mxu0 0.0
      %857 = vmatpush2.msra.mxu0 0.0
      %858 = vmatprep.subr.mxu0 0.0
      %859 = vmatpush2.msra.mxu0 0.0
      %860 = vmatprep.subr.mxu0 0.0
      %861 = vmatpush2.msra.mxu0 0.0
      %862 = vmatprep.subr.mxu0 0.0
      %863 = vmatpush2.msra.mxu0 0.0
      %864 = vmatprep.subr.mxu0 0.0
      %865 = vmatpush2.msra.mxu0 0.0
      %866 = vmatprep.subr.mxu0 0.0
      %867 = vmatpush2.msra.mxu0 0.0
      %868 = vmatprep.subr.mxu0 0.0
      %869 = vmatpush2.msra.mxu0 0.0
      %870 = vmatprep.subr.mxu0 0.0
      %871 = vmatpush2.msra.mxu0 0.0
      %872 = vmatprep.subr.mxu0 0.0
      %873 = vmatpush2.msra.mxu0 0.0
      %874 = vmatprep.subr.mxu0 0.0
      %875 = vmatpush2.msra.mxu0 0.0
      %876 = vmatprep.subr.mxu0 0.0
      %877 = vmatpush2.msra.mxu0 0.0
      %878 = vmatprep.mubr.f32.mxu0 0.0
      %879 = vmatmul.mubr.f32.gmra.mxu0 %v809
      %v880 = vpop.f32.mrf.mxu0
      %v881 = vadd.f32 0.0, %v880
      %v882 = vpop.f32.mrf.mxu0
      %883 = vmatprep.mubr.f32.mxu0 0.0
      %884 = vmatmul.mubr.f32.gmra.mxu0 %v812
      %v885 = vpop.f32.mrf.mxu0
      %v886 = vadd.f32 0.0, %v885
      %v887 = vpop.f32.mrf.mxu0
      %888 = vdwg.mxu0
      %v890 = vsel %vm664, %v685, 0
      %v893 = vsel %vm664, %v686, 0
      %895 = vmatprep.subr.mxu0 0.0
      %896 = vmatpush1.msra.mxu0 0.0
      %897 = vmatprep.subr.mxu0 0.0
      %898 = vmatpush1.msra.mxu0 0.0
      %899 = vmatprep.subr.mxu0 0.0
      %900 = vmatpush1.msra.mxu0 0.0
      %901 = vmatprep.subr.mxu0 0.0
      %902 = vmatpush1.msra.mxu0 0.0
      %903 = vmatprep.subr.mxu0 0.0
      %904 = vmatpush1.msra.mxu0 0.0
      %905 = vmatprep.subr.mxu0 0.0
      %906 = vmatpush1.msra.mxu0 0.0
      %907 = vmatprep.subr.mxu0 0.0
      %908 = vmatpush1.msra.mxu0 0.0
      %909 = vmatprep.subr.mxu0 0.0
      %910 = vmatpush1.msra.mxu0 0.0
      %911 = vmatprep.subr.mxu0 0.0
      %912 = vmatpush1.msra.mxu0 0.0
      %913 = vmatprep.subr.mxu0 0.0
      %914 = vmatpush1.msra.mxu0 0.0
      %915 = vmatprep.subr.mxu0 0.0
      %916 = vmatpush1.msra.mxu0 0.0
      %917 = vmatprep.subr.mxu0 0.0
      %918 = vmatpush1.msra.mxu0 0.0
      %919 = vmatprep.subr.mxu0 0.0
      %920 = vmatpush1.msra.mxu0 0.0
      %921 = vmatprep.subr.mxu0 0.0
      %922 = vmatpush1.msra.mxu0 0.0
      %923 = vmatprep.subr.mxu0 0.0
      %924 = vmatpush1.msra.mxu0 %v688
      %925 = vmatprep.subr.mxu0 0.0
      %926 = vmatpush1.msra.mxu0 %v687
      %927 = vmatprep.subr.mxu0 0.0
      %928 = vmatpush2.msra.mxu0 0.0
      %929 = vmatprep.subr.mxu0 0.0
      %930 = vmatpush2.msra.mxu0 0.0
      %931 = vmatprep.subr.mxu0 0.0
      %932 = vmatpush2.msra.mxu0 0.0
      %933 = vmatprep.subr.mxu0 0.0
      %934 = vmatpush2.msra.mxu0 0.0
      %935 = vmatprep.subr.mxu0 0.0
      %936 = vmatpush2.msra.mxu0 0.0
      %937 = vmatprep.subr.mxu0 0.0
      %938 = vmatpush2.msra.mxu0 0.0
      %939 = vmatprep.subr.mxu0 0.0
      %940 = vmatpush2.msra.mxu0 0.0
      %941 = vmatprep.subr.mxu0 0.0
      %942 = vmatpush2.msra.mxu0 0.0
      %943 = vmatprep.subr.mxu0 0.0
      %944 = vmatpush2.msra.mxu0 0.0
      %945 = vmatprep.subr.mxu0 0.0
      %946 = vmatpush2.msra.mxu0 0.0
      %947 = vmatprep.subr.mxu0 0.0
      %948 = vmatpush2.msra.mxu0 0.0
      %949 = vmatprep.subr.mxu0 0.0
      %950 = vmatpush2.msra.mxu0 0.0
      %951 = vmatprep.subr.mxu0 0.0
      %952 = vmatpush2.msra.mxu0 0.0
      %953 = vmatprep.subr.mxu0 0.0
      %954 = vmatpush2.msra.mxu0 0.0
      %955 = vmatprep.subr.mxu0 0.0
      %956 = vmatpush2.msra.mxu0 0.0
      %957 = vmatprep.subr.mxu0 0.0
      %958 = vmatpush2.msra.mxu0 0.0
      %959 = vmatprep.mubr.f32.mxu0 0.0
      %960 = vmatmul.mubr.f32.gmra.mxu0 %v890
      %v961 = vpop.f32.mrf.mxu0
      %v962 = vadd.f32 %v881, %v961
      %v963 = vpop.f32.mrf.mxu0
      %964 = vmatprep.mubr.f32.mxu0 0.0
      %965 = vmatmul.mubr.f32.gmra.mxu0 %v893
      %v966 = vpop.f32.mrf.mxu0
      %v967 = vadd.f32 %v886, %v966
      %v968 = vpop.f32.mrf.mxu0
      %969 = vdwg.mxu0
      %s970 = scalar_lea.vmem %s2, 96
      %v971 = vld [vmem:[%s970] sm:$0xff]
      %v972 = vld [vmem:[%s970 + $0x8] sm:$0xff]
      %v973 = vld [vmem:[%s970 + $0x10] sm:$0xff]
      %v974 = vld [vmem:[%s970 + $0x18] sm:$0xff]
      %v975 = vld [vmem:[%s3 + $0x3] sm:$0x1]
      %v976 = vlaneseq
      %v977 = vshrl.u32 %v976, 7
      %v978 = vsub.s32 0, %v977
      %v979 = vrot.slane %v975, %v978
      %v981 = vsel %vm317, %v962, 0
      %v984 = vsel %vm317, %v967, 0
      %986 = vmatprep.subr.mxu0 0.0
      %987 = vmatpush1.msra.mxu0 0.0
      %988 = vmatprep.subr.mxu0 0.0
      %989 = vmatpush1.msra.mxu0 0.0
      %990 = vmatprep.subr.mxu0 0.0
      %991 = vmatpush1.msra.mxu0 0.0
      %992 = vmatprep.subr.mxu0 0.0
      %993 = vmatpush1.msra.mxu0 0.0
      %994 = vmatprep.subr.mxu0 0.0
      %995 = vmatpush1.msra.mxu0 0.0
      %996 = vmatprep.subr.mxu0 0.0
      %997 = vmatpush1.msra.mxu0 0.0
      %998 = vmatprep.subr.mxu0 0.0
      %999 = vmatpush1.msra.mxu0 0.0
      %1000 = vmatprep.subr.mxu0 0.0
      %1001 = vmatpush1.msra.mxu0 0.0
      %1002 = vmatprep.subr.mxu0 0.0
      %1003 = vmatpush1.msra.mxu0 0.0
      %1004 = vmatprep.subr.mxu0 0.0
      %1005 = vmatpush1.msra.mxu0 0.0
      %1006 = vmatprep.subr.mxu0 0.0
      %1007 = vmatpush1.msra.mxu0 0.0
      %1008 = vmatprep.subr.mxu0 0.0
      %1009 = vmatpush1.msra.mxu0 0.0
      %1010 = vmatprep.subr.mxu0 0.0
      %1011 = vmatpush1.msra.mxu0 %v974
      %1012 = vmatprep.subr.mxu0 0.0
      %1013 = vmatpush1.msra.mxu0 %v973
      %1014 = vmatprep.subr.mxu0 0.0
      %1015 = vmatpush1.msra.mxu0 %v972
      %1016 = vmatprep.subr.mxu0 0.0
      %1017 = vmatpush1.msra.mxu0 %v971
      %1018 = vmatprep.subr.mxu0 0.0
      %1019 = vmatpush2.msra.mxu0 0.0
      %1020 = vmatprep.subr.mxu0 0.0
      %1021 = vmatpush2.msra.mxu0 0.0
      %1022 = vmatprep.subr.mxu0 0.0
      %1023 = vmatpush2.msra.mxu0 0.0
      %1024 = vmatprep.subr.mxu0 0.0
      %1025 = vmatpush2.msra.mxu0 0.0
      %1026 = vmatprep.subr.mxu0 0.0
      %1027 = vmatpush2.msra.mxu0 0.0
      %1028 = vmatprep.subr.mxu0 0.0
      %1029 = vmatpush2.msra.mxu0 0.0
      %1030 = vmatprep.subr.mxu0 0.0
      %1031 = vmatpush2.msra.mxu0 0.0
      %1032 = vmatprep.subr.mxu0 0.0
      %1033 = vmatpush2.msra.mxu0 0.0
      %1034 = vmatprep.subr.mxu0 0.0
      %1035 = vmatpush2.msra.mxu0 0.0
      %1036 = vmatprep.subr.mxu0 0.0
      %1037 = vmatpush2.msra.mxu0 0.0
      %1038 = vmatprep.subr.mxu0 0.0
      %1039 = vmatpush2.msra.mxu0 0.0
      %1040 = vmatprep.subr.mxu0 0.0
      %1041 = vmatpush2.msra.mxu0 0.0
      %1042 = vmatprep.subr.mxu0 0.0
      %1043 = vmatpush2.msra.mxu0 0.0
      %1044 = vmatprep.subr.mxu0 0.0
      %1045 = vmatpush2.msra.mxu0 0.0
      %1046 = vmatprep.subr.mxu0 0.0
      %1047 = vmatpush2.msra.mxu0 0.0
      %1048 = vmatprep.subr.mxu0 0.0
      %1049 = vmatpush2.msra.mxu0 0.0
      %1050 = vmatprep.mubr.f32.mxu0 0.0
      %1051 = vmatmul.mubr.f32.gmra.mxu0 %v981
      %v1052 = vpop.f32.mrf.mxu0
      %v1053 = vadd.f32 %v979, %v1052
      %v1054 = vpop.f32.mrf.mxu0
      %1055 = vmatprep.mubr.f32.mxu0 0.0
      %1056 = vmatmul.mubr.f32.gmra.mxu0 %v984
      %v1057 = vpop.f32.mrf.mxu0
      %v1058 = vadd.f32 %v979, %v1057
      %v1059 = vpop.f32.mrf.mxu0
      %1060 = vdwg.mxu0
      %v1061 = vadd.f32 %v306, %v1053
      %v1062 = vadd.f32 %v307, %v1058
      %v1063 = vld [vmem:[%s3 + $0x4] sm:$0x1]
      %v1064 = vld [vmem:[%s3 + $0x5] sm:$0x1]
      %v1065 = vsel %vm317, %v1061, 0.0
      %1066 = vadd.xlane.f32.xlu0 %v1065
      %v1067 = vpop.xlane.xlu0 %1066
      %v1068 = vsel %vm317, %v1062, 0.0
      %1069 = vadd.xlane.f32.xlu0 %v1068
      %v1070 = vpop.xlane.xlu0 %1069
      %v1071 = vrcp.pop 32.0
      %v1072 = vmul.f32 %v1067, %v1071
      %v1073 = vmul.f32 %v1070, %v1071
      %v1074 = vsub.f32 %v1061, %v1072
      %v1075 = vsub.f32 %v1062, %v1073
      %v1076 = vmul.f32 %v1074, %v1074
      %v1077 = vmul.f32 %v1075, %v1075
      %v1078 = vsel %vm317, %v1076, 0.0
      %1079 = vadd.xlane.f32.xlu0 %v1078
      %v1080 = vpop.xlane.xlu0 %1079
      %v1081 = vsel %vm317, %v1077, 0.0
      %1082 = vadd.xlane.f32.xlu0 %v1081
      %v1083 = vpop.xlane.xlu0 %1082
      %v1084 = vmul.f32 %v1080, %v1071
      %v1085 = vmul.f32 %v1083, %v1071
      %v1086 = vadd.f32 %v1084, 1e-05
      %v1087 = vadd.f32 %v1085, 1e-05
      %v1088 = vrsqrt.pop %v1086
      %v1089 = vrsqrt.pop %v1087
      %v1090 = vmul.f32 %v1074, %v1088
      %v1091 = vmul.f32 %v1075, %v1089
      %v1092 = vlaneseq
      %v1093 = vshrl.u32 %v1092, 7
      %v1094 = vsub.s32 0, %v1093
      %v1095 = vrot.slane %v1063, %v1094
      %v1096 = vmul.f32 %v1090, %v1095
      %v1097 = vmul.f32 %v1091, %v1095
      %v1098 = vlaneseq
      %v1099 = vshrl.u32 %v1098, 7
      %v1100 = vsub.s32 0, %v1099
      %v1101 = vrot.slane %v1064, %v1100
      %v1102 = vadd.f32 %v1096, %v1101
      %v1103 = vadd.f32 %v1097, %v1101
      %s1104 = scalar_lea.vmem %s2, 128
      %v1105 = vld [vmem:[%s1104] sm:$0xff]
      %v1106 = vld [vmem:[%s1104 + $0x8] sm:$0xff]
      %v1107 = vld [vmem:[%s1104 + $0x10] sm:$0xff]
      %v1108 = vld [vmem:[%s1104 + $0x18] sm:$0xff]
      %v1109 = vld [vmem:[%s3 + $0x6] sm:$0x1]
      %v1110 = vlaneseq
      %v1111 = vshrl.u32 %v1110, 7
      %v1112 = vsub.s32 0, %v1111
      %v1113 = vrot.slane %v1109, %v1112
      %v1115 = vsel %vm317, %v1102, 0
      %v1118 = vsel %vm317, %v1103, 0
      %1120 = vmatprep.subr.mxu0 0.0
      %1121 = vmatpush1.msra.mxu0 0.0
      %1122 = vmatprep.subr.mxu0 0.0
      %1123 = vmatpush1.msra.mxu0 0.0
      %1124 = vmatprep.subr.mxu0 0.0
      %1125 = vmatpush1.msra.mxu0 0.0
      %1126 = vmatprep.subr.mxu0 0.0
      %1127 = vmatpush1.msra.mxu0 0.0
      %1128 = vmatprep.subr.mxu0 0.0
      %1129 = vmatpush1.msra.mxu0 0.0
      %1130 = vmatprep.subr.mxu0 0.0
      %1131 = vmatpush1.msra.mxu0 0.0
      %1132 = vmatprep.subr.mxu0 0.0
      %1133 = vmatpush1.msra.mxu0 0.0
      %1134 = vmatprep.subr.mxu0 0.0
      %1135 = vmatpush1.msra.mxu0 0.0
      %1136 = vmatprep.subr.mxu0 0.0
      %1137 = vmatpush1.msra.mxu0 0.0
      %1138 = vmatprep.subr.mxu0 0.0
      %1139 = vmatpush1.msra.mxu0 0.0
      %1140 = vmatprep.subr.mxu0 0.0
      %1141 = vmatpush1.msra.mxu0 0.0
      %1142 = vmatprep.subr.mxu0 0.0
      %1143 = vmatpush1.msra.mxu0 0.0
      %1144 = vmatprep.subr.mxu0 0.0
      %1145 = vmatpush1.msra.mxu0 %v1108
      %1146 = vmatprep.subr.mxu0 0.0
      %1147 = vmatpush1.msra.mxu0 %v1107
      %1148 = vmatprep.subr.mxu0 0.0
      %1149 = vmatpush1.msra.mxu0 %v1106
      %1150 = vmatprep.subr.mxu0 0.0
      %1151 = vmatpush1.msra.mxu0 %v1105
      %1152 = vmatprep.subr.mxu0 0.0
      %1153 = vmatpush2.msra.mxu0 0.0
      %1154 = vmatprep.subr.mxu0 0.0
      %1155 = vmatpush2.msra.mxu0 0.0
      %1156 = vmatprep.subr.mxu0 0.0
      %1157 = vmatpush2.msra.mxu0 0.0
      %1158 = vmatprep.subr.mxu0 0.0
      %1159 = vmatpush2.msra.mxu0 0.0
      %1160 = vmatprep.subr.mxu0 0.0
      %1161 = vmatpush2.msra.mxu0 0.0
      %1162 = vmatprep.subr.mxu0 0.0
      %1163 = vmatpush2.msra.mxu0 0.0
      %1164 = vmatprep.subr.mxu0 0.0
      %1165 = vmatpush2.msra.mxu0 0.0
      %1166 = vmatprep.subr.mxu0 0.0
      %1167 = vmatpush2.msra.mxu0 0.0
      %1168 = vmatprep.subr.mxu0 0.0
      %1169 = vmatpush2.msra.mxu0 0.0
      %1170 = vmatprep.subr.mxu0 0.0
      %1171 = vmatpush2.msra.mxu0 0.0
      %1172 = vmatprep.subr.mxu0 0.0
      %1173 = vmatpush2.msra.mxu0 0.0
      %1174 = vmatprep.subr.mxu0 0.0
      %1175 = vmatpush2.msra.mxu0 0.0
      %1176 = vmatprep.subr.mxu0 0.0
      %1177 = vmatpush2.msra.mxu0 0.0
      %1178 = vmatprep.subr.mxu0 0.0
      %1179 = vmatpush2.msra.mxu0 0.0
      %1180 = vmatprep.subr.mxu0 0.0
      %1181 = vmatpush2.msra.mxu0 0.0
      %1182 = vmatprep.subr.mxu0 0.0
      %1183 = vmatpush2.msra.mxu0 0.0
      %1184 = vmatprep.mubr.f32.mxu0 0.0
      %1185 = vmatmul.mubr.f32.gmra.mxu0 %v1115
      %v1186 = vpop.f32.mrf.mxu0
      %v1187 = vadd.f32 %v1113, %v1186
      %v1188 = vpop.f32.mrf.mxu0
      %1189 = vmatprep.mubr.f32.mxu0 0.0
      %1190 = vmatmul.mubr.f32.gmra.mxu0 %v1118
      %v1191 = vpop.f32.mrf.mxu0
      %v1192 = vadd.f32 %v1113, %v1191
      %v1193 = vpop.f32.mrf.mxu0
      %1194 = vdwg.mxu0
      %v1195 = vmul.f32 %v1187, 0.5
      %v1196 = vmul.f32 %v1192, 0.5
      %v1197 = vmul.f32 %v1187, 0.70710677
      %v1198 = vmul.f32 %v1192, 0.70710677
      %vm1199 = vcmp.lt.f32.partialorder %v1197, 0.0
      %vm1200 = vcmp.lt.f32.partialorder %v1198, 0.0
      %v1201 = vsel %vm1199, -1.0, 1.0
      %v1202 = vsel %vm1200, -1.0, 1.0
      %v1203 = vand.u32 2147483647, %v1197
      %v1204 = vand.u32 2147483647, %v1198
      %v1205 = vmul.f32 %v1203, 0.3275911
      %v1206 = vmul.f32 %v1204, 0.3275911
      %v1207 = vadd.f32 %v1205, 1.0
      %v1208 = vadd.f32 %v1206, 1.0
      %v1209 = vrcp.pop %v1207
      %v1210 = vmul.f32 1.0, %v1209
      %v1211 = vrcp.pop %v1208
      %v1212 = vmul.f32 1.0, %v1211
      %v1213 = vmul.f32 %v1210, 1.0614054
      %v1214 = vmul.f32 %v1212, 1.0614054
      %v1215 = vadd.f32 %v1213, -1.4531521
      %v1216 = vadd.f32 %v1214, -1.4531521
      %v1217 = vmul.f32 %v1215, %v1210
      %v1218 = vmul.f32 %v1216, %v1212
      %v1219 = vadd.f32 %v1217, 1.4214138
      %v1220 = vadd.f32 %v1218, 1.4214138
      %v1221 = vmul.f32 %v1219, %v1210
      %v1222 = vmul.f32 %v1220, %v1212
      %v1223 = vadd.f32 %v1221, -0.28449672
      %v1224 = vadd.f32 %v1222, -0.28449672
      %v1225 = vmul.f32 %v1223, %v1210
      %v1226 = vmul.f32 %v1224, %v1212
      %v1227 = vadd.f32 %v1225, 0.2548296
      %v1228 = vadd.f32 %v1226, 0.2548296
      %v1229 = vmul.f32 %v1227, %v1210
      %v1230 = vmul.f32 %v1228, %v1212
      %v1231 = vsub.f32 0.0, %v1203
      %v1232 = vsub.f32 0.0, %v1204
      %v1233 = vmul.f32 %v1231, %v1203
      %v1234 = vmul.f32 %v1232, %v1204
      %v1235 = vmul.f32 %v1233, 1.442695
      %v1236 = vpow.pop %v1235
      %v1237 = vmul.f32 %v1234, 1.442695
      %v1238 = vpow.pop %v1237
      %v1239 = vmul.f32 %v1229, %v1236
      %v1240 = vmul.f32 %v1230, %v1238
      %v1241 = vsub.f32 1.0, %v1239
      %v1242 = vsub.f32 1.0, %v1240
      %v1243 = vmul.f32 %v1201, %v1241
      %v1244 = vmul.f32 %v1202, %v1242
      %v1245 = vadd.f32 %v1243, 1.0
      %v1246 = vadd.f32 %v1244, 1.0
      %v1247 = vmul.f32 %v1195, %v1245
      %v1248 = vmul.f32 %v1196, %v1246
      %s1249 = scalar_lea.vmem %s2, 160
      %v1250 = vld [vmem:[%s1249] sm:$0xff]
      %v1251 = vld [vmem:[%s1249 + $0x8] sm:$0xff]
      %v1252 = vld [vmem:[%s1249 + $0x10] sm:$0xff]
      %v1253 = vld [vmem:[%s1249 + $0x18] sm:$0xff]
      %v1254 = vld [vmem:[%s3 + $0x7] sm:$0x1]
      %v1255 = vlaneseq
      %v1256 = vshrl.u32 %v1255, 7
      %v1257 = vsub.s32 0, %v1256
      %v1258 = vrot.slane %v1254, %v1257
      %v1260 = vsel %vm317, %v1247, 0
      %v1263 = vsel %vm317, %v1248, 0
      %1265 = vmatprep.subr.mxu0 0.0
      %1266 = vmatpush1.msra.mxu0 0.0
      %1267 = vmatprep.subr.mxu0 0.0
      %1268 = vmatpush1.msra.mxu0 0.0
      %1269 = vmatprep.subr.mxu0 0.0
      %1270 = vmatpush1.msra.mxu0 0.0
      %1271 = vmatprep.subr.mxu0 0.0
      %1272 = vmatpush1.msra.mxu0 0.0
      %1273 = vmatprep.subr.mxu0 0.0
      %1274 = vmatpush1.msra.mxu0 0.0
      %1275 = vmatprep.subr.mxu0 0.0
      %1276 = vmatpush1.msra.mxu0 0.0
      %1277 = vmatprep.subr.mxu0 0.0
      %1278 = vmatpush1.msra.mxu0 0.0
      %1279 = vmatprep.subr.mxu0 0.0
      %1280 = vmatpush1.msra.mxu0 0.0
      %1281 = vmatprep.subr.mxu0 0.0
      %1282 = vmatpush1.msra.mxu0 0.0
      %1283 = vmatprep.subr.mxu0 0.0
      %1284 = vmatpush1.msra.mxu0 0.0
      %1285 = vmatprep.subr.mxu0 0.0
      %1286 = vmatpush1.msra.mxu0 0.0
      %1287 = vmatprep.subr.mxu0 0.0
      %1288 = vmatpush1.msra.mxu0 0.0
      %1289 = vmatprep.subr.mxu0 0.0
      %1290 = vmatpush1.msra.mxu0 %v1253
      %1291 = vmatprep.subr.mxu0 0.0
      %1292 = vmatpush1.msra.mxu0 %v1252
      %1293 = vmatprep.subr.mxu0 0.0
      %1294 = vmatpush1.msra.mxu0 %v1251
      %1295 = vmatprep.subr.mxu0 0.0
      %1296 = vmatpush1.msra.mxu0 %v1250
      %1297 = vmatprep.subr.mxu0 0.0
      %1298 = vmatpush2.msra.mxu0 0.0
      %1299 = vmatprep.subr.mxu0 0.0
      %1300 = vmatpush2.msra.mxu0 0.0
      %1301 = vmatprep.subr.mxu0 0.0
      %1302 = vmatpush2.msra.mxu0 0.0
      %1303 = vmatprep.subr.mxu0 0.0
      %1304 = vmatpush2.msra.mxu0 0.0
      %1305 = vmatprep.subr.mxu0 0.0
      %1306 = vmatpush2.msra.mxu0 0.0
      %1307 = vmatprep.subr.mxu0 0.0
      %1308 = vmatpush2.msra.mxu0 0.0
      %1309 = vmatprep.subr.mxu0 0.0
      %1310 = vmatpush2.msra.mxu0 0.0
      %1311 = vmatprep.subr.mxu0 0.0
      %1312 = vmatpush2.msra.mxu0 0.0
      %1313 = vmatprep.subr.mxu0 0.0
      %1314 = vmatpush2.msra.mxu0 0.0
      %1315 = vmatprep.subr.mxu0 0.0
      %1316 = vmatpush2.msra.mxu0 0.0
      %1317 = vmatprep.subr.mxu0 0.0
      %1318 = vmatpush2.msra.mxu0 0.0
      %1319 = vmatprep.subr.mxu0 0.0
      %1320 = vmatpush2.msra.mxu0 0.0
      %1321 = vmatprep.subr.mxu0 0.0
      %1322 = vmatpush2.msra.mxu0 0.0
      %1323 = vmatprep.subr.mxu0 0.0
      %1324 = vmatpush2.msra.mxu0 0.0
      %1325 = vmatprep.subr.mxu0 0.0
      %1326 = vmatpush2.msra.mxu0 0.0
      %1327 = vmatprep.subr.mxu0 0.0
      %1328 = vmatpush2.msra.mxu0 0.0
      %1329 = vmatprep.mubr.f32.mxu0 0.0
      %1330 = vmatmul.mubr.f32.gmra.mxu0 %v1260
      %v1331 = vpop.f32.mrf.mxu0
      %v1332 = vadd.f32 %v1258, %v1331
      %v1333 = vpop.f32.mrf.mxu0
      %1334 = vmatprep.mubr.f32.mxu0 0.0
      %1335 = vmatmul.mubr.f32.gmra.mxu0 %v1263
      %v1336 = vpop.f32.mrf.mxu0
      %v1337 = vadd.f32 %v1258, %v1336
      %v1338 = vpop.f32.mrf.mxu0
      %1339 = vdwg.mxu0
      %v1340 = vadd.f32 %v1102, %v1332
      %v1341 = vadd.f32 %v1103, %v1337
      %v1342 = vld [vmem:[%s3 + $0x8] sm:$0x1]
      %v1343 = vld [vmem:[%s3 + $0x9] sm:$0x1]
      %v1344 = vsel %vm317, %v1340, 0.0
      %1345 = vadd.xlane.f32.xlu0 %v1344
      %v1346 = vpop.xlane.xlu0 %1345
      %v1347 = vsel %vm317, %v1341, 0.0
      %1348 = vadd.xlane.f32.xlu0 %v1347
      %v1349 = vpop.xlane.xlu0 %1348
      %v1350 = vmul.f32 %v1346, %v1071
      %v1351 = vmul.f32 %v1349, %v1071
      %v1352 = vsub.f32 %v1340, %v1350
      %v1353 = vsub.f32 %v1341, %v1351
      %v1354 = vmul.f32 %v1352, %v1352
      %v1355 = vmul.f32 %v1353, %v1353
      %v1356 = vsel %vm317, %v1354, 0.0
      %1357 = vadd.xlane.f32.xlu0 %v1356
      %v1358 = vpop.xlane.xlu0 %1357
      %v1359 = vsel %vm317, %v1355, 0.0
      %1360 = vadd.xlane.f32.xlu0 %v1359
      %v1361 = vpop.xlane.xlu0 %1360
      %v1362 = vmul.f32 %v1358, %v1071
      %v1363 = vmul.f32 %v1361, %v1071
      %v1364 = vadd.f32 %v1362, 1e-05
      %v1365 = vadd.f32 %v1363, 1e-05
      %v1366 = vrsqrt.pop %v1364
      %v1367 = vrsqrt.pop %v1365
      %v1368 = vmul.f32 %v1352, %v1366
      %v1369 = vmul.f32 %v1353, %v1367
      %v1370 = vlaneseq
      %v1371 = vshrl.u32 %v1370, 7
      %v1372 = vsub.s32 0, %v1371
      %v1373 = vrot.slane %v1342, %v1372
      %v1374 = vmul.f32 %v1368, %v1373
      %v1375 = vmul.f32 %v1369, %v1373
      %v1376 = vlaneseq
      %v1377 = vshrl.u32 %v1376, 7
      %v1378 = vsub.s32 0, %v1377
      %v1379 = vrot.slane %v1343, %v1378
      %v1380 = vadd.f32 %v1374, %v1379
      %v1381 = vadd.f32 %v1375, %v1379
      %s1382 = scalar_lea.vmem %s2, 192
      %v1383 = vld [vmem:[%s1382] sm:$0xff]
      %v1384 = vld [vmem:[%s1382 + $0x8] sm:$0xff]
      %v1385 = vld [vmem:[%s1382 + $0x10] sm:$0xff]
      %v1386 = vld [vmem:[%s1382 + $0x18] sm:$0xff]
      %s1387 = scalar_lea.vmem %s3, 16
      %v1388 = vld [vmem:[%s1387] sm:$0x1]
      %v1389 = vlaneseq
      %v1390 = vshrl.u32 %v1389, 7
      %v1391 = vsub.s32 0, %v1390
      %v1392 = vrot.slane %v1388, %v1391
      %v1394 = vsel %vm317, %v1380, 0
      %v1397 = vsel %vm317, %v1381, 0
      %1399 = vmatprep.subr.mxu0 0.0
      %1400 = vmatpush1.msra.mxu0 0.0
      %1401 = vmatprep.subr.mxu0 0.0
      %1402 = vmatpush1.msra.mxu0 0.0
      %1403 = vmatprep.subr.mxu0 0.0
      %1404 = vmatpush1.msra.mxu0 0.0
      %1405 = vmatprep.subr.mxu0 0.0
      %1406 = vmatpush1.msra.mxu0 0.0
      %1407 = vmatprep.subr.mxu0 0.0
      %1408 = vmatpush1.msra.mxu0 0.0
      %1409 = vmatprep.subr.mxu0 0.0
      %1410 = vmatpush1.msra.mxu0 0.0
      %1411 = vmatprep.subr.mxu0 0.0
      %1412 = vmatpush1.msra.mxu0 0.0
      %1413 = vmatprep.subr.mxu0 0.0
      %1414 = vmatpush1.msra.mxu0 0.0
      %1415 = vmatprep.subr.mxu0 0.0
      %1416 = vmatpush1.msra.mxu0 0.0
      %1417 = vmatprep.subr.mxu0 0.0
      %1418 = vmatpush1.msra.mxu0 0.0
      %1419 = vmatprep.subr.mxu0 0.0
      %1420 = vmatpush1.msra.mxu0 0.0
      %1421 = vmatprep.subr.mxu0 0.0
      %1422 = vmatpush1.msra.mxu0 0.0
      %1423 = vmatprep.subr.mxu0 0.0
      %1424 = vmatpush1.msra.mxu0 %v1386
      %1425 = vmatprep.subr.mxu0 0.0
      %1426 = vmatpush1.msra.mxu0 %v1385
      %1427 = vmatprep.subr.mxu0 0.0
      %1428 = vmatpush1.msra.mxu0 %v1384
      %1429 = vmatprep.subr.mxu0 0.0
      %1430 = vmatpush1.msra.mxu0 %v1383
      %1431 = vmatprep.subr.mxu0 0.0
      %1432 = vmatpush2.msra.mxu0 0.0
      %1433 = vmatprep.subr.mxu0 0.0
      %1434 = vmatpush2.msra.mxu0 0.0
      %1435 = vmatprep.subr.mxu0 0.0
      %1436 = vmatpush2.msra.mxu0 0.0
      %1437 = vmatprep.subr.mxu0 0.0
      %1438 = vmatpush2.msra.mxu0 0.0
      %1439 = vmatprep.subr.mxu0 0.0
      %1440 = vmatpush2.msra.mxu0 0.0
      %1441 = vmatprep.subr.mxu0 0.0
      %1442 = vmatpush2.msra.mxu0 0.0
      %1443 = vmatprep.subr.mxu0 0.0
      %1444 = vmatpush2.msra.mxu0 0.0
      %1445 = vmatprep.subr.mxu0 0.0
      %1446 = vmatpush2.msra.mxu0 0.0
      %1447 = vmatprep.subr.mxu0 0.0
      %1448 = vmatpush2.msra.mxu0 0.0
      %1449 = vmatprep.subr.mxu0 0.0
      %1450 = vmatpush2.msra.mxu0 0.0
      %1451 = vmatprep.subr.mxu0 0.0
      %1452 = vmatpush2.msra.mxu0 0.0
      %1453 = vmatprep.subr.mxu0 0.0
      %1454 = vmatpush2.msra.mxu0 0.0
      %1455 = vmatprep.subr.mxu0 0.0
      %1456 = vmatpush2.msra.mxu0 0.0
      %1457 = vmatprep.subr.mxu0 0.0
      %1458 = vmatpush2.msra.mxu0 0.0
      %1459 = vmatprep.subr.mxu0 0.0
      %1460 = vmatpush2.msra.mxu0 0.0
      %1461 = vmatprep.subr.mxu0 0.0
      %1462 = vmatpush2.msra.mxu0 0.0
      %1463 = vmatprep.mubr.f32.mxu0 0.0
      %1464 = vmatmul.mubr.f32.gmra.mxu0 %v1394
      %v1465 = vpop.f32.mrf.mxu0
      %v1466 = vadd.f32 %v1392, %v1465
      %v1467 = vpop.f32.mrf.mxu0
      %1468 = vmatprep.mubr.f32.mxu0 0.0
      %1469 = vmatmul.mubr.f32.gmra.mxu0 %v1397
      %v1470 = vpop.f32.mrf.mxu0
      %v1471 = vadd.f32 %v1392, %v1470
      %v1472 = vpop.f32.mrf.mxu0
      %1473 = vdwg.mxu0
      %s1474 = scalar_lea.vmem %s2, 224
      %v1475 = vld [vmem:[%s1474] sm:$0xff]
      %v1476 = vld [vmem:[%s1474 + $0x8] sm:$0xff]
      %v1477 = vld [vmem:[%s1474 + $0x10] sm:$0xff]
      %v1478 = vld [vmem:[%s1474 + $0x18] sm:$0xff]
      %v1479 = vld [vmem:[%s1387 + $0x1] sm:$0x1]
      %v1480 = vlaneseq
      %v1481 = vshrl.u32 %v1480, 7
      %v1482 = vsub.s32 0, %v1481
      %v1483 = vrot.slane %v1479, %v1482
      %1484 = vmatprep.subr.mxu0 0.0
      %1485 = vmatpush1.msra.mxu0 0.0
      %1486 = vmatprep.subr.mxu0 0.0
      %1487 = vmatpush1.msra.mxu0 0.0
      %1488 = vmatprep.subr.mxu0 0.0
      %1489 = vmatpush1.msra.mxu0 0.0
      %1490 = vmatprep.subr.mxu0 0.0
      %1491 = vmatpush1.msra.mxu0 0.0
      %1492 = vmatprep.subr.mxu0 0.0
      %1493 = vmatpush1.msra.mxu0 0.0
      %1494 = vmatprep.subr.mxu0 0.0
      %1495 = vmatpush1.msra.mxu0 0.0
      %1496 = vmatprep.subr.mxu0 0.0
      %1497 = vmatpush1.msra.mxu0 0.0
      %1498 = vmatprep.subr.mxu0 0.0
      %1499 = vmatpush1.msra.mxu0 0.0
      %1500 = vmatprep.subr.mxu0 0.0
      %1501 = vmatpush1.msra.mxu0 0.0
      %1502 = vmatprep.subr.mxu0 0.0
      %1503 = vmatpush1.msra.mxu0 0.0
      %1504 = vmatprep.subr.mxu0 0.0
      %1505 = vmatpush1.msra.mxu0 0.0
      %1506 = vmatprep.subr.mxu0 0.0
      %1507 = vmatpush1.msra.mxu0 0.0
      %1508 = vmatprep.subr.mxu0 0.0
      %1509 = vmatpush1.msra.mxu0 %v1478
      %1510 = vmatprep.subr.mxu0 0.0
      %1511 = vmatpush1.msra.mxu0 %v1477
      %1512 = vmatprep.subr.mxu0 0.0
      %1513 = vmatpush1.msra.mxu0 %v1476
      %1514 = vmatprep.subr.mxu0 0.0
      %1515 = vmatpush1.msra.mxu0 %v1475
      %1516 = vmatprep.subr.mxu0 0.0
      %1517 = vmatpush2.msra.mxu0 0.0
      %1518 = vmatprep.subr.mxu0 0.0
      %1519 = vmatpush2.msra.mxu0 0.0
      %1520 = vmatprep.subr.mxu0 0.0
      %1521 = vmatpush2.msra.mxu0 0.0
      %1522 = vmatprep.subr.mxu0 0.0
      %1523 = vmatpush2.msra.mxu0 0.0
      %1524 = vmatprep.subr.mxu0 0.0
      %1525 = vmatpush2.msra.mxu0 0.0
      %1526 = vmatprep.subr.mxu0 0.0
      %1527 = vmatpush2.msra.mxu0 0.0
      %1528 = vmatprep.subr.mxu0 0.0
      %1529 = vmatpush2.msra.mxu0 0.0
      %1530 = vmatprep.subr.mxu0 0.0
      %1531 = vmatpush2.msra.mxu0 0.0
      %1532 = vmatprep.subr.mxu0 0.0
      %1533 = vmatpush2.msra.mxu0 0.0
      %1534 = vmatprep.subr.mxu0 0.0
      %1535 = vmatpush2.msra.mxu0 0.0
      %1536 = vmatprep.subr.mxu0 0.0
      %1537 = vmatpush2.msra.mxu0 0.0
      %1538 = vmatprep.subr.mxu0 0.0
      %1539 = vmatpush2.msra.mxu0 0.0
      %1540 = vmatprep.subr.mxu0 0.0
      %1541 = vmatpush2.msra.mxu0 0.0
      %1542 = vmatprep.subr.mxu0 0.0
      %1543 = vmatpush2.msra.mxu0 0.0
      %1544 = vmatprep.subr.mxu0 0.0
      %1545 = vmatpush2.msra.mxu0 0.0
      %1546 = vmatprep.subr.mxu0 0.0
      %1547 = vmatpush2.msra.mxu0 0.0
      %1548 = vmatprep.mubr.f32.mxu0 0.0
      %1549 = vmatmul.mubr.f32.gmra.mxu0 %v1394
      %v1550 = vpop.f32.mrf.mxu0
      %v1551 = vadd.f32 %v1483, %v1550
      %v1552 = vpop.f32.mrf.mxu0
      %1553 = vmatprep.mubr.f32.mxu0 0.0
      %1554 = vmatmul.mubr.f32.gmra.mxu0 %v1397
      %v1555 = vpop.f32.mrf.mxu0
      %v1556 = vadd.f32 %v1483, %v1555
      %v1557 = vpop.f32.mrf.mxu0
      %1558 = vdwg.mxu0
      %s1559 = scalar_lea.vmem %s2, 256
      %v1560 = vld [vmem:[%s1559] sm:$0xff]
      %v1561 = vld [vmem:[%s1559 + $0x8] sm:$0xff]
      %v1562 = vld [vmem:[%s1559 + $0x10] sm:$0xff]
      %v1563 = vld [vmem:[%s1559 + $0x18] sm:$0xff]
      %v1564 = vld [vmem:[%s1387 + $0x2] sm:$0x1]
      %v1565 = vlaneseq
      %v1566 = vshrl.u32 %v1565, 7
      %v1567 = vsub.s32 0, %v1566
      %v1568 = vrot.slane %v1564, %v1567
      %1569 = vmatprep.subr.mxu0 0.0
      %1570 = vmatpush1.msra.mxu0 0.0
      %1571 = vmatprep.subr.mxu0 0.0
      %1572 = vmatpush1.msra.mxu0 0.0
      %1573 = vmatprep.subr.mxu0 0.0
      %1574 = vmatpush1.msra.mxu0 0.0
      %1575 = vmatprep.subr.mxu0 0.0
      %1576 = vmatpush1.msra.mxu0 0.0
      %1577 = vmatprep.subr.mxu0 0.0
      %1578 = vmatpush1.msra.mxu0 0.0
      %1579 = vmatprep.subr.mxu0 0.0
      %1580 = vmatpush1.msra.mxu0 0.0
      %1581 = vmatprep.subr.mxu0 0.0
      %1582 = vmatpush1.msra.mxu0 0.0
      %1583 = vmatprep.subr.mxu0 0.0
      %1584 = vmatpush1.msra.mxu0 0.0
      %1585 = vmatprep.subr.mxu0 0.0
      %1586 = vmatpush1.msra.mxu0 0.0
      %1587 = vmatprep.subr.mxu0 0.0
      %1588 = vmatpush1.msra.mxu0 0.0
      %1589 = vmatprep.subr.mxu0 0.0
      %1590 = vmatpush1.msra.mxu0 0.0
      %1591 = vmatprep.subr.mxu0 0.0
      %1592 = vmatpush1.msra.mxu0 0.0
      %1593 = vmatprep.subr.mxu0 0.0
      %1594 = vmatpush1.msra.mxu0 %v1563
      %1595 = vmatprep.subr.mxu0 0.0
      %1596 = vmatpush1.msra.mxu0 %v1562
      %1597 = vmatprep.subr.mxu0 0.0
      %1598 = vmatpush1.msra.mxu0 %v1561
      %1599 = vmatprep.subr.mxu0 0.0
      %1600 = vmatpush1.msra.mxu0 %v1560
      %1601 = vmatprep.subr.mxu0 0.0
      %1602 = vmatpush2.msra.mxu0 0.0
      %1603 = vmatprep.subr.mxu0 0.0
      %1604 = vmatpush2.msra.mxu0 0.0
      %1605 = vmatprep.subr.mxu0 0.0
      %1606 = vmatpush2.msra.mxu0 0.0
      %1607 = vmatprep.subr.mxu0 0.0
      %1608 = vmatpush2.msra.mxu0 0.0
      %1609 = vmatprep.subr.mxu0 0.0
      %1610 = vmatpush2.msra.mxu0 0.0
      %1611 = vmatprep.subr.mxu0 0.0
      %1612 = vmatpush2.msra.mxu0 0.0
      %1613 = vmatprep.subr.mxu0 0.0
      %1614 = vmatpush2.msra.mxu0 0.0
      %1615 = vmatprep.subr.mxu0 0.0
      %1616 = vmatpush2.msra.mxu0 0.0
      %1617 = vmatprep.subr.mxu0 0.0
      %1618 = vmatpush2.msra.mxu0 0.0
      %1619 = vmatprep.subr.mxu0 0.0
      %1620 = vmatpush2.msra.mxu0 0.0
      %1621 = vmatprep.subr.mxu0 0.0
      %1622 = vmatpush2.msra.mxu0 0.0
      %1623 = vmatprep.subr.mxu0 0.0
      %1624 = vmatpush2.msra.mxu0 0.0
      %1625 = vmatprep.subr.mxu0 0.0
      %1626 = vmatpush2.msra.mxu0 0.0
      %1627 = vmatprep.subr.mxu0 0.0
      %1628 = vmatpush2.msra.mxu0 0.0
      %1629 = vmatprep.subr.mxu0 0.0
      %1630 = vmatpush2.msra.mxu0 0.0
      %1631 = vmatprep.subr.mxu0 0.0
      %1632 = vmatpush2.msra.mxu0 0.0
      %1633 = vmatprep.mubr.f32.mxu0 0.0
      %1634 = vmatmul.mubr.f32.gmra.mxu0 %v1394
      %v1635 = vpop.f32.mrf.mxu0
      %v1636 = vadd.f32 %v1568, %v1635
      %v1637 = vpop.f32.mrf.mxu0
      %1638 = vmatprep.mubr.f32.mxu0 0.0
      %1639 = vmatmul.mubr.f32.gmra.mxu0 %v1397
      %v1640 = vpop.f32.mrf.mxu0
      %v1641 = vadd.f32 %v1568, %v1640
      %v1642 = vpop.f32.mrf.mxu0
      %1643 = vdwg.mxu0
      %v1644 = vmul.f32 %v1466, %v300
      %v1645 = vmul.f32 %v1471, %v300
      %v1646 = vmul.f32 %v1551, %v300
      %v1647 = vmul.f32 %v1556, %v300
      %v1649 = vsel %vm317, %v1644, 0
      %v1652 = vsel %vm317, %v1645, 0
      %v1655 = vsel %vm317, %v1646, 0
      %v1658 = vsel %vm317, %v1647, 0
      %1660 = vmatprep.subr.mxu0 0.0
      %1661 = vmatpush1.xpose.msra.mxu0 0.0
      %1662 = vmatprep.subr.mxu0 0.0
      %1663 = vmatpush1.xpose.msra.mxu0 0.0
      %1664 = vmatprep.subr.mxu0 0.0
      %1665 = vmatpush1.xpose.msra.mxu0 0.0
      %1666 = vmatprep.subr.mxu0 0.0
      %1667 = vmatpush1.xpose.msra.mxu0 0.0
      %1668 = vmatprep.subr.mxu0 0.0
      %1669 = vmatpush1.xpose.msra.mxu0 0.0
      %1670 = vmatprep.subr.mxu0 0.0
      %1671 = vmatpush1.xpose.msra.mxu0 0.0
      %1672 = vmatprep.subr.mxu0 0.0
      %1673 = vmatpush1.xpose.msra.mxu0 0.0
      %1674 = vmatprep.subr.mxu0 0.0
      %1675 = vmatpush1.xpose.msra.mxu0 0.0
      %1676 = vmatprep.subr.mxu0 0.0
      %1677 = vmatpush1.xpose.msra.mxu0 0.0
      %1678 = vmatprep.subr.mxu0 0.0
      %1679 = vmatpush1.xpose.msra.mxu0 0.0
      %1680 = vmatprep.subr.mxu0 0.0
      %1681 = vmatpush1.xpose.msra.mxu0 0.0
      %1682 = vmatprep.subr.mxu0 0.0
      %1683 = vmatpush1.xpose.msra.mxu0 0.0
      %1684 = vmatprep.subr.mxu0 0.0
      %1685 = vmatpush1.xpose.msra.mxu0 0.0
      %1686 = vmatprep.subr.mxu0 0.0
      %1687 = vmatpush1.xpose.msra.mxu0 0.0
      %1688 = vmatprep.subr.mxu0 0.0
      %1689 = vmatpush1.xpose.msra.mxu0 %v1658
      %1690 = vmatprep.subr.mxu0 0.0
      %1691 = vmatpush1.xpose.msra.mxu0 %v1655
      %1692 = vmatprep.subr.mxu0 0.0
      %1693 = vmatpush2.xpose.msra.mxu0 0.0
      %1694 = vmatprep.subr.mxu0 0.0
      %1695 = vmatpush2.xpose.msra.mxu0 0.0
      %1696 = vmatprep.subr.mxu0 0.0
      %1697 = vmatpush2.xpose.msra.mxu0 0.0
      %1698 = vmatprep.subr.mxu0 0.0
      %1699 = vmatpush2.xpose.msra.mxu0 0.0
      %1700 = vmatprep.subr.mxu0 0.0
      %1701 = vmatpush2.xpose.msra.mxu0 0.0
      %1702 = vmatprep.subr.mxu0 0.0
      %1703 = vmatpush2.xpose.msra.mxu0 0.0
      %1704 = vmatprep.subr.mxu0 0.0
      %1705 = vmatpush2.xpose.msra.mxu0 0.0
      %1706 = vmatprep.subr.mxu0 0.0
      %1707 = vmatpush2.xpose.msra.mxu0 0.0
      %1708 = vmatprep.subr.mxu0 0.0
      %1709 = vmatpush2.xpose.msra.mxu0 0.0
      %1710 = vmatprep.subr.mxu0 0.0
      %1711 = vmatpush2.xpose.msra.mxu0 0.0
      %1712 = vmatprep.subr.mxu0 0.0
      %1713 = vmatpush2.xpose.msra.mxu0 0.0
      %1714 = vmatprep.subr.mxu0 0.0
      %1715 = vmatpush2.xpose.msra.mxu0 0.0
      %1716 = vmatprep.subr.mxu0 0.0
      %1717 = vmatpush2.xpose.msra.mxu0 0.0
      %1718 = vmatprep.subr.mxu0 0.0
      %1719 = vmatpush2.xpose.msra.mxu0 0.0
      %1720 = vmatprep.subr.mxu0 0.0
      %1721 = vmatpush2.xpose.msra.mxu0 0.0
      %1722 = vmatprep.subr.mxu0 0.0
      %1723 = vmatpush2.xpose.msra.mxu0 0.0
      %1724 = vmatprep.mubr.f32.mxu0 0.0
      %1725 = vmatmul.mubr.f32.gmra.mxu0 %v1649
      %v1726 = vpop.f32.mrf.mxu0
      %v1727 = vadd.f32 0.0, %v1726
      %v1728 = vpop.f32.mrf.mxu0
      %1729 = vmatprep.mubr.f32.mxu0 0.0
      %1730 = vmatmul.mubr.f32.gmra.mxu0 %v1652
      %v1731 = vpop.f32.mrf.mxu0
      %v1732 = vadd.f32 0.0, %v1731
      %v1733 = vpop.f32.mrf.mxu0
      %1734 = vdwg.mxu0
      %v1735 = vmul.f32 %v1727, 0.25
      %v1736 = vmul.f32 %v1732, 0.25
      %v1737 = vadd.f32 %v1735, %v294
      %v1738 = vadd.f32 %v1736, %v295
      %v1739 = vsel %vm664, %v1737, -inf
      %1740 = vmax.xlane.f32.xlu0 %v1739
      %v1741 = vpop.xlane.xlu0 %1740
      %v1742 = vsel %vm664, %v1738, -inf
      %1743 = vmax.xlane.f32.xlu0 %v1742
      %v1744 = vpop.xlane.xlu0 %1743
      %v1745 = vsub.f32 %v1737, %v1741
      %v1746 = vsub.f32 %v1738, %v1744
      %v1747 = vmul.f32 %v1745, 1.442695
      %v1748 = vpow.pop %v1747
      %v1749 = vmul.f32 %v1746, 1.442695
      %v1750 = vpow.pop %v1749
      %v1751 = vsel %vm664, %v1748, 0.0
      %1752 = vadd.xlane.f32.xlu0 %v1751
      %v1753 = vpop.xlane.xlu0 %1752
      %v1754 = vsel %vm664, %v1750, 0.0
      %1755 = vadd.xlane.f32.xlu0 %v1754
      %v1756 = vpop.xlane.xlu0 %1755
      %v1757 = vrcp.pop %v1753
      %v1758 = vrcp.pop %v1756
      %v1759 = vmul.f32 %v1748, %v1757
      %v1760 = vmul.f32 %v1750, %v1758
      %v1761 = vmul.f32 %v1636, %v300
      %v1762 = vmul.f32 %v1641, %v300
      %v1763 = vmul.f32 %v1466, %v305
      %v1764 = vmul.f32 %v1471, %v305
      %v1765 = vmul.f32 %v1551, %v305
      %v1766 = vmul.f32 %v1556, %v305
      %v1768 = vsel %vm317, %v1763, 0
      %v1771 = vsel %vm317, %v1764, 0
      %v1774 = vsel %vm317, %v1765, 0
      %v1777 = vsel %vm317, %v1766, 0
      %1779 = vmatprep.subr.mxu0 0.0
      %1780 = vmatpush1.xpose.msra.mxu0 0.0
      %1781 = vmatprep.subr.mxu0 0.0
      %1782 = vmatpush1.xpose.msra.mxu0 0.0
      %1783 = vmatprep.subr.mxu0 0.0
      %1784 = vmatpush1.xpose.msra.mxu0 0.0
      %1785 = vmatprep.subr.mxu0 0.0
      %1786 = vmatpush1.xpose.msra.mxu0 0.0
      %1787 = vmatprep.subr.mxu0 0.0
      %1788 = vmatpush1.xpose.msra.mxu0 0.0
      %1789 = vmatprep.subr.mxu0 0.0
      %1790 = vmatpush1.xpose.msra.mxu0 0.0
      %1791 = vmatprep.subr.mxu0 0.0
      %1792 = vmatpush1.xpose.msra.mxu0 0.0
      %1793 = vmatprep.subr.mxu0 0.0
      %1794 = vmatpush1.xpose.msra.mxu0 0.0
      %1795 = vmatprep.subr.mxu0 0.0
      %1796 = vmatpush1.xpose.msra.mxu0 0.0
      %1797 = vmatprep.subr.mxu0 0.0
      %1798 = vmatpush1.xpose.msra.mxu0 0.0
      %1799 = vmatprep.subr.mxu0 0.0
      %1800 = vmatpush1.xpose.msra.mxu0 0.0
      %1801 = vmatprep.subr.mxu0 0.0
      %1802 = vmatpush1.xpose.msra.mxu0 0.0
      %1803 = vmatprep.subr.mxu0 0.0
      %1804 = vmatpush1.xpose.msra.mxu0 0.0
      %1805 = vmatprep.subr.mxu0 0.0
      %1806 = vmatpush1.xpose.msra.mxu0 0.0
      %1807 = vmatprep.subr.mxu0 0.0
      %1808 = vmatpush1.xpose.msra.mxu0 %v1777
      %1809 = vmatprep.subr.mxu0 0.0
      %1810 = vmatpush1.xpose.msra.mxu0 %v1774
      %1811 = vmatprep.subr.mxu0 0.0
      %1812 = vmatpush2.xpose.msra.mxu0 0.0
      %1813 = vmatprep.subr.mxu0 0.0
      %1814 = vmatpush2.xpose.msra.mxu0 0.0
      %1815 = vmatprep.subr.mxu0 0.0
      %1816 = vmatpush2.xpose.msra.mxu0 0.0
      %1817 = vmatprep.subr.mxu0 0.0
      %1818 = vmatpush2.xpose.msra.mxu0 0.0
      %1819 = vmatprep.subr.mxu0 0.0
      %1820 = vmatpush2.xpose.msra.mxu0 0.0
      %1821 = vmatprep.subr.mxu0 0.0
      %1822 = vmatpush2.xpose.msra.mxu0 0.0
      %1823 = vmatprep.subr.mxu0 0.0
      %1824 = vmatpush2.xpose.msra.mxu0 0.0
      %1825 = vmatprep.subr.mxu0 0.0
      %1826 = vmatpush2.xpose.msra.mxu0 0.0
      %1827 = vmatprep.subr.mxu0 0.0
      %1828 = vmatpush2.xpose.msra.mxu0 0.0
      %1829 = vmatprep.subr.mxu0 0.0
      %1830 = vmatpush2.xpose.msra.mxu0 0.0
      %1831 = vmatprep.subr.mxu0 0.0
      %1832 = vmatpush2.xpose.msra.mxu0 0.0
      %1833 = vmatprep.subr.mxu0 0.0
      %1834 = vmatpush2.xpose.msra.mxu0 0.0
      %1835 = vmatprep.subr.mxu0 0.0
      %1836 = vmatpush2.xpose.msra.mxu0 0.0
      %1837 = vmatprep.subr.mxu0 0.0
      %1838 = vmatpush2.xpose.msra.mxu0 0.0
      %1839 = vmatprep.subr.mxu0 0.0
      %1840 = vmatpush2.xpose.msra.mxu0 0.0
      %1841 = vmatprep.subr.mxu0 0.0
      %1842 = vmatpush2.xpose.msra.mxu0 0.0
      %1843 = vmatprep.mubr.f32.mxu0 0.0
      %1844 = vmatmul.mubr.f32.gmra.mxu0 %v1768
      %v1845 = vpop.f32.mrf.mxu0
      %v1846 = vadd.f32 0.0, %v1845
      %v1847 = vpop.f32.mrf.mxu0
      %1848 = vmatprep.mubr.f32.mxu0 0.0
      %1849 = vmatmul.mubr.f32.gmra.mxu0 %v1771
      %v1850 = vpop.f32.mrf.mxu0
      %v1851 = vadd.f32 0.0, %v1850
      %v1852 = vpop.f32.mrf.mxu0
      %1853 = vdwg.mxu0
      %v1854 = vmul.f32 %v1846, 0.25
      %v1855 = vmul.f32 %v1851, 0.25
      %v1856 = vadd.f32 %v1854, %v294
      %v1857 = vadd.f32 %v1855, %v295
      %v1858 = vsel %vm664, %v1856, -inf
      %1859 = vmax.xlane.f32.xlu0 %v1858
      %v1860 = vpop.xlane.xlu0 %1859
      %v1861 = vsel %vm664, %v1857, -inf
      %1862 = vmax.xlane.f32.xlu0 %v1861
      %v1863 = vpop.xlane.xlu0 %1862
      %v1864 = vsub.f32 %v1856, %v1860
      %v1865 = vsub.f32 %v1857, %v1863
      %v1866 = vmul.f32 %v1864, 1.442695
      %v1867 = vpow.pop %v1866
      %v1868 = vmul.f32 %v1865, 1.442695
      %v1869 = vpow.pop %v1868
      %v1870 = vsel %vm664, %v1867, 0.0
      %1871 = vadd.xlane.f32.xlu0 %v1870
      %v1872 = vpop.xlane.xlu0 %1871
      %v1873 = vsel %vm664, %v1869, 0.0
      %1874 = vadd.xlane.f32.xlu0 %v1873
      %v1875 = vpop.xlane.xlu0 %1874
      %v1876 = vrcp.pop %v1872
      %v1877 = vrcp.pop %v1875
      %v1878 = vmul.f32 %v1867, %v1876
      %v1879 = vmul.f32 %v1869, %v1877
      %v1880 = vmul.f32 %v1636, %v305
      %v1881 = vmul.f32 %v1641, %v305
      %v1883 = vsel %vm664, %v1878, 0
      %v1886 = vsel %vm664, %v1879, 0
      %1888 = vmatprep.subr.mxu0 0.0
      %1889 = vmatpush1.msra.mxu0 0.0
      %1890 = vmatprep.subr.mxu0 0.0
      %1891 = vmatpush1.msra.mxu0 0.0
      %1892 = vmatprep.subr.mxu0 0.0
      %1893 = vmatpush1.msra.mxu0 0.0
      %1894 = vmatprep.subr.mxu0 0.0
      %1895 = vmatpush1.msra.mxu0 0.0
      %1896 = vmatprep.subr.mxu0 0.0
      %1897 = vmatpush1.msra.mxu0 0.0
      %1898 = vmatprep.subr.mxu0 0.0
      %1899 = vmatpush1.msra.mxu0 0.0
      %1900 = vmatprep.subr.mxu0 0.0
      %1901 = vmatpush1.msra.mxu0 0.0
      %1902 = vmatprep.subr.mxu0 0.0
      %1903 = vmatpush1.msra.mxu0 0.0
      %1904 = vmatprep.subr.mxu0 0.0
      %1905 = vmatpush1.msra.mxu0 0.0
      %1906 = vmatprep.subr.mxu0 0.0
      %1907 = vmatpush1.msra.mxu0 0.0
      %1908 = vmatprep.subr.mxu0 0.0
      %1909 = vmatpush1.msra.mxu0 0.0
      %1910 = vmatprep.subr.mxu0 0.0
      %1911 = vmatpush1.msra.mxu0 0.0
      %1912 = vmatprep.subr.mxu0 0.0
      %1913 = vmatpush1.msra.mxu0 0.0
      %1914 = vmatprep.subr.mxu0 0.0
      %1915 = vmatpush1.msra.mxu0 0.0
      %1916 = vmatprep.subr.mxu0 0.0
      %1917 = vmatpush1.msra.mxu0 %v1881
      %1918 = vmatprep.subr.mxu0 0.0
      %1919 = vmatpush1.msra.mxu0 %v1880
      %1920 = vmatprep.subr.mxu0 0.0
      %1921 = vmatpush2.msra.mxu0 0.0
      %1922 = vmatprep.subr.mxu0 0.0
      %1923 = vmatpush2.msra.mxu0 0.0
      %1924 = vmatprep.subr.mxu0 0.0
      %1925 = vmatpush2.msra.mxu0 0.0
      %1926 = vmatprep.subr.mxu0 0.0
      %1927 = vmatpush2.msra.mxu0 0.0
      %1928 = vmatprep.subr.mxu0 0.0
      %1929 = vmatpush2.msra.mxu0 0.0
      %1930 = vmatprep.subr.mxu0 0.0
      %1931 = vmatpush2.msra.mxu0 0.0
      %1932 = vmatprep.subr.mxu0 0.0
      %1933 = vmatpush2.msra.mxu0 0.0
      %1934 = vmatprep.subr.mxu0 0.0
      %1935 = vmatpush2.msra.mxu0 0.0
      %1936 = vmatprep.subr.mxu0 0.0
      %1937 = vmatpush2.msra.mxu0 0.0
      %1938 = vmatprep.subr.mxu0 0.0
      %1939 = vmatpush2.msra.mxu0 0.0
      %1940 = vmatprep.subr.mxu0 0.0
      %1941 = vmatpush2.msra.mxu0 0.0
      %1942 = vmatprep.subr.mxu0 0.0
      %1943 = vmatpush2.msra.mxu0 0.0
      %1944 = vmatprep.subr.mxu0 0.0
      %1945 = vmatpush2.msra.mxu0 0.0
      %1946 = vmatprep.subr.mxu0 0.0
      %1947 = vmatpush2.msra.mxu0 0.0
      %1948 = vmatprep.subr.mxu0 0.0
      %1949 = vmatpush2.msra.mxu0 0.0
      %1950 = vmatprep.subr.mxu0 0.0
      %1951 = vmatpush2.msra.mxu0 0.0
      %1952 = vmatprep.mubr.f32.mxu0 0.0
      %1953 = vmatmul.mubr.f32.gmra.mxu0 %v1883
      %v1954 = vpop.f32.mrf.mxu0
      %v1955 = vadd.f32 0.0, %v1954
      %v1956 = vpop.f32.mrf.mxu0
      %1957 = vmatprep.mubr.f32.mxu0 0.0
      %1958 = vmatmul.mubr.f32.gmra.mxu0 %v1886
      %v1959 = vpop.f32.mrf.mxu0
      %v1960 = vadd.f32 0.0, %v1959
      %v1961 = vpop.f32.mrf.mxu0
      %1962 = vdwg.mxu0
      %v1964 = vsel %vm664, %v1759, 0
      %v1967 = vsel %vm664, %v1760, 0
      %1969 = vmatprep.subr.mxu0 0.0
      %1970 = vmatpush1.msra.mxu0 0.0
      %1971 = vmatprep.subr.mxu0 0.0
      %1972 = vmatpush1.msra.mxu0 0.0
      %1973 = vmatprep.subr.mxu0 0.0
      %1974 = vmatpush1.msra.mxu0 0.0
      %1975 = vmatprep.subr.mxu0 0.0
      %1976 = vmatpush1.msra.mxu0 0.0
      %1977 = vmatprep.subr.mxu0 0.0
      %1978 = vmatpush1.msra.mxu0 0.0
      %1979 = vmatprep.subr.mxu0 0.0
      %1980 = vmatpush1.msra.mxu0 0.0
      %1981 = vmatprep.subr.mxu0 0.0
      %1982 = vmatpush1.msra.mxu0 0.0
      %1983 = vmatprep.subr.mxu0 0.0
      %1984 = vmatpush1.msra.mxu0 0.0
      %1985 = vmatprep.subr.mxu0 0.0
      %1986 = vmatpush1.msra.mxu0 0.0
      %1987 = vmatprep.subr.mxu0 0.0
      %1988 = vmatpush1.msra.mxu0 0.0
      %1989 = vmatprep.subr.mxu0 0.0
      %1990 = vmatpush1.msra.mxu0 0.0
      %1991 = vmatprep.subr.mxu0 0.0
      %1992 = vmatpush1.msra.mxu0 0.0
      %1993 = vmatprep.subr.mxu0 0.0
      %1994 = vmatpush1.msra.mxu0 0.0
      %1995 = vmatprep.subr.mxu0 0.0
      %1996 = vmatpush1.msra.mxu0 0.0
      %1997 = vmatprep.subr.mxu0 0.0
      %1998 = vmatpush1.msra.mxu0 %v1762
      %1999 = vmatprep.subr.mxu0 0.0
      %2000 = vmatpush1.msra.mxu0 %v1761
      %2001 = vmatprep.subr.mxu0 0.0
      %2002 = vmatpush2.msra.mxu0 0.0
      %2003 = vmatprep.subr.mxu0 0.0
      %2004 = vmatpush2.msra.mxu0 0.0
      %2005 = vmatprep.subr.mxu0 0.0
      %2006 = vmatpush2.msra.mxu0 0.0
      %2007 = vmatprep.subr.mxu0 0.0
      %2008 = vmatpush2.msra.mxu0 0.0
      %2009 = vmatprep.subr.mxu0 0.0
      %2010 = vmatpush2.msra.mxu0 0.0
      %2011 = vmatprep.subr.mxu0 0.0
      %2012 = vmatpush2.msra.mxu0 0.0
      %2013 = vmatprep.subr.mxu0 0.0
      %2014 = vmatpush2.msra.mxu0 0.0
      %2015 = vmatprep.subr.mxu0 0.0
      %2016 = vmatpush2.msra.mxu0 0.0
      %2017 = vmatprep.subr.mxu0 0.0
      %2018 = vmatpush2.msra.mxu0 0.0
      %2019 = vmatprep.subr.mxu0 0.0
      %2020 = vmatpush2.msra.mxu0 0.0
      %2021 = vmatprep.subr.mxu0 0.0
      %2022 = vmatpush2.msra.mxu0 0.0
      %2023 = vmatprep.subr.mxu0 0.0
      %2024 = vmatpush2.msra.mxu0 0.0
      %2025 = vmatprep.subr.mxu0 0.0
      %2026 = vmatpush2.msra.mxu0 0.0
      %2027 = vmatprep.subr.mxu0 0.0
      %2028 = vmatpush2.msra.mxu0 0.0
      %2029 = vmatprep.subr.mxu0 0.0
      %2030 = vmatpush2.msra.mxu0 0.0
      %2031 = vmatprep.subr.mxu0 0.0
      %2032 = vmatpush2.msra.mxu0 0.0
      %2033 = vmatprep.mubr.f32.mxu0 0.0
      %2034 = vmatmul.mubr.f32.gmra.mxu0 %v1964
      %v2035 = vpop.f32.mrf.mxu0
      %v2036 = vadd.f32 %v1955, %v2035
      %v2037 = vpop.f32.mrf.mxu0
      %2038 = vmatprep.mubr.f32.mxu0 0.0
      %2039 = vmatmul.mubr.f32.gmra.mxu0 %v1967
      %v2040 = vpop.f32.mrf.mxu0
      %v2041 = vadd.f32 %v1960, %v2040
      %v2042 = vpop.f32.mrf.mxu0
      %2043 = vdwg.mxu0
      %s2044 = scalar_lea.vmem %s2, 288
      %v2045 = vld [vmem:[%s2044] sm:$0xff]
      %v2046 = vld [vmem:[%s2044 + $0x8] sm:$0xff]
      %v2047 = vld [vmem:[%s2044 + $0x10] sm:$0xff]
      %v2048 = vld [vmem:[%s2044 + $0x18] sm:$0xff]
      %v2049 = vld [vmem:[%s1387 + $0x3] sm:$0x1]
      %v2050 = vlaneseq
      %v2051 = vshrl.u32 %v2050, 7
      %v2052 = vsub.s32 0, %v2051
      %v2053 = vrot.slane %v2049, %v2052
      %v2055 = vsel %vm317, %v2036, 0
      %v2058 = vsel %vm317, %v2041, 0
      %2060 = vmatprep.subr.mxu0 0.0
      %2061 = vmatpush1.msra.mxu0 0.0
      %2062 = vmatprep.subr.mxu0 0.0
      %2063 = vmatpush1.msra.mxu0 0.0
      %2064 = vmatprep.subr.mxu0 0.0
      %2065 = vmatpush1.msra.mxu0 0.0
      %2066 = vmatprep.subr.mxu0 0.0
      %2067 = vmatpush1.msra.mxu0 0.0
      %2068 = vmatprep.subr.mxu0 0.0
      %2069 = vmatpush1.msra.mxu0 0.0
      %2070 = vmatprep.subr.mxu0 0.0
      %2071 = vmatpush1.msra.mxu0 0.0
      %2072 = vmatprep.subr.mxu0 0.0
      %2073 = vmatpush1.msra.mxu0 0.0
      %2074 = vmatprep.subr.mxu0 0.0
      %2075 = vmatpush1.msra.mxu0 0.0
      %2076 = vmatprep.subr.mxu0 0.0
      %2077 = vmatpush1.msra.mxu0 0.0
      %2078 = vmatprep.subr.mxu0 0.0
      %2079 = vmatpush1.msra.mxu0 0.0
      %2080 = vmatprep.subr.mxu0 0.0
      %2081 = vmatpush1.msra.mxu0 0.0
      %2082 = vmatprep.subr.mxu0 0.0
      %2083 = vmatpush1.msra.mxu0 0.0
      %2084 = vmatprep.subr.mxu0 0.0
      %2085 = vmatpush1.msra.mxu0 %v2048
      %2086 = vmatprep.subr.mxu0 0.0
      %2087 = vmatpush1.msra.mxu0 %v2047
      %2088 = vmatprep.subr.mxu0 0.0
      %2089 = vmatpush1.msra.mxu0 %v2046
      %2090 = vmatprep.subr.mxu0 0.0
      %2091 = vmatpush1.msra.mxu0 %v2045
      %2092 = vmatprep.subr.mxu0 0.0
      %2093 = vmatpush2.msra.mxu0 0.0
      %2094 = vmatprep.subr.mxu0 0.0
      %2095 = vmatpush2.msra.mxu0 0.0
      %2096 = vmatprep.subr.mxu0 0.0
      %2097 = vmatpush2.msra.mxu0 0.0
      %2098 = vmatprep.subr.mxu0 0.0
      %2099 = vmatpush2.msra.mxu0 0.0
      %2100 = vmatprep.subr.mxu0 0.0
      %2101 = vmatpush2.msra.mxu0 0.0
      %2102 = vmatprep.subr.mxu0 0.0
      %2103 = vmatpush2.msra.mxu0 0.0
      %2104 = vmatprep.subr.mxu0 0.0
      %2105 = vmatpush2.msra.mxu0 0.0
      %2106 = vmatprep.subr.mxu0 0.0
      %2107 = vmatpush2.msra.mxu0 0.0
      %2108 = vmatprep.subr.mxu0 0.0
      %2109 = vmatpush2.msra.mxu0 0.0
      %2110 = vmatprep.subr.mxu0 0.0
      %2111 = vmatpush2.msra.mxu0 0.0
      %2112 = vmatprep.subr.mxu0 0.0
      %2113 = vmatpush2.msra.mxu0 0.0
      %2114 = vmatprep.subr.mxu0 0.0
      %2115 = vmatpush2.msra.mxu0 0.0
      %2116 = vmatprep.subr.mxu0 0.0
      %2117 = vmatpush2.msra.mxu0 0.0
      %2118 = vmatprep.subr.mxu0 0.0
      %2119 = vmatpush2.msra.mxu0 0.0
      %2120 = vmatprep.subr.mxu0 0.0
      %2121 = vmatpush2.msra.mxu0 0.0
      %2122 = vmatprep.subr.mxu0 0.0
      %2123 = vmatpush2.msra.mxu0 0.0
      %2124 = vmatprep.mubr.f32.mxu0 0.0
      %2125 = vmatmul.mubr.f32.gmra.mxu0 %v2055
      %v2126 = vpop.f32.mrf.mxu0
      %v2127 = vadd.f32 %v2053, %v2126
      %v2128 = vpop.f32.mrf.mxu0
      %2129 = vmatprep.mubr.f32.mxu0 0.0
      %2130 = vmatmul.mubr.f32.gmra.mxu0 %v2058
      %v2131 = vpop.f32.mrf.mxu0
      %v2132 = vadd.f32 %v2053, %v2131
      %v2133 = vpop.f32.mrf.mxu0
      %2134 = vdwg.mxu0
      %v2135 = vadd.f32 %v1380, %v2127
      %v2136 = vadd.f32 %v1381, %v2132
      %v2137 = vld [vmem:[%s1387 + $0x4] sm:$0x1]
      %v2138 = vld [vmem:[%s1387 + $0x5] sm:$0x1]
      %v2139 = vsel %vm317, %v2135, 0.0
      %2140 = vadd.xlane.f32.xlu0 %v2139
      %v2141 = vpop.xlane.xlu0 %2140
      %v2142 = vsel %vm317, %v2136, 0.0
      %2143 = vadd.xlane.f32.xlu0 %v2142
      %v2144 = vpop.xlane.xlu0 %2143
      %v2145 = vmul.f32 %v2141, %v1071
      %v2146 = vmul.f32 %v2144, %v1071
      %v2147 = vsub.f32 %v2135, %v2145
      %v2148 = vsub.f32 %v2136, %v2146
      %v2149 = vmul.f32 %v2147, %v2147
      %v2150 = vmul.f32 %v2148, %v2148
      %v2151 = vsel %vm317, %v2149, 0.0
      %2152 = vadd.xlane.f32.xlu0 %v2151
      %v2153 = vpop.xlane.xlu0 %2152
      %v2154 = vsel %vm317, %v2150, 0.0
      %2155 = vadd.xlane.f32.xlu0 %v2154
      %v2156 = vpop.xlane.xlu0 %2155
      %v2157 = vmul.f32 %v2153, %v1071
      %v2158 = vmul.f32 %v2156, %v1071
      %v2159 = vadd.f32 %v2157, 1e-05
      %v2160 = vadd.f32 %v2158, 1e-05
      %v2161 = vrsqrt.pop %v2159
      %v2162 = vrsqrt.pop %v2160
      %v2163 = vmul.f32 %v2147, %v2161
      %v2164 = vmul.f32 %v2148, %v2162
      %v2165 = vlaneseq
      %v2166 = vshrl.u32 %v2165, 7
      %v2167 = vsub.s32 0, %v2166
      %v2168 = vrot.slane %v2137, %v2167
      %v2169 = vmul.f32 %v2163, %v2168
      %v2170 = vmul.f32 %v2164, %v2168
      %v2171 = vlaneseq
      %v2172 = vshrl.u32 %v2171, 7
      %v2173 = vsub.s32 0, %v2172
      %v2174 = vrot.slane %v2138, %v2173
      %v2175 = vadd.f32 %v2169, %v2174
      %v2176 = vadd.f32 %v2170, %v2174
      %s2177 = scalar_lea.vmem %s2, 320
      %v2178 = vld [vmem:[%s2177] sm:$0xff]
      %v2179 = vld [vmem:[%s2177 + $0x8] sm:$0xff]
      %v2180 = vld [vmem:[%s2177 + $0x10] sm:$0xff]
      %v2181 = vld [vmem:[%s2177 + $0x18] sm:$0xff]
      %v2182 = vld [vmem:[%s1387 + $0x6] sm:$0x1]
      %v2183 = vlaneseq
      %v2184 = vshrl.u32 %v2183, 7
      %v2185 = vsub.s32 0, %v2184
      %v2186 = vrot.slane %v2182, %v2185
      %v2188 = vsel %vm317, %v2175, 0
      %v2191 = vsel %vm317, %v2176, 0
      %2193 = vmatprep.subr.mxu0 0.0
      %2194 = vmatpush1.msra.mxu0 0.0
      %2195 = vmatprep.subr.mxu0 0.0
      %2196 = vmatpush1.msra.mxu0 0.0
      %2197 = vmatprep.subr.mxu0 0.0
      %2198 = vmatpush1.msra.mxu0 0.0
      %2199 = vmatprep.subr.mxu0 0.0
      %2200 = vmatpush1.msra.mxu0 0.0
      %2201 = vmatprep.subr.mxu0 0.0
      %2202 = vmatpush1.msra.mxu0 0.0
      %2203 = vmatprep.subr.mxu0 0.0
      %2204 = vmatpush1.msra.mxu0 0.0
      %2205 = vmatprep.subr.mxu0 0.0
      %2206 = vmatpush1.msra.mxu0 0.0
      %2207 = vmatprep.subr.mxu0 0.0
      %2208 = vmatpush1.msra.mxu0 0.0
      %2209 = vmatprep.subr.mxu0 0.0
      %2210 = vmatpush1.msra.mxu0 0.0
      %2211 = vmatprep.subr.mxu0 0.0
      %2212 = vmatpush1.msra.mxu0 0.0
      %2213 = vmatprep.subr.mxu0 0.0
      %2214 = vmatpush1.msra.mxu0 0.0
      %2215 = vmatprep.subr.mxu0 0.0
      %2216 = vmatpush1.msra.mxu0 0.0
      %2217 = vmatprep.subr.mxu0 0.0
      %2218 = vmatpush1.msra.mxu0 %v2181
      %2219 = vmatprep.subr.mxu0 0.0
      %2220 = vmatpush1.msra.mxu0 %v2180
      %2221 = vmatprep.subr.mxu0 0.0
      %2222 = vmatpush1.msra.mxu0 %v2179
      %2223 = vmatprep.subr.mxu0 0.0
      %2224 = vmatpush1.msra.mxu0 %v2178
      %2225 = vmatprep.subr.mxu0 0.0
      %2226 = vmatpush2.msra.mxu0 0.0
      %2227 = vmatprep.subr.mxu0 0.0
      %2228 = vmatpush2.msra.mxu0 0.0
      %2229 = vmatprep.subr.mxu0 0.0
      %2230 = vmatpush2.msra.mxu0 0.0
      %2231 = vmatprep.subr.mxu0 0.0
      %2232 = vmatpush2.msra.mxu0 0.0
      %2233 = vmatprep.subr.mxu0 0.0
      %2234 = vmatpush2.msra.mxu0 0.0
      %2235 = vmatprep.subr.mxu0 0.0
      %2236 = vmatpush2.msra.mxu0 0.0
      %2237 = vmatprep.subr.mxu0 0.0
      %2238 = vmatpush2.msra.mxu0 0.0
      %2239 = vmatprep.subr.mxu0 0.0
      %2240 = vmatpush2.msra.mxu0 0.0
      %2241 = vmatprep.subr.mxu0 0.0
      %2242 = vmatpush2.msra.mxu0 0.0
      %2243 = vmatprep.subr.mxu0 0.0
      %2244 = vmatpush2.msra.mxu0 0.0
      %2245 = vmatprep.subr.mxu0 0.0
      %2246 = vmatpush2.msra.mxu0 0.0
      %2247 = vmatprep.subr.mxu0 0.0
      %2248 = vmatpush2.msra.mxu0 0.0
      %2249 = vmatprep.subr.mxu0 0.0
      %2250 = vmatpush2.msra.mxu0 0.0
      %2251 = vmatprep.subr.mxu0 0.0
      %2252 = vmatpush2.msra.mxu0 0.0
      %2253 = vmatprep.subr.mxu0 0.0
      %2254 = vmatpush2.msra.mxu0 0.0
      %2255 = vmatprep.subr.mxu0 0.0
      %2256 = vmatpush2.msra.mxu0 0.0
      %2257 = vmatprep.mubr.f32.mxu0 0.0
      %2258 = vmatmul.mubr.f32.gmra.mxu0 %v2188
      %v2259 = vpop.f32.mrf.mxu0
      %v2260 = vadd.f32 %v2186, %v2259
      %v2261 = vpop.f32.mrf.mxu0
      %2262 = vmatprep.mubr.f32.mxu0 0.0
      %2263 = vmatmul.mubr.f32.gmra.mxu0 %v2191
      %v2264 = vpop.f32.mrf.mxu0
      %v2265 = vadd.f32 %v2186, %v2264
      %v2266 = vpop.f32.mrf.mxu0
      %2267 = vdwg.mxu0
      %v2268 = vmul.f32 %v2260, 0.5
      %v2269 = vmul.f32 %v2265, 0.5
      %v2270 = vmul.f32 %v2260, 0.70710677
      %v2271 = vmul.f32 %v2265, 0.70710677
      %vm2272 = vcmp.lt.f32.partialorder %v2270, 0.0
      %vm2273 = vcmp.lt.f32.partialorder %v2271, 0.0
      %v2274 = vsel %vm2272, -1.0, 1.0
      %v2275 = vsel %vm2273, -1.0, 1.0
      %v2276 = vand.u32 2147483647, %v2270
      %v2277 = vand.u32 2147483647, %v2271
      %v2278 = vmul.f32 %v2276, 0.3275911
      %v2279 = vmul.f32 %v2277, 0.3275911
      %v2280 = vadd.f32 %v2278, 1.0
      %v2281 = vadd.f32 %v2279, 1.0
      %v2282 = vrcp.pop %v2280
      %v2283 = vmul.f32 1.0, %v2282
      %v2284 = vrcp.pop %v2281
      %v2285 = vmul.f32 1.0, %v2284
      %v2286 = vmul.f32 %v2283, 1.0614054
      %v2287 = vmul.f32 %v2285, 1.0614054
      %v2288 = vadd.f32 %v2286, -1.4531521
      %v2289 = vadd.f32 %v2287, -1.4531521
      %v2290 = vmul.f32 %v2288, %v2283
      %v2291 = vmul.f32 %v2289, %v2285
      %v2292 = vadd.f32 %v2290, 1.4214138
      %v2293 = vadd.f32 %v2291, 1.4214138
      %v2294 = vmul.f32 %v2292, %v2283
      %v2295 = vmul.f32 %v2293, %v2285
      %v2296 = vadd.f32 %v2294, -0.28449672
      %v2297 = vadd.f32 %v2295, -0.28449672
      %v2298 = vmul.f32 %v2296, %v2283
      %v2299 = vmul.f32 %v2297, %v2285
      %v2300 = vadd.f32 %v2298, 0.2548296
      %v2301 = vadd.f32 %v2299, 0.2548296
      %v2302 = vmul.f32 %v2300, %v2283
      %v2303 = vmul.f32 %v2301, %v2285
      %v2304 = vsub.f32 0.0, %v2276
      %v2305 = vsub.f32 0.0, %v2277
      %v2306 = vmul.f32 %v2304, %v2276
      %v2307 = vmul.f32 %v2305, %v2277
      %v2308 = vmul.f32 %v2306, 1.442695
      %v2309 = vpow.pop %v2308
      %v2310 = vmul.f32 %v2307, 1.442695
      %v2311 = vpow.pop %v2310
      %v2312 = vmul.f32 %v2302, %v2309
      %v2313 = vmul.f32 %v2303, %v2311
      %v2314 = vsub.f32 1.0, %v2312
      %v2315 = vsub.f32 1.0, %v2313
      %v2316 = vmul.f32 %v2274, %v2314
      %v2317 = vmul.f32 %v2275, %v2315
      %v2318 = vadd.f32 %v2316, 1.0
      %v2319 = vadd.f32 %v2317, 1.0
      %v2320 = vmul.f32 %v2268, %v2318
      %v2321 = vmul.f32 %v2269, %v2319
      %s2322 = scalar_lea.vmem %s2, 352
      %v2323 = vld [vmem:[%s2322] sm:$0xff]
      %v2324 = vld [vmem:[%s2322 + $0x8] sm:$0xff]
      %v2325 = vld [vmem:[%s2322 + $0x10] sm:$0xff]
      %v2326 = vld [vmem:[%s2322 + $0x18] sm:$0xff]
      %v2327 = vld [vmem:[%s1387 + $0x7] sm:$0x1]
      %v2328 = vlaneseq
      %v2329 = vshrl.u32 %v2328, 7
      %v2330 = vsub.s32 0, %v2329
      %v2331 = vrot.slane %v2327, %v2330
      %v2333 = vsel %vm317, %v2320, 0
      %v2336 = vsel %vm317, %v2321, 0
      %2338 = vmatprep.subr.mxu0 0.0
      %2339 = vmatpush1.msra.mxu0 0.0
      %2340 = vmatprep.subr.mxu0 0.0
      %2341 = vmatpush1.msra.mxu0 0.0
      %2342 = vmatprep.subr.mxu0 0.0
      %2343 = vmatpush1.msra.mxu0 0.0
      %2344 = vmatprep.subr.mxu0 0.0
      %2345 = vmatpush1.msra.mxu0 0.0
      %2346 = vmatprep.subr.mxu0 0.0
      %2347 = vmatpush1.msra.mxu0 0.0
      %2348 = vmatprep.subr.mxu0 0.0
      %2349 = vmatpush1.msra.mxu0 0.0
      %2350 = vmatprep.subr.mxu0 0.0
      %2351 = vmatpush1.msra.mxu0 0.0
      %2352 = vmatprep.subr.mxu0 0.0
      %2353 = vmatpush1.msra.mxu0 0.0
      %2354 = vmatprep.subr.mxu0 0.0
      %2355 = vmatpush1.msra.mxu0 0.0
      %2356 = vmatprep.subr.mxu0 0.0
      %2357 = vmatpush1.msra.mxu0 0.0
      %2358 = vmatprep.subr.mxu0 0.0
      %2359 = vmatpush1.msra.mxu0 0.0
      %2360 = vmatprep.subr.mxu0 0.0
      %2361 = vmatpush1.msra.mxu0 0.0
      %2362 = vmatprep.subr.mxu0 0.0
      %2363 = vmatpush1.msra.mxu0 %v2326
      %2364 = vmatprep.subr.mxu0 0.0
      %2365 = vmatpush1.msra.mxu0 %v2325
      %2366 = vmatprep.subr.mxu0 0.0
      %2367 = vmatpush1.msra.mxu0 %v2324
      %2368 = vmatprep.subr.mxu0 0.0
      %2369 = vmatpush1.msra.mxu0 %v2323
      %2370 = vmatprep.subr.mxu0 0.0
      %2371 = vmatpush2.msra.mxu0 0.0
      %2372 = vmatprep.subr.mxu0 0.0
      %2373 = vmatpush2.msra.mxu0 0.0
      %2374 = vmatprep.subr.mxu0 0.0
      %2375 = vmatpush2.msra.mxu0 0.0
      %2376 = vmatprep.subr.mxu0 0.0
      %2377 = vmatpush2.msra.mxu0 0.0
      %2378 = vmatprep.subr.mxu0 0.0
      %2379 = vmatpush2.msra.mxu0 0.0
      %2380 = vmatprep.subr.mxu0 0.0
      %2381 = vmatpush2.msra.mxu0 0.0
      %2382 = vmatprep.subr.mxu0 0.0
      %2383 = vmatpush2.msra.mxu0 0.0
      %2384 = vmatprep.subr.mxu0 0.0
      %2385 = vmatpush2.msra.mxu0 0.0
      %2386 = vmatprep.subr.mxu0 0.0
      %2387 = vmatpush2.msra.mxu0 0.0
      %2388 = vmatprep.subr.mxu0 0.0
      %2389 = vmatpush2.msra.mxu0 0.0
      %2390 = vmatprep.subr.mxu0 0.0
      %2391 = vmatpush2.msra.mxu0 0.0
      %2392 = vmatprep.subr.mxu0 0.0
      %2393 = vmatpush2.msra.mxu0 0.0
      %2394 = vmatprep.subr.mxu0 0.0
      %2395 = vmatpush2.msra.mxu0 0.0
      %2396 = vmatprep.subr.mxu0 0.0
      %2397 = vmatpush2.msra.mxu0 0.0
      %2398 = vmatprep.subr.mxu0 0.0
      %2399 = vmatpush2.msra.mxu0 0.0
      %2400 = vmatprep.subr.mxu0 0.0
      %2401 = vmatpush2.msra.mxu0 0.0
      %2402 = vmatprep.mubr.f32.mxu0 0.0
      %2403 = vmatmul.mubr.f32.gmra.mxu0 %v2333
      %v2404 = vpop.f32.mrf.mxu0
      %v2405 = vadd.f32 %v2331, %v2404
      %v2406 = vpop.f32.mrf.mxu0
      %2407 = vmatprep.mubr.f32.mxu0 0.0
      %2408 = vmatmul.mubr.f32.gmra.mxu0 %v2336
      %v2409 = vpop.f32.mrf.mxu0
      %v2410 = vadd.f32 %v2331, %v2409
      %v2411 = vpop.f32.mrf.mxu0
      %2412 = vdwg.mxu0
      %v2413 = vadd.f32 %v2175, %v2405
      %v2414 = vadd.f32 %v2176, %v2410
      %v2415 = vld [vmem:[%s1387 + $0x8] sm:$0x1]
      %v2416 = vld [vmem:[%s1387 + $0x9] sm:$0x1]
      %v2417 = vsel %vm317, %v2413, 0.0
      %2418 = vadd.xlane.f32.xlu0 %v2417
      %v2419 = vpop.xlane.xlu0 %2418
      %v2420 = vsel %vm317, %v2414, 0.0
      %2421 = vadd.xlane.f32.xlu0 %v2420
      %v2422 = vpop.xlane.xlu0 %2421
      %v2423 = vmul.f32 %v2419, %v1071
      %v2424 = vmul.f32 %v2422, %v1071
      %v2425 = vsub.f32 %v2413, %v2423
      %v2426 = vsub.f32 %v2414, %v2424
      %v2427 = vmul.f32 %v2425, %v2425
      %v2428 = vmul.f32 %v2426, %v2426
      %v2429 = vsel %vm317, %v2427, 0.0
      %2430 = vadd.xlane.f32.xlu0 %v2429
      %v2431 = vpop.xlane.xlu0 %2430
      %v2432 = vsel %vm317, %v2428, 0.0
      %2433 = vadd.xlane.f32.xlu0 %v2432
      %v2434 = vpop.xlane.xlu0 %2433
      %v2435 = vmul.f32 %v2431, %v1071
      %v2436 = vmul.f32 %v2434, %v1071
      %v2437 = vadd.f32 %v2435, 1e-05
      %v2438 = vadd.f32 %v2436, 1e-05
      %v2439 = vrsqrt.pop %v2437
      %v2440 = vrsqrt.pop %v2438
      %v2441 = vmul.f32 %v2425, %v2439
      %v2442 = vmul.f32 %v2426, %v2440
      %v2443 = vlaneseq
      %v2444 = vshrl.u32 %v2443, 7
      %v2445 = vsub.s32 0, %v2444
      %v2446 = vrot.slane %v2415, %v2445
      %v2447 = vmul.f32 %v2441, %v2446
      %v2448 = vmul.f32 %v2442, %v2446
      %v2449 = vlaneseq
      %v2450 = vshrl.u32 %v2449, 7
      %v2451 = vsub.s32 0, %v2450
      %v2452 = vrot.slane %v2416, %v2451
      %v2453 = vadd.f32 %v2447, %v2452
      %v2454 = vadd.f32 %v2448, %v2452
      %v2455 = vld [vmem:[%s4] sm:$0xff]
      %v2456 = vld [vmem:[%s4 + $0x8] sm:$0xff]
      %v2457 = vld [vmem:[%s4 + $0x10] sm:$0xff]
      %v2458 = vld [vmem:[%s4 + $0x18] sm:$0xff]
      %v2459 = vld [vmem:[%s5] sm:$0x1]
      %v2461 = vlaneseq
      %v2462 = vshrl.u32 %v2461, 7
      %v2463 = vsub.s32 0, %v2462
      %v2464 = vrot.slane %v2459, %v2463
      %v2467 = vsel %vm317, %v2453, 0
      %v2470 = vsel %vm317, %v2454, 0
      %2472 = vmatprep.subr.mxu0 0.0
      %2473 = vmatpush1.msra.mxu0 0.0
      %2474 = vmatprep.subr.mxu0 0.0
      %2475 = vmatpush1.msra.mxu0 0.0
      %2476 = vmatprep.subr.mxu0 0.0
      %2477 = vmatpush1.msra.mxu0 0.0
      %2478 = vmatprep.subr.mxu0 0.0
      %2479 = vmatpush1.msra.mxu0 0.0
      %2480 = vmatprep.subr.mxu0 0.0
      %2481 = vmatpush1.msra.mxu0 0.0
      %2482 = vmatprep.subr.mxu0 0.0
      %2483 = vmatpush1.msra.mxu0 0.0
      %2484 = vmatprep.subr.mxu0 0.0
      %2485 = vmatpush1.msra.mxu0 0.0
      %2486 = vmatprep.subr.mxu0 0.0
      %2487 = vmatpush1.msra.mxu0 0.0
      %2488 = vmatprep.subr.mxu0 0.0
      %2489 = vmatpush1.msra.mxu0 0.0
      %2490 = vmatprep.subr.mxu0 0.0
      %2491 = vmatpush1.msra.mxu0 0.0
      %2492 = vmatprep.subr.mxu0 0.0
      %2493 = vmatpush1.msra.mxu0 0.0
      %2494 = vmatprep.subr.mxu0 0.0
      %2495 = vmatpush1.msra.mxu0 0.0
      %2496 = vmatprep.subr.mxu0 0.0
      %2497 = vmatpush1.msra.mxu0 %v2458
      %2498 = vmatprep.subr.mxu0 0.0
      %2499 = vmatpush1.msra.mxu0 %v2457
      %2500 = vmatprep.subr.mxu0 0.0
      %2501 = vmatpush1.msra.mxu0 %v2456
      %2502 = vmatprep.subr.mxu0 0.0
      %2503 = vmatpush1.msra.mxu0 %v2455
      %2504 = vmatprep.subr.mxu0 0.0
      %2505 = vmatpush2.msra.mxu0 0.0
      %2506 = vmatprep.subr.mxu0 0.0
      %2507 = vmatpush2.msra.mxu0 0.0
      %2508 = vmatprep.subr.mxu0 0.0
      %2509 = vmatpush2.msra.mxu0 0.0
      %2510 = vmatprep.subr.mxu0 0.0
      %2511 = vmatpush2.msra.mxu0 0.0
      %2512 = vmatprep.subr.mxu0 0.0
      %2513 = vmatpush2.msra.mxu0 0.0
      %2514 = vmatprep.subr.mxu0 0.0
      %2515 = vmatpush2.msra.mxu0 0.0
      %2516 = vmatprep.subr.mxu0 0.0
      %2517 = vmatpush2.msra.mxu0 0.0
      %2518 = vmatprep.subr.mxu0 0.0
      %2519 = vmatpush2.msra.mxu0 0.0
      %2520 = vmatprep.subr.mxu0 0.0
      %2521 = vmatpush2.msra.mxu0 0.0
      %2522 = vmatprep.subr.mxu0 0.0
      %2523 = vmatpush2.msra.mxu0 0.0
      %2524 = vmatprep.subr.mxu0 0.0
      %2525 = vmatpush2.msra.mxu0 0.0
      %2526 = vmatprep.subr.mxu0 0.0
      %2527 = vmatpush2.msra.mxu0 0.0
      %2528 = vmatprep.subr.mxu0 0.0
      %2529 = vmatpush2.msra.mxu0 0.0
      %2530 = vmatprep.subr.mxu0 0.0
      %2531 = vmatpush2.msra.mxu0 0.0
      %2532 = vmatprep.subr.mxu0 0.0
      %2533 = vmatpush2.msra.mxu0 0.0
      %2534 = vmatprep.subr.mxu0 0.0
      %2535 = vmatpush2.msra.mxu0 0.0
      %2536 = vmatprep.mubr.f32.mxu0 0.0
      %2537 = vmatmul.mubr.f32.gmra.mxu0 %v2467
      %v2538 = vpop.f32.mrf.mxu0
      %v2539 = vadd.f32 %v2464, %v2538
      %v2540 = vpop.f32.mrf.mxu0
      %2541 = vmatprep.mubr.f32.mxu0 0.0
      %2542 = vmatmul.mubr.f32.gmra.mxu0 %v2470
      %v2543 = vpop.f32.mrf.mxu0
      %v2544 = vadd.f32 %v2464, %v2543
      %v2545 = vpop.f32.mrf.mxu0
      %2546 = vdwg.mxu0
      %vm2547 = vcmask 523264
      %2548 = vst.msk [vmem:[%s265] sm:$0xff] %vm2547, %v2539
      %2549 = vst.msk [vmem:[%s265 + $0x8] sm:$0xff] %vm2547, %v2544
      %p2550 = scmp.lt.s32.totalorder %s17, 1
      %s2551 = scalar_select %p2550, %s17, 1
      %s2552 = smul.addr %s2551, 2
      %s2553 = smul.addr %s2552, 8
      %s2554 = scalar_lea.vmem %s6, %s2553
      // Predicated region
      $region45: #{aligner_forward.1} parent=43 // pred_check
        %p2555 = pneg %p171
      $region46: #{aligner_forward.1} parent=43 // pred_check_branch
        %2557 = sbr.rel (%p2555) target = $region48
      $region47: #{aligner_forward.1} parent=43 // pred_region
        _
      $region48: #{aligner_forward.1} parent=43 // pred_fallthru
        _
    $region44: #{aligner_forward.1} parent=5 // pred_fallthru
      _
    %p2558 = scmp.le.s32.totalorder 2, %s12
    // Predicated region
    $region49: #{aligner_forward.1} parent=5 // pred_check
      %p2559 = pneg %p2558
    $region50: #{aligner_forward.1} parent=5 // pred_check_branch
      %2561 = sbr.rel (%p2559) target = $region52
    $region51: #{aligner_forward.1} parent=5 // pred_region
      %s2562 = ssub.s32 %s12, 2
      // Predicated region
      $region53: #{aligner_forward.1} parent=51 // pred_check
        %p2563 = pneg %p177
      $region54: #{aligner_forward.1} parent=51 // pred_check_branch
        %2565 = sbr.rel (%p2563) target = $region56
      $region55: #{aligner_forward.1} parent=51 // pred_region
        %p2566 = scmp.lt.s32.totalorder %s18, 1
        %s2567 = scalar_select %p2566, %s18, 1
        %s2568 = smul.addr %s2567, 2
        %s2569 = smul.addr %s2568, 8
        %s2570 = scalar_lea.vmem %s6, %s2569
      $region56: #{aligner_forward.1} parent=51 // pred_fallthru
        _
    $region52: #{aligner_forward.1} parent=5 // pred_fallthru
      _
  $region6: #{aligner_forward.1} parent=0 // loop_footer
    %s16 = sadd.s32 1, %s12
  $region7: #{aligner_forward.1} parent=0 // loop_footer_branch
    %11 = sbr.rel target = $region3
  $region8: #{aligner_forward.1} parent=0 // loop_exit
    _

</llo_original>
